<compile_context>
chip_gen: v7x
topology: tpu7x:2x2x1
jax: 0.10.0
libtpu: 0.0.40
codegen_flags: <defaults>
</compile_context>

<pallas_src>
import jax
import jax.numpy as jnp
from jax.experimental import pallas as pl
from jax.experimental.pallas import tpu as pltpu

LANE = 128
NEG_INF = -1e30


def _rup(x, m=LANE):
    return ((x + m - 1) // m) * m


def _block_diag(blocks):
    rows = sum(b.shape[0] for b in blocks)
    cols = sum(b.shape[1] for b in blocks)
    out = jnp.zeros((rows, cols), jnp.float32)
    r = c = 0
    for b in blocks:
        out = out.at[r:r + b.shape[0], c:c + b.shape[1]].set(b)
        r += b.shape[0]
        c += b.shape[1]
    return out


# ---------------------------------------------------------------------------
# Fused Pallas kernel (both CGC levels + towers, one launch)
# ---------------------------------------------------------------------------
def make_ple_kernel(cfg, compute_dtype):
    dnum = cfg["domain_num"]
    nsp = cfg["n_expert_specific"]
    nsh = cfg["n_expert_shared"]
    n_all = dnum * nsp + nsh
    exp_dims = list(cfg["expert_dims"])
    n_level = cfg["n_level"]
    n_exp_layers = len(exp_dims)
    n_tower_layers = len(cfg["tower_dims"])
    gate_off = _rup(n_all * exp_dims[0])        # 128-aligned start of gate section
    cdt = compute_dtype

    def _dot(a, w_ref):
        return jnp.dot(a.astype(cdt), w_ref[...],
                       preferred_element_type=jnp.float32)

    def kernel(*refs):
        idx = 0
        x_ref = refs[idx]; idx += 1
        level_refs = []
        for _ in range(n_level):
            ws = []
            for _ in range(n_exp_layers):
                ws.append((refs[idx], refs[idx + 1]))
                idx += 2
            expand_ref = refs[idx]; idx += 1
            level_refs.append((ws, expand_ref))
        tower_refs = []
        for _ in range(n_tower_layers):
            tower_refs.append((refs[idx], refs[idx + 1]))
            idx += 2
        wo_ref, bo_ref = refs[idx], refs[idx + 1]; idx += 2
        out_ref = refs[idx]                                   # (block_b, 128)

        xc = x_ref[...]
        for level in range(n_level):
            ws, expand_ref = level_refs[level]
            n_gates = dnum + (1 if (level + 1) < n_level else 0)
            w1_ref, b1_ref = ws[0]

            # one wide matmul: all experts' layer-1 + all (lane-padded) gates
            z = _dot(xc, w1_ref) + b1_ref[...]
            h = jnp.maximum(z[:, :gate_off], 0.0)             # aligned slice
            glog = z[:, gate_off:]                            # aligned slice

            # remaining expert layers: padded block-diagonal -> 1 matmul/layer
            for l in range(1, n_exp_layers):
                wl_ref, bl_ref = ws[l]
                h = jnp.maximum(_dot(h, wl_ref) + bl_ref[...], 0.0)
            # h: (block_b, HP) with expert e at lanes [e*HL, (e+1)*HL)

            # per-gate softmax on 128-lane-aligned blocks (pad logits = -1e30)
            gblk = []
            for g in range(n_gates):
                blk = glog[:, g * LANE:(g + 1) * LANE]
                m = jnp.max(blk, axis=-1, keepdims=True)
                e = jnp.exp(blk - m)
                gblk.append(
                    e * pl.reciprocal(jnp.sum(e, axis=-1, keepdims=True),
                                      approx=True))
            gates = jnp.concatenate(gblk, axis=1) if n_gates > 1 else gblk[0]

            # broadcast gate weights across their experts' lanes on the MXU;
            # the segmented sum over experts is folded into the next consumer's
            # (pre-multiplied) weights, so xc is used directly as next input.
            gb = _dot(gates, expand_ref)                      # (bb, n_gates*HP)
            ht = jnp.concatenate([h] * n_gates, axis=1) if n_gates > 1 else h
            xc = gb * ht

        # towers: block-diagonal over domains (Reduce of the last level folded
        # into the first tower layer); output heads fused into a lane-dense
        # (…,128) slab (lanes >= dnum are padding).
        t = xc
        for (wt_ref, bt_ref) in tower_refs:
            t = jnp.maximum(_dot(t, wt_ref) + bt_ref[...], 0.0)
        logits = _dot(t, wo_ref) + bo_ref[...]
        out_ref[...] = pl.reciprocal(1.0 + jnp.exp(-logits), approx=True)

    return kernel


# ---------------------------------------------------------------------------
# Fused-weight construction (plain JAX, ONE-TIME prep — cache the result)
# ---------------------------------------------------------------------------
def build_fused_ple_params(cgc_params_list, tower_params, cfg, input_dims,
                           weight_dtype=jnp.float32):
    dnum = cfg["domain_num"]
    nsp = cfg["n_expert_specific"]
    nsh = cfg["n_expert_shared"]
    n_all = dnum * nsp + nsh
    exp_dims = list(cfg["expert_dims"])
    tower_dims = list(cfg["tower_dims"])
    n_level = cfg["n_level"]
    HL = exp_dims[-1]
    wd = weight_dtype

    levels = []
    prev_reduce = None           # (n_streams_prev*HP_prev, n_streams_prev*HL)
    for level in range(n_level):
        p = cgc_params_list[level]
        has_shared = (level + 1) < n_level
        n_gates = dnum + (1 if has_shared else 0)     # == number of output streams
        in_dim = input_dims if level == 0 else HL
        dims = [in_dim] + exp_dims
        ep = [_rup(n_all * d) for d in dims[1:]]      # padded concat widths
        H1 = dims[1]
        gate_off = ep[0]
        n1 = gate_off + n_gates * LANE

        # --- fused layer-1 weight over the logical per-stream input ---------
        if level == 0:
            W1 = jnp.zeros((in_dim, n1), jnp.float32)
            for e in range(n_all):
                W1 = W1.at[:, e * H1:(e + 1) * H1].set(p["exp_w"][0][e])
            for d in range(dnum):
                W1 = W1.at[:, gate_off + d * LANE:
                              gate_off + d * LANE + nsp + nsh].set(p["wgs"][d])
            if has_shared:
                W1 = W1.at[:, gate_off + dnum * LANE:
                              gate_off + dnum * LANE + n_all].set(p["wgsh"][0])
        else:
            S = dnum + 1          # the previous level always produced a shared stream
            W1b = jnp.zeros((S * in_dim, n1), jnp.float32)
            for e in range(n_all):
                s = e // nsp if e < dnum * nsp else dnum
                W1b = W1b.at[s * in_dim:(s + 1) * in_dim,
                             e * H1:(e + 1) * H1].set(p["exp_w"][0][e])
            for d in range(dnum):
                W1b = W1b.at[d * in_dim:(d + 1) * in_dim,
                             gate_off + d * LANE:
                             gate_off + d * LANE + nsp + nsh].set(p["wgs"][d])
            if has_shared:
                W1b = W1b.at[dnum * in_dim:(dnum + 1) * in_dim,
                             gate_off + dnum * LANE:
                             gate_off + dnum * LANE + n_all].set(p["wgsh"][0])
            W1 = prev_reduce @ W1b          # fold previous level's pooling sum

        b1 = jnp.zeros((1, n1), jnp.float32)
        b1 = b1.at[:, gate_off:].set(NEG_INF)       # padded gate logits -> -inf
        for e in range(n_all):
            b1 = b1.at[:, e * H1:(e + 1) * H1].set(p["exp_b"][0][e])
        for d in range(dnum):
            b1 = b1.at[:, gate_off + d * LANE:
                          gate_off + d * LANE + nsp + nsh].set(p["bgs"][d])
        if has_shared:
            b1 = b1.at[:, gate_off + dnum * LANE:
                          gate_off + dnum * LANE + n_all].set(p["bgsh"][0])

        layer_ws, layer_bs = [W1.astype(wd)], [b1]
        for l in range(1, len(exp_dims)):
            Wl = jnp.zeros((ep[l - 1], ep[l]), jnp.float32)
            bl = jnp.zeros((1, ep[l]), jnp.float32)
            for e in range(n_all):
                Wl = Wl.at[e * dims[l]:(e + 1) * dims[l],
                           e * dims[l + 1]:(e + 1) * dims[l + 1]].set(p["exp_w"][l][e])
                bl = bl.at[:, e * dims[l + 1]:(e + 1) * dims[l + 1]].set(p["exp_b"][l][e])
            layer_ws.append(Wl.astype(wd))
            layer_bs.append(bl)

        # --- 0/1 Expand: gate weights -> per-(stream, expert, lane) weights --
        HP = ep[-1]
        expand = jnp.zeros((n_gates * LANE, n_gates * HP), jnp.float32)
        for d in range(dnum):
            sel = list(range(d * nsp, (d + 1) * nsp)) + list(range(dnum * nsp, n_all))
            for j, e in enumerate(sel):
                expand = expand.at[d * LANE + j,
                                   d * HP + e * HL:d * HP + (e + 1) * HL].set(1.0)
        if has_shared:
            for e in range(n_all):
                expand = expand.at[dnum * LANE + e,
                                   dnum * HP + e * HL:dnum * HP + (e + 1) * HL].set(1.0)

        # --- Reduce (segmented sum over experts); folded into NEXT consumer --
        eye_stack = jnp.tile(jnp.eye(HL, dtype=jnp.float32), (n_all, 1))
        eye_stack = jnp.pad(eye_stack, ((0, HP - n_all * HL), (0, 0)))
        prev_reduce = _block_diag([eye_stack] * n_gates)      # (n_gates*HP, n_gates*HL)

        levels.append(dict(ws=layer_ws, bs=layer_bs, expand=expand.astype(wd)))

    # --- towers: block-diag over domains; last level's Reduce folded into L0 -
    t_dims = [HL] + tower_dims
    tower_ws, tower_bs = [], []
    for l in range(len(tower_dims)):
        Wb = _block_diag([tower_params["w"][l][d] for d in range(dnum)])
        bl = jnp.concatenate([tower_params["b"][l][d] for d in range(dnum)], axis=1)
        if l == 0:
            Wb = prev_reduce @ Wb
        tower_ws.append(Wb.astype(wd))
        tower_bs.append(bl)

    # output heads -> lane-dense (…, 128) slab
    Wo = jnp.zeros((dnum * t_dims[-1], LANE), jnp.float32)
    bo = jnp.zeros((1, LANE), jnp.float32)
    for d in range(dnum):
        Wo = Wo.at[d * t_dims[-1]:(d + 1) * t_dims[-1], d].set(tower_params["wo"][d][:, 0])
        bo = bo.at[0, d].set(tower_params["bo"][d][0, 0])
    return dict(levels=levels, tower_w=tower_ws, tower_b=tower_bs,
                wo=Wo.astype(wd), bo=bo)


# ---------------------------------------------------------------------------
# pallas_call wrapper
# ---------------------------------------------------------------------------
def ple_fused_call(embed_x, fused, cfg, block_b=512):
    B, D_in = embed_x.shape
    dnum = cfg["domain_num"]
    wdt = fused["wo"].dtype
    # casting the input in the wrapper is numerically identical to casting at
    # the first dot inside the kernel, but halves the input DMA in bf16 mode.
    embed_x = embed_x.astype(wdt)

    # Batch tile: multiple of 8 sublanes, >=2 grid steps (so v7x megacore can
    # shard the batch) and <=512 rows (bounds vreg live ranges).
    block_b = max(8, (int(block_b) // 8) * 8)
    if B > 8:
        block_b = min(block_b, max(8, _rup((B + 1) // 2, 8)))
    block_b = min(block_b, 512)
    B_pad = _rup(B, block_b)
    if B_pad != B:
        embed_x = jnp.pad(embed_x, ((0, B_pad - B), (0, 0)))

    def resident(a):
        nd = a.ndim
        return pl.BlockSpec(a.shape, lambda i, _nd=nd: (0,) * _nd)

    args = [embed_x]
    in_specs = [pl.BlockSpec((block_b, D_in), lambda i: (i, 0))]
    for lv in fused["levels"]:
        for w, b in zip(lv["ws"], lv["bs"]):
            args += [w, b]
            in_specs += [resident(w), resident(b)]
        args.append(lv["expand"])
        in_specs.append(resident(lv["expand"]))
    for w, b in zip(fused["tower_w"], fused["tower_b"]):
        args += [w, b]
        in_specs += [resident(w), resident(b)]
    args += [fused["wo"], fused["bo"]]
    in_specs += [resident(fused["wo"]), resident(fused["bo"])]

    # derived VMEM budget: double-buffered weights + x/out tiles + activation
    # headroom (clamped; fits v7x's smaller scoped VMEM at these sizes).
    weight_bytes = sum(int(a.size) * a.dtype.itemsize for a in args[1:])
    est = (2 * weight_bytes
           + 2 * block_b * D_in * embed_x.dtype.itemsize
           + 2 * block_b * LANE * 4
           + block_b * 4096 * 4)
    vmem_limit = int(min(64 * 2**20, max(16 * 2**20, 2 * est)))

    kernel = make_ple_kernel(cfg, wdt)
    out = pl.pallas_call(
        kernel,
        out_shape=jax.ShapeDtypeStruct((B_pad, LANE), jnp.float32),
        grid=(B_pad // block_b,),
        in_specs=in_specs,
        out_specs=pl.BlockSpec((block_b, LANE), lambda i: (i, 0)),
        compiler_params=pltpu.CompilerParams(
            dimension_semantics=("parallel",),
            vmem_limit_bytes=vmem_limit),
    )(*args)
    # lane-dense slab -> the dnum valid probability lanes; padded batch rows
    # (garbage) are dropped here as well.
    return out[:B, :dnum]


def ple_forward(x_dict, embed_tables, feature_names, fused, cfg, block_b=512):
    # Embedding layer (glue): lookup each sparse feature and concat -> (B, D_in)
    embeds = [embed_tables[name][x_dict[name]] for name in feature_names]
    embed_x = jnp.concatenate(embeds, axis=-1)
    domain_id = x_dict["domain_indicator"].astype(jnp.int32)

    probs = ple_fused_call(embed_x, fused, cfg, block_b)     # (B, domain_num)

    # domain mask-select (matches the torch.where chain: out-of-range ids -> 0)
    dnum = cfg["domain_num"]
    onehot = domain_id[:, None] == jnp.arange(dnum, dtype=jnp.int32)[None, :]
    return jnp.sum(jnp.where(onehot, probs, 0.0), axis=1)


# ---------------------------------------------------------------------------
# Deterministic parameter init (PyTorch-Linear-style uniform bounds)
# ---------------------------------------------------------------------------
def init_linear(key, in_dim, out_dim):
    k1, k2 = jax.random.split(key)
    bound = 1.0 / (in_dim ** 0.5)
    w = jax.random.uniform(k1, (in_dim, out_dim), jnp.float32, -bound, bound)
    b = jax.random.uniform(k2, (1, out_dim), jnp.float32, -bound, bound)
    return w, b


def init_cgc_params(key, in_dim, expert_dims, domain_num, n_spec, n_shared,
                    has_shared_gate):
    n_expert_all = domain_num * n_spec + n_shared
    params = {"exp_w": [], "exp_b": []}
    dims = [in_dim] + list(expert_dims)
    for l in range(len(expert_dims)):
        ws, bs = [], []
        for _ in range(n_expert_all):
            key, sub = jax.random.split(key)
            w, b = init_linear(sub, dims[l], dims[l + 1])
            ws.append(w)
            bs.append(b)
        params["exp_w"].append(jnp.stack(ws))
        params["exp_b"].append(jnp.stack(bs))
    ws, bs = [], []
    for _ in range(domain_num):
        key, sub = jax.random.split(key)
        w, b = init_linear(sub, in_dim, n_spec + n_shared)
        ws.append(w)
        bs.append(b)
    params["wgs"] = jnp.stack(ws)
    params["bgs"] = jnp.stack(bs)
    if has_shared_gate:
        key, sub = jax.random.split(key)
        w, b = init_linear(sub, in_dim, n_expert_all)
        params["wgsh"] = w[None]
        params["bgsh"] = b[None]
    return params


def init_tower_params(key, in_dim, tower_dims, domain_num):
    dims = [in_dim] + list(tower_dims)
    params = {"w": [], "b": []}
    for l in range(len(tower_dims)):
        ws, bs = [], []
        for _ in range(domain_num):
            key, sub = jax.random.split(key)
            w, b = init_linear(sub, dims[l], dims[l + 1])
            ws.append(w)
            bs.append(b)
        params["w"].append(jnp.stack(ws))
        params["b"].append(jnp.stack(bs))
    ws, bs = [], []
    for _ in range(domain_num):
        key, sub = jax.random.split(key)
        w, b = init_linear(sub, dims[-1], 1)
        ws.append(w)
        bs.append(b)
    params["wo"] = jnp.stack(ws)
    params["bo"] = jnp.stack(bs)
    return params


# ---------------------------------------------------------------------------
# Pure-JAX reference (for correctness check)
# ---------------------------------------------------------------------------
def ple_reference(embed_x, domain_id, cgc_params_list, tower_params, cfg):
    dnum, nsp, nsh = cfg["domain_num"], cfg["n_expert_specific"], cfg["n_expert_shared"]
    n_all = dnum * nsp + nsh
    x_list = [embed_x] * (dnum + 1)
    for level in range(cfg["n_level"]):
        has_shared = (level + 1) < cfg["n_level"]
        p = cgc_params_list[level]
        expert_outs = []
        for e in range(n_all):
            h = x_list[e // nsp] if e < dnum * nsp else x_list[-1]
            for l in range(len(cfg["expert_dims"])):
                h = jax.nn.relu(h @ p["exp_w"][l][e] + p["exp_b"][l][e])
            expert_outs.append(h)
        outs = []
        for d in range(dnum):
            g = jax.nn.softmax(x_list[d] @ p["wgs"][d] + p["bgs"][d], axis=-1)
            sel = expert_outs[d * nsp:(d + 1) * nsp] + expert_outs[dnum * nsp:]
            outs.append(sum(g[:, j:j + 1] * eo for j, eo in enumerate(sel)))
        if has_shared:
            g = jax.nn.softmax(x_list[-1] @ p["wgsh"][0] + p["bgsh"][0], axis=-1)
            outs.append(sum(g[:, j:j + 1] * eo for j, eo in enumerate(expert_outs)))
        x_list = outs
    ys = []
    for d in range(dnum):
        h = x_list[d]
        for l in range(len(cfg["tower_dims"])):
            h = jax.nn.relu(h @ tower_params["w"][l][d] + tower_params["b"][l][d])
        logit = h @ tower_params["wo"][d] + tower_params["bo"][d]
        ys.append(jax.nn.sigmoid(logit))
    final = jnp.zeros_like(ys[0])
    for d in range(dnum):
        final = jnp.where((domain_id == d)[:, None], ys[d], final)
    return final[:, 0]


# ---------------------------------------------------------------------------
if __name__ == "__main__":
    cfg = dict(
        domain_num=2,
        n_level=2,
        n_expert_specific=2,
        n_expert_shared=1,
        expert_dims=[32, 16],   # expert_params["dims"]
        tower_dims=[8],         # tower_params["dims"]
    )
    B = 64
    n_features, embed_dim, vocab = 4, 8, 10
    input_dims = n_features * embed_dim

    key = jax.random.PRNGKey(0)

    feature_names = [f"feat_{i}" for i in range(n_features)]
    embed_tables = {}
    for name in feature_names:
        key, sub = jax.random.split(key)
        embed_tables[name] = jax.random.normal(sub, (vocab, embed_dim), jnp.float32) * 0.1

    x_dict = {}
    for name in feature_names:
        key, sub = jax.random.split(key)
        x_dict[name] = jax.random.randint(sub, (B,), 0, vocab)
    key, sub = jax.random.split(key)
    x_dict["domain_indicator"] = jax.random.randint(sub, (B,), 0, cfg["domain_num"])

    cgc_params_list = []
    in_dim = input_dims
    for level in range(cfg["n_level"]):
        has_shared = (level + 1) < cfg["n_level"]
        key, sub = jax.random.split(key)
        cgc_params_list.append(
            init_cgc_params(sub, in_dim, cfg["expert_dims"], cfg["domain_num"],
                            cfg["n_expert_specific"], cfg["n_expert_shared"], has_shared))
        in_dim = cfg["expert_dims"][-1]

    key, sub = jax.random.split(key)
    tower_params = init_tower_params(sub, cfg["expert_dims"][-1], cfg["tower_dims"],
                                     cfg["domain_num"])

    # reference
    embed_x = jnp.concatenate([embed_tables[n][x_dict[n]] for n in feature_names], axis=-1)
    ref = ple_reference(embed_x, x_dict["domain_indicator"].astype(jnp.int32),
                        cgc_params_list, tower_params, cfg)

    # --- f32 fused weights: tight correctness check --------------------------
    fused_f32 = build_fused_ple_params(cgc_params_list, tower_params, cfg,
                                       input_dims, weight_dtype=jnp.float32)
    out_f32 = jax.block_until_ready(
        ple_forward(x_dict, embed_tables, feature_names, fused_f32, cfg))
    assert out_f32.shape == (B,)
    assert jnp.allclose(out_f32, ref, atol=2e-3, rtol=2e-3), (out_f32, ref)

    # --- bf16 fused weights (MXU fast path on v5e/v6e/v7x): looser tolerance -
    fused_bf16 = build_fused_ple_params(cgc_params_list, tower_params, cfg,
                                        input_dims, weight_dtype=jnp.bfloat16)
    out_bf16 = jax.block_until_ready(
        ple_forward(x_dict, embed_tables, feature_names, fused_bf16, cfg))
    assert out_bf16.shape == (B,)
    assert jnp.allclose(out_bf16, ref, atol=1e-2, rtol=1e-2), (out_bf16, ref)

    print("KERNEL_OK")
</pallas_src>

<mosaic_0001>
module attributes {stable_mosaic.version = 11 : i64} {
  func.func @kernel(%arg0: i32, %arg1: memref<32x32xf32, #tpu.memory_space<vmem>>, %arg2: memref<32x640xf32, #tpu.memory_space<vmem>>, %arg3: memref<1x640xf32, #tpu.memory_space<vmem>>, %arg4: memref<256x128xf32, #tpu.memory_space<vmem>>, %arg5: memref<1x128xf32, #tpu.memory_space<vmem>>, %arg6: memref<384x384xf32, #tpu.memory_space<vmem>>, %arg7: memref<384x512xf32, #tpu.memory_space<vmem>>, %arg8: memref<1x512xf32, #tpu.memory_space<vmem>>, %arg9: memref<256x128xf32, #tpu.memory_space<vmem>>, %arg10: memref<1x128xf32, #tpu.memory_space<vmem>>, %arg11: memref<256x256xf32, #tpu.memory_space<vmem>>, %arg12: memref<256x16xf32, #tpu.memory_space<vmem>>, %arg13: memref<1x16xf32, #tpu.memory_space<vmem>>, %arg14: memref<16x128xf32, #tpu.memory_space<vmem>>, %arg15: memref<1x128xf32, #tpu.memory_space<vmem>>, %arg16: memref<32x128xf32, #tpu.memory_space<vmem>>) attributes {dimension_semantics = [#tpu.dimension_semantics<parallel>], iteration_bounds = array<i64: 2>, scalar_prefetch = 0 : i64, scratch_operands = 0 : i64, tpu.core_type = #tpu.core_type<tc>, window_params = [{transform_indices = @transform_0, window_bounds = array<i64: 32, 32>}, {pipeline_mode = #tpu.pipeline_mode<synchronous>, transform_indices = @transform_1, window_bounds = array<i64: 32, 640>}, {pipeline_mode = #tpu.pipeline_mode<synchronous>, transform_indices = @transform_2, window_bounds = array<i64: 1, 640>}, {pipeline_mode = #tpu.pipeline_mode<synchronous>, transform_indices = @transform_3, window_bounds = array<i64: 256, 128>}, {pipeline_mode = #tpu.pipeline_mode<synchronous>, transform_indices = @transform_4, window_bounds = array<i64: 1, 128>}, {pipeline_mode = #tpu.pipeline_mode<synchronous>, transform_indices = @transform_5, window_bounds = array<i64: 384, 384>}, {pipeline_mode = #tpu.pipeline_mode<synchronous>, transform_indices = @transform_6, window_bounds = array<i64: 384, 512>}, {pipeline_mode = #tpu.pipeline_mode<synchronous>, transform_indices = @transform_7, window_bounds = array<i64: 1, 512>}, {pipeline_mode = #tpu.pipeline_mode<synchronous>, transform_indices = @transform_8, window_bounds = array<i64: 256, 128>}, {pipeline_mode = #tpu.pipeline_mode<synchronous>, transform_indices = @transform_9, window_bounds = array<i64: 1, 128>}, {pipeline_mode = #tpu.pipeline_mode<synchronous>, transform_indices = @transform_10, window_bounds = array<i64: 256, 256>}, {pipeline_mode = #tpu.pipeline_mode<synchronous>, transform_indices = @transform_11, window_bounds = array<i64: 256, 16>}, {pipeline_mode = #tpu.pipeline_mode<synchronous>, transform_indices = @transform_12, window_bounds = array<i64: 1, 16>}, {pipeline_mode = #tpu.pipeline_mode<synchronous>, transform_indices = @transform_13, window_bounds = array<i64: 16, 128>}, {pipeline_mode = #tpu.pipeline_mode<synchronous>, transform_indices = @transform_14, window_bounds = array<i64: 1, 128>}, {transform_indices = @transform_15, window_bounds = array<i64: 32, 128>}]} {
    %c0 = arith.constant 0 : index
    %c0_0 = arith.constant 0 : index
    %0 = vector.load %arg1[%c0, %c0_0] : memref<32x32xf32, #tpu.memory_space<vmem>>, vector<32x32xf32>
    %c0_1 = arith.constant 0 : index
    %c0_2 = arith.constant 0 : index
    %1 = vector.load %arg2[%c0_1, %c0_2] : memref<32x640xf32, #tpu.memory_space<vmem>>, vector<32x640xf32>
    %cst = arith.constant dense<0.000000e+00> : vector<32x640xf32>
    %2 = tpu.matmul %0, %1, %cst {dimension_numbers = #tpu.dot_dimension_numbers<[1], [0], [0], [1], [0, 0, 1, 1], [], []>} : vector<32x32xf32>, vector<32x640xf32>, vector<32x640xf32> -> vector<32x640xf32>
    %c0_3 = arith.constant 0 : index
    %c0_4 = arith.constant 0 : index
    %3 = vector.load %arg3[%c0_3, %c0_4] : memref<1x640xf32, #tpu.memory_space<vmem>>, vector<1x640xf32>
    %4 = vector.broadcast %3 : vector<1x640xf32> to vector<32x640xf32>
    %5 = arith.addf %2, %4 : vector<32x640xf32>
    %6 = vector.extract_strided_slice %5 {offsets = [0, 0], sizes = [32, 256], strides = [1, 1]} : vector<32x640xf32> to vector<32x256xf32>
    %cst_5 = arith.constant 0.000000e+00 : f32
    %7 = vector.broadcast %cst_5 : f32 to vector<32x256xf32>
    %8 = arith.maximumf %6, %7 : vector<32x256xf32>
    %9 = vector.extract_strided_slice %5 {offsets = [0, 256], sizes = [32, 384], strides = [1, 1]} : vector<32x640xf32> to vector<32x384xf32>
    %c0_6 = arith.constant 0 : index
    %c0_7 = arith.constant 0 : index
    %10 = vector.load %arg4[%c0_6, %c0_7] : memref<256x128xf32, #tpu.memory_space<vmem>>, vector<256x128xf32>
    %cst_8 = arith.constant dense<0.000000e+00> : vector<32x128xf32>
    %11 = tpu.matmul %8, %10, %cst_8 {dimension_numbers = #tpu.dot_dimension_numbers<[1], [0], [0], [1], [0, 0, 1, 1], [], []>} : vector<32x256xf32>, vector<256x128xf32>, vector<32x128xf32> -> vector<32x128xf32>
    %c0_9 = arith.constant 0 : index
    %c0_10 = arith.constant 0 : index
    %12 = vector.load %arg5[%c0_9, %c0_10] : memref<1x128xf32, #tpu.memory_space<vmem>>, vector<1x128xf32>
    %13 = vector.broadcast %12 : vector<1x128xf32> to vector<32x128xf32>
    %14 = arith.addf %11, %13 : vector<32x128xf32>
    %cst_11 = arith.constant 0.000000e+00 : f32
    %15 = vector.broadcast %cst_11 : f32 to vector<32x128xf32>
    %16 = arith.maximumf %14, %15 : vector<32x128xf32>
    %17 = vector.extract_strided_slice %9 {offsets = [0, 0], sizes = [32, 128], strides = [1, 1]} : vector<32x384xf32> to vector<32x128xf32>
    %cst_12 = arith.constant dense<0xFF800000> : vector<32xf32>
    %18 = vector.multi_reduction <maximumf>, %17, %cst_12 [1] : vector<32x128xf32> to vector<32xf32>
    %19 = vector.shape_cast %18 : vector<32xf32> to vector<32x1xf32>
    %20 = vector.broadcast %19 : vector<32x1xf32> to vector<32x128xf32>
    %21 = arith.subf %17, %20 : vector<32x128xf32>
    %22 = math.exp %21 : vector<32x128xf32>
    %cst_13 = arith.constant dense<0.000000e+00> : vector<32xf32>
    %23 = vector.multi_reduction <add>, %22, %cst_13 [1] : vector<32x128xf32> to vector<32xf32>
    %24 = vector.shape_cast %23 : vector<32xf32> to vector<32x1xf32>
    %25 = tpu.reciprocal %24 {approx = true} : vector<32x1xf32> -> vector<32x1xf32>
    %26 = vector.broadcast %25 : vector<32x1xf32> to vector<32x128xf32>
    %27 = arith.mulf %22, %26 : vector<32x128xf32>
    %28 = vector.extract_strided_slice %9 {offsets = [0, 128], sizes = [32, 128], strides = [1, 1]} : vector<32x384xf32> to vector<32x128xf32>
    %cst_14 = arith.constant dense<0xFF800000> : vector<32xf32>
    %29 = vector.multi_reduction <maximumf>, %28, %cst_14 [1] : vector<32x128xf32> to vector<32xf32>
    %30 = vector.shape_cast %29 : vector<32xf32> to vector<32x1xf32>
    %31 = vector.broadcast %30 : vector<32x1xf32> to vector<32x128xf32>
    %32 = arith.subf %28, %31 : vector<32x128xf32>
    %33 = math.exp %32 : vector<32x128xf32>
    %cst_15 = arith.constant dense<0.000000e+00> : vector<32xf32>
    %34 = vector.multi_reduction <add>, %33, %cst_15 [1] : vector<32x128xf32> to vector<32xf32>
    %35 = vector.shape_cast %34 : vector<32xf32> to vector<32x1xf32>
    %36 = tpu.reciprocal %35 {approx = true} : vector<32x1xf32> -> vector<32x1xf32>
    %37 = vector.broadcast %36 : vector<32x1xf32> to vector<32x128xf32>
    %38 = arith.mulf %33, %37 : vector<32x128xf32>
    %39 = vector.extract_strided_slice %9 {offsets = [0, 256], sizes = [32, 128], strides = [1, 1]} : vector<32x384xf32> to vector<32x128xf32>
    %cst_16 = arith.constant dense<0xFF800000> : vector<32xf32>
    %40 = vector.multi_reduction <maximumf>, %39, %cst_16 [1] : vector<32x128xf32> to vector<32xf32>
    %41 = vector.shape_cast %40 : vector<32xf32> to vector<32x1xf32>
    %42 = vector.broadcast %41 : vector<32x1xf32> to vector<32x128xf32>
    %43 = arith.subf %39, %42 : vector<32x128xf32>
    %44 = math.exp %43 : vector<32x128xf32>
    %cst_17 = arith.constant dense<0.000000e+00> : vector<32xf32>
    %45 = vector.multi_reduction <add>, %44, %cst_17 [1] : vector<32x128xf32> to vector<32xf32>
    %46 = vector.shape_cast %45 : vector<32xf32> to vector<32x1xf32>
    %47 = tpu.reciprocal %46 {approx = true} : vector<32x1xf32> -> vector<32x1xf32>
    %48 = vector.broadcast %47 : vector<32x1xf32> to vector<32x128xf32>
    %49 = arith.mulf %44, %48 : vector<32x128xf32>
    %50 = tpu.concatenate %27, %38, %49 in 1 : vector<32x128xf32>, vector<32x128xf32>, vector<32x128xf32> -> vector<32x384xf32>
    %c0_18 = arith.constant 0 : index
    %c0_19 = arith.constant 0 : index
    %51 = vector.load %arg6[%c0_18, %c0_19] : memref<384x384xf32, #tpu.memory_space<vmem>>, vector<384x384xf32>
    %cst_20 = arith.constant dense<0.000000e+00> : vector<32x384xf32>
    %52 = tpu.matmul %50, %51, %cst_20 {dimension_numbers = #tpu.dot_dimension_numbers<[1], [0], [0], [1], [0, 0, 1, 1], [], []>} : vector<32x384xf32>, vector<384x384xf32>, vector<32x384xf32> -> vector<32x384xf32>
    %53 = tpu.concatenate %16, %16, %16 in 1 : vector<32x128xf32>, vector<32x128xf32>, vector<32x128xf32> -> vector<32x384xf32>
    %54 = arith.mulf %52, %53 : vector<32x384xf32>
    %c0_21 = arith.constant 0 : index
    %c0_22 = arith.constant 0 : index
    %55 = vector.load %arg7[%c0_21, %c0_22] : memref<384x512xf32, #tpu.memory_space<vmem>>, vector<384x512xf32>
    %cst_23 = arith.constant dense<0.000000e+00> : vector<32x512xf32>
    %56 = tpu.matmul %54, %55, %cst_23 {dimension_numbers = #tpu.dot_dimension_numbers<[1], [0], [0], [1], [0, 0, 1, 1], [], []>} : vector<32x384xf32>, vector<384x512xf32>, vector<32x512xf32> -> vector<32x512xf32>
    %c0_24 = arith.constant 0 : index
    %c0_25 = arith.constant 0 : index
    %57 = vector.load %arg8[%c0_24, %c0_25] : memref<1x512xf32, #tpu.memory_space<vmem>>, vector<1x512xf32>
    %58 = vector.broadcast %57 : vector<1x512xf32> to vector<32x512xf32>
    %59 = arith.addf %56, %58 : vector<32x512xf32>
    %60 = vector.extract_strided_slice %59 {offsets = [0, 0], sizes = [32, 256], strides = [1, 1]} : vector<32x512xf32> to vector<32x256xf32>
    %cst_26 = arith.constant 0.000000e+00 : f32
    %61 = vector.broadcast %cst_26 : f32 to vector<32x256xf32>
    %62 = arith.maximumf %60, %61 : vector<32x256xf32>
    %63 = vector.extract_strided_slice %59 {offsets = [0, 256], sizes = [32, 256], strides = [1, 1]} : vector<32x512xf32> to vector<32x256xf32>
    %c0_27 = arith.constant 0 : index
    %c0_28 = arith.constant 0 : index
    %64 = vector.load %arg9[%c0_27, %c0_28] : memref<256x128xf32, #tpu.memory_space<vmem>>, vector<256x128xf32>
    %cst_29 = arith.constant dense<0.000000e+00> : vector<32x128xf32>
    %65 = tpu.matmul %62, %64, %cst_29 {dimension_numbers = #tpu.dot_dimension_numbers<[1], [0], [0], [1], [0, 0, 1, 1], [], []>} : vector<32x256xf32>, vector<256x128xf32>, vector<32x128xf32> -> vector<32x128xf32>
    %c0_30 = arith.constant 0 : index
    %c0_31 = arith.constant 0 : index
    %66 = vector.load %arg10[%c0_30, %c0_31] : memref<1x128xf32, #tpu.memory_space<vmem>>, vector<1x128xf32>
    %67 = vector.broadcast %66 : vector<1x128xf32> to vector<32x128xf32>
    %68 = arith.addf %65, %67 : vector<32x128xf32>
    %cst_32 = arith.constant 0.000000e+00 : f32
    %69 = vector.broadcast %cst_32 : f32 to vector<32x128xf32>
    %70 = arith.maximumf %68, %69 : vector<32x128xf32>
    %71 = vector.extract_strided_slice %63 {offsets = [0, 0], sizes = [32, 128], strides = [1, 1]} : vector<32x256xf32> to vector<32x128xf32>
    %cst_33 = arith.constant dense<0xFF800000> : vector<32xf32>
    %72 = vector.multi_reduction <maximumf>, %71, %cst_33 [1] : vector<32x128xf32> to vector<32xf32>
    %73 = vector.shape_cast %72 : vector<32xf32> to vector<32x1xf32>
    %74 = vector.broadcast %73 : vector<32x1xf32> to vector<32x128xf32>
    %75 = arith.subf %71, %74 : vector<32x128xf32>
    %76 = math.exp %75 : vector<32x128xf32>
    %cst_34 = arith.constant dense<0.000000e+00> : vector<32xf32>
    %77 = vector.multi_reduction <add>, %76, %cst_34 [1] : vector<32x128xf32> to vector<32xf32>
    %78 = vector.shape_cast %77 : vector<32xf32> to vector<32x1xf32>
    %79 = tpu.reciprocal %78 {approx = true} : vector<32x1xf32> -> vector<32x1xf32>
    %80 = vector.broadcast %79 : vector<32x1xf32> to vector<32x128xf32>
    %81 = arith.mulf %76, %80 : vector<32x128xf32>
    %82 = vector.extract_strided_slice %63 {offsets = [0, 128], sizes = [32, 128], strides = [1, 1]} : vector<32x256xf32> to vector<32x128xf32>
    %cst_35 = arith.constant dense<0xFF800000> : vector<32xf32>
    %83 = vector.multi_reduction <maximumf>, %82, %cst_35 [1] : vector<32x128xf32> to vector<32xf32>
    %84 = vector.shape_cast %83 : vector<32xf32> to vector<32x1xf32>
    %85 = vector.broadcast %84 : vector<32x1xf32> to vector<32x128xf32>
    %86 = arith.subf %82, %85 : vector<32x128xf32>
    %87 = math.exp %86 : vector<32x128xf32>
    %cst_36 = arith.constant dense<0.000000e+00> : vector<32xf32>
    %88 = vector.multi_reduction <add>, %87, %cst_36 [1] : vector<32x128xf32> to vector<32xf32>
    %89 = vector.shape_cast %88 : vector<32xf32> to vector<32x1xf32>
    %90 = tpu.reciprocal %89 {approx = true} : vector<32x1xf32> -> vector<32x1xf32>
    %91 = vector.broadcast %90 : vector<32x1xf32> to vector<32x128xf32>
    %92 = arith.mulf %87, %91 : vector<32x128xf32>
    %93 = tpu.concatenate %81, %92 in 1 : vector<32x128xf32>, vector<32x128xf32> -> vector<32x256xf32>
    %c0_37 = arith.constant 0 : index
    %c0_38 = arith.constant 0 : index
    %94 = vector.load %arg11[%c0_37, %c0_38] : memref<256x256xf32, #tpu.memory_space<vmem>>, vector<256x256xf32>
    %cst_39 = arith.constant dense<0.000000e+00> : vector<32x256xf32>
    %95 = tpu.matmul %93, %94, %cst_39 {dimension_numbers = #tpu.dot_dimension_numbers<[1], [0], [0], [1], [0, 0, 1, 1], [], []>} : vector<32x256xf32>, vector<256x256xf32>, vector<32x256xf32> -> vector<32x256xf32>
    %96 = tpu.concatenate %70, %70 in 1 : vector<32x128xf32>, vector<32x128xf32> -> vector<32x256xf32>
    %97 = arith.mulf %95, %96 : vector<32x256xf32>
    %c0_40 = arith.constant 0 : index
    %c0_41 = arith.constant 0 : index
    %98 = vector.load %arg12[%c0_40, %c0_41] : memref<256x16xf32, #tpu.memory_space<vmem>>, vector<256x16xf32>
    %cst_42 = arith.constant dense<0.000000e+00> : vector<32x16xf32>
    %99 = tpu.matmul %97, %98, %cst_42 {dimension_numbers = #tpu.dot_dimension_numbers<[1], [0], [0], [1], [0, 0, 1, 1], [], []>} : vector<32x256xf32>, vector<256x16xf32>, vector<32x16xf32> -> vector<32x16xf32>
    %c0_43 = arith.constant 0 : index
    %c0_44 = arith.constant 0 : index
    %100 = vector.load %arg13[%c0_43, %c0_44] : memref<1x16xf32, #tpu.memory_space<vmem>>, vector<1x16xf32>
    %101 = vector.broadcast %100 : vector<1x16xf32> to vector<32x16xf32>
    %102 = arith.addf %99, %101 : vector<32x16xf32>
    %cst_45 = arith.constant 0.000000e+00 : f32
    %103 = vector.broadcast %cst_45 : f32 to vector<32x16xf32>
    %104 = arith.maximumf %102, %103 : vector<32x16xf32>
    %c0_46 = arith.constant 0 : index
    %c0_47 = arith.constant 0 : index
    %105 = vector.load %arg14[%c0_46, %c0_47] : memref<16x128xf32, #tpu.memory_space<vmem>>, vector<16x128xf32>
    %cst_48 = arith.constant dense<0.000000e+00> : vector<32x128xf32>
    %106 = tpu.matmul %104, %105, %cst_48 {dimension_numbers = #tpu.dot_dimension_numbers<[1], [0], [0], [1], [0, 0, 1, 1], [], []>} : vector<32x16xf32>, vector<16x128xf32>, vector<32x128xf32> -> vector<32x128xf32>
    %c0_49 = arith.constant 0 : index
    %c0_50 = arith.constant 0 : index
    %107 = vector.load %arg15[%c0_49, %c0_50] : memref<1x128xf32, #tpu.memory_space<vmem>>, vector<1x128xf32>
    %108 = vector.broadcast %107 : vector<1x128xf32> to vector<32x128xf32>
    %109 = arith.addf %106, %108 : vector<32x128xf32>
    %cst_51 = arith.constant 0.000000e+00 : f32
    %110 = vector.broadcast %cst_51 : f32 to vector<32x128xf32>
    %111 = arith.subf %110, %109 : vector<32x128xf32>
    %112 = math.exp %111 : vector<32x128xf32>
    %cst_52 = arith.constant 1.000000e+00 : f32
    %113 = vector.broadcast %cst_52 : f32 to vector<32x128xf32>
    %114 = arith.addf %113, %112 : vector<32x128xf32>
    %115 = tpu.reciprocal %114 {approx = true} : vector<32x128xf32> -> vector<32x128xf32>
    %c0_53 = arith.constant 0 : index
    %c0_54 = arith.constant 0 : index
    %116 = vector.load %arg16[%c0_53, %c0_54] : memref<32x128xf32, #tpu.memory_space<vmem>>, vector<32x128xf32>
    tpu.vector_store %arg16[%c0_53, %c0_54], %115 {strides = array<i32>} : memref<32x128xf32, #tpu.memory_space<vmem>>, vector<32x128xf32>,
    return
  }
  func.func @transform_0(%arg0: i32) -> (i32, i32) {
    %c0_i32 = arith.constant 0 : i32
    %c0_i32_0 = arith.constant 0 : i32
    return %arg0, %c0_i32 : i32, i32
  }
  func.func @transform_1(%arg0: i32) -> (i32, i32) {
    %c0_i32 = arith.constant 0 : i32
    %c0_i32_0 = arith.constant 0 : i32
    %c0_i32_1 = arith.constant 0 : i32
    return %c0_i32, %c0_i32_0 : i32, i32
  }
  func.func @transform_2(%arg0: i32) -> (i32, i32) {
    %c0_i32 = arith.constant 0 : i32
    %c0_i32_0 = arith.constant 0 : i32
    %c0_i32_1 = arith.constant 0 : i32
    return %c0_i32, %c0_i32_0 : i32, i32
  }
  func.func @transform_3(%arg0: i32) -> (i32, i32) {
    %c0_i32 = arith.constant 0 : i32
    %c0_i32_0 = arith.constant 0 : i32
    %c0_i32_1 = arith.constant 0 : i32
    return %c0_i32, %c0_i32_0 : i32, i32
  }
  func.func @transform_4(%arg0: i32) -> (i32, i32) {
    %c0_i32 = arith.constant 0 : i32
    %c0_i32_0 = arith.constant 0 : i32
    %c0_i32_1 = arith.constant 0 : i32
    return %c0_i32, %c0_i32_0 : i32, i32
  }
  func.func @transform_5(%arg0: i32) -> (i32, i32) {
    %c0_i32 = arith.constant 0 : i32
    %c0_i32_0 = arith.constant 0 : i32
    %c0_i32_1 = arith.constant 0 : i32
    return %c0_i32, %c0_i32_0 : i32, i32
  }
  func.func @transform_6(%arg0: i32) -> (i32, i32) {
    %c0_i32 = arith.constant 0 : i32
    %c0_i32_0 = arith.constant 0 : i32
    %c0_i32_1 = arith.constant 0 : i32
    return %c0_i32, %c0_i32_0 : i32, i32
  }
  func.func @transform_7(%arg0: i32) -> (i32, i32) {
    %c0_i32 = arith.constant 0 : i32
    %c0_i32_0 = arith.constant 0 : i32
    %c0_i32_1 = arith.constant 0 : i32
    return %c0_i32, %c0_i32_0 : i32, i32
  }
  func.func @transform_8(%arg0: i32) -> (i32, i32) {
    %c0_i32 = arith.constant 0 : i32
    %c0_i32_0 = arith.constant 0 : i32
    %c0_i32_1 = arith.constant 0 : i32
    return %c0_i32, %c0_i32_0 : i32, i32
  }
  func.func @transform_9(%arg0: i32) -> (i32, i32) {
    %c0_i32 = arith.constant 0 : i32
    %c0_i32_0 = arith.constant 0 : i32
    %c0_i32_1 = arith.constant 0 : i32
    return %c0_i32, %c0_i32_0 : i32, i32
  }
  func.func @transform_10(%arg0: i32) -> (i32, i32) {
    %c0_i32 = arith.constant 0 : i32
    %c0_i32_0 = arith.constant 0 : i32
    %c0_i32_1 = arith.constant 0 : i32
    return %c0_i32, %c0_i32_0 : i32, i32
  }
  func.func @transform_11(%arg0: i32) -> (i32, i32) {
    %c0_i32 = arith.constant 0 : i32
    %c0_i32_0 = arith.constant 0 : i32
    %c0_i32_1 = arith.constant 0 : i32
    return %c0_i32, %c0_i32_0 : i32, i32
  }
  func.func @transform_12(%arg0: i32) -> (i32, i32) {
    %c0_i32 = arith.constant 0 : i32
    %c0_i32_0 = arith.constant 0 : i32
    %c0_i32_1 = arith.constant 0 : i32
    return %c0_i32, %c0_i32_0 : i32, i32
  }
  func.func @transform_13(%arg0: i32) -> (i32, i32) {
    %c0_i32 = arith.constant 0 : i32
    %c0_i32_0 = arith.constant 0 : i32
    %c0_i32_1 = arith.constant 0 : i32
    return %c0_i32, %c0_i32_0 : i32, i32
  }
  func.func @transform_14(%arg0: i32) -> (i32, i32) {
    %c0_i32 = arith.constant 0 : i32
    %c0_i32_0 = arith.constant 0 : i32
    %c0_i32_1 = arith.constant 0 : i32
    return %c0_i32, %c0_i32_0 : i32, i32
  }
  func.func @transform_15(%arg0: i32) -> (i32, i32) {
    %c0_i32 = arith.constant 0 : i32
    %c0_i32_0 = arith.constant 0 : i32
    return %arg0, %c0_i32 : i32, i32
  }
}

</mosaic_0001>

<llo_original>
// kernel: tpu_custom_call.1
$region0: #{tpu_custom_call.1}
  #allocation0 [shape = 'u32[]', space=smem, size = 0x4, offset = 0x4, fixed_abs, tag = 'smem constant byte address 0x4 - core index']
  #allocation1 [shape = 'u32[144,128]{1,0:T(1,128)}', space=vmem, size = 0x12000, scoped, tag = 'internal scratch']
  %s0 = inlined_call_operand.vmem [shape: f32[64,32], index: 0, kind: input, shape index: {}]
  %s1 = inlined_call_operand.hbm [shape: f32[32,640], index: 1, kind: input, shape index: {}]
  %s2 = inlined_call_operand.vmem [shape: f32[1,640], index: 2, kind: input, shape index: {}]
  %s3 = inlined_call_operand.vmem [shape: f32[256,128], index: 3, kind: input, shape index: {}]
  %s4 = inlined_call_operand.vmem [shape: f32[1,128], index: 4, kind: input, shape index: {}]
  %s5 = inlined_call_operand.hbm [shape: f32[384,384], index: 5, kind: input, shape index: {}]
  %s6 = inlined_call_operand.hbm [shape: f32[384,512], index: 6, kind: input, shape index: {}]
  %s7 = inlined_call_operand.vmem [shape: f32[1,512], index: 7, kind: input, shape index: {}]
  %s8 = inlined_call_operand.hbm [shape: f32[256,128], index: 8, kind: input, shape index: {}]
  %s9 = inlined_call_operand.vmem [shape: f32[1,128], index: 9, kind: input, shape index: {}]
  %s10 = inlined_call_operand.hbm [shape: f32[256,256], index: 10, kind: input, shape index: {}]
  %s11 = inlined_call_operand.vmem [shape: f32[256,16], index: 11, kind: input, shape index: {}]
  %s12 = inlined_call_operand.vmem [shape: f32[1,16], index: 12, kind: input, shape index: {}]
  %s13 = inlined_call_operand.vmem [shape: f32[16,128], index: 13, kind: input, shape index: {}]
  %s14 = inlined_call_operand.vmem [shape: f32[1,128], index: 14, kind: input, shape index: {}]
  %s15 = inlined_call_operand.hbm [shape: f32[64,128], index: 15, kind: output, shape index: {}]
  %s16 = sld [smem:[#allocation0]]
  $region113: #{tpu_custom_call.1} parent=0
    _
  %s18 = ssub.s32 1, %s16
  %s19 = scalar_select 0, %s18, %s16
  $region1: #{tpu_custom_call.1} parent=0
    #allocation2 [shape = 'u8[81920]{0}', space=vmem, size = 0x14000, scoped, tag = 'input window, operand 1, single buffered']
    #allocation3 [shape = 's32[2]{0}', space=sflag, size = 0x8, scoped, tag = 'scoped memory for tpu_custom_call.1']
    #allocation4 [shape = 's32[2]{0}', space=sflag, size = 0x8, scoped, tag = 'scoped memory for tpu_custom_call.1']
    #allocation5 [shape = 'u8[589824]{0}', space=vmem, size = 0x90000, scoped, tag = 'input window, operand 5, single buffered']
    #allocation6 [shape = 's32[1]{0}', space=sflag, size = 0x4, scoped, tag = 'scoped memory for tpu_custom_call.1']
    #allocation7 [shape = 'u8[786432]{0}', space=vmem, size = 0xc0000, scoped, tag = 'input window, operand 6, single buffered']
    #allocation8 [shape = 'u8[131072]{0}', space=vmem, size = 0x20000, scoped, tag = 'input window, operand 8, single buffered']
    #allocation9 [shape = 's32[1]{0}', space=sflag, size = 0x4, scoped, tag = 'scoped memory for tpu_custom_call.1']
    #allocation10 [shape = 'u8[262144]{0}', space=vmem, size = 0x40000, scoped, tag = 'input window, operand 10, single buffered']
    #allocation11 [shape = 'u8[32768]{0}', space=vmem, size = 0x8000, scoped, tag = 'output window, operand 0']
    %20 = vsyncpa [#allocation3], 0
    %21 = vsyncpa [#allocation6], 0
    %22 = vsyncpa [#allocation9], 0
    %23 = vsyncpa [#allocation4], 0
    %s24 = scalar_lea.sflag [#allocation4], 1
    %25 = vsyncpa %s24, 0
    loop: start=0, step=1, limit=4
    $region2: #{tpu_custom_call.1} parent=1 // loop_pre_header
      _
    $region3: #{tpu_custom_call.1} parent=1 // loop_header
      %s27 = sphi 0, %s31
      %p28 = scmp.ge.s32.totalorder %s27, 4
      %s37 = sphi 0, %s39
      %s40 = sphi 0, %s37
      %s41 = sphi 0, %s40
      %s57 = sphi 0, %s41
      %s61 = sphi 0, %s61
      %s63 = sphi 0, %s61
      %s64 = sphi 0, %s63
      %s78 = sphi 0, %s64
      %s82 = sphi 0, %s82
      %s84 = sphi 0, %s82
      %s85 = sphi 0, %s84
      %s99 = sphi 0, %s85
      %s103 = sphi 0, %s103
      %s105 = sphi 0, %s103
      %s106 = sphi 0, %s105
      %s120 = sphi 0, %s106
      %s124 = sphi 0, %s124
      %s126 = sphi 0, %s124
      %s127 = sphi 0, %s126
      %s141 = sphi 0, %s127
      %s145 = sphi 0, %s145
      %s147 = sphi 0, %s145
      %s148 = sphi 0, %s147
      %s162 = sphi 0, %s148
      %s166 = sphi 0, %s166
      %s168 = sphi 0, %s166
      %s169 = sphi 0, %s168
      %s183 = sphi 0, %s169
      %s187 = sphi 0, %s187
      %s189 = sphi 0, %s187
      %s190 = sphi 0, %s189
      %s204 = sphi 0, %s190
      %s208 = sphi 0, %s208
      %s210 = sphi 0, %s208
      %s211 = sphi 0, %s210
      %s225 = sphi 0, %s211
      %s229 = sphi 0, %s229
      %s231 = sphi 0, %s229
      %s232 = sphi 0, %s231
      %s246 = sphi 0, %s232
      %s250 = sphi 0, %s250
      %s252 = sphi 0, %s250
      %s253 = sphi 0, %s252
      %s267 = sphi 0, %s253
      %s271 = sphi 0, %s271
      %s273 = sphi 0, %s271
      %s274 = sphi 0, %s273
      %s288 = sphi 0, %s274
      %s292 = sphi 0, %s292
      %s294 = sphi 0, %s292
      %s295 = sphi 0, %s294
      %s309 = sphi 0, %s295
      %s313 = sphi 0, %s313
      %s315 = sphi 0, %s313
      %s316 = sphi 0, %s315
      %s330 = sphi 0, %s316
      %s334 = sphi 0, %s334
      %s336 = sphi 0, %s334
      %s337 = sphi 0, %s336
      %s351 = sphi 0, %s337
      %s357 = sphi 0, %s359
      %s360 = sphi 0, %s357
      %s361 = sphi 0, %s360
      %s377 = sphi 0, %s361
    $region4: #{tpu_custom_call.1} parent=1 // loop_header_branch
      %30 = sbr.rel (%p28) target = $region8
    $region5: #{tpu_custom_call.1} parent=1 // loop_body
      %s32 = ssub.s32 %s27, 1
      %s33 = ssub.s32 %s27, 2
      %s34 = sadd.s32 %s27, 1
      %s35 = ssub.s32 %s27, %s34
      %p36 = scmp.eq.s32.totalorder %s35, 0
      %s38 = sadd.s32 %s37, 1
      %s39 = scalar_select %p36, %s37, %s38
      %p42 = pneg %p36
      %p43 = scmp.eq.s32.totalorder %s27, 1
      %p44 = por %p42, %p43
      %p45 = scmp.ne.s32.totalorder %s37, %s40
      %p46 = scmp.eq.s32.totalorder %s27, 0
      %p47 = por %p45, %p46
      %p48 = scmp.ne.s32.totalorder %s37, %s40
      %p49 = scmp.eq.s32.totalorder %s32, 1
      %p50 = por %p48, %p49
      %p51 = scmp.ne.s32.totalorder %s40, %s41
      %p52 = scmp.eq.s32.totalorder %s32, 0
      %p53 = por %p51, %p52
      %p54 = scmp.ne.s32.totalorder %s40, %s41
      %p55 = scmp.eq.s32.totalorder %s33, 1
      %p56 = por %p54, %p55
      %p58 = scmp.ne.s32.totalorder %s41, %s57
      %p59 = scmp.eq.s32.totalorder %s33, 0
      %p60 = por %p58, %p59
      %s62 = sadd.s32 %s61, 1
      %p65 = scmp.eq.s32.totalorder %s27, 1
      %p66 = scmp.ne.s32.totalorder %s61, %s63
      %p67 = scmp.eq.s32.totalorder %s27, 0
      %p68 = por %p66, %p67
      %p69 = scmp.ne.s32.totalorder %s61, %s63
      %p70 = scmp.eq.s32.totalorder %s32, 1
      %p71 = por %p69, %p70
      %p72 = scmp.ne.s32.totalorder %s63, %s64
      %p73 = scmp.eq.s32.totalorder %s32, 0
      %p74 = por %p72, %p73
      %p75 = scmp.ne.s32.totalorder %s63, %s64
      %p76 = scmp.eq.s32.totalorder %s33, 1
      %p77 = por %p75, %p76
      %p79 = scmp.ne.s32.totalorder %s64, %s78
      %p80 = scmp.eq.s32.totalorder %s33, 0
      %p81 = por %p79, %p80
      %s83 = sadd.s32 %s82, 1
      %p86 = scmp.eq.s32.totalorder %s27, 1
      %p87 = scmp.ne.s32.totalorder %s82, %s84
      %p88 = scmp.eq.s32.totalorder %s27, 0
      %p89 = por %p87, %p88
      %p90 = scmp.ne.s32.totalorder %s82, %s84
      %p91 = scmp.eq.s32.totalorder %s32, 1
      %p92 = por %p90, %p91
      %p93 = scmp.ne.s32.totalorder %s84, %s85
      %p94 = scmp.eq.s32.totalorder %s32, 0
      %p95 = por %p93, %p94
      %p96 = scmp.ne.s32.totalorder %s84, %s85
      %p97 = scmp.eq.s32.totalorder %s33, 1
      %p98 = por %p96, %p97
      %p100 = scmp.ne.s32.totalorder %s85, %s99
      %p101 = scmp.eq.s32.totalorder %s33, 0
      %p102 = por %p100, %p101
      %s104 = sadd.s32 %s103, 1
      %p107 = scmp.eq.s32.totalorder %s27, 1
      %p108 = scmp.ne.s32.totalorder %s103, %s105
      %p109 = scmp.eq.s32.totalorder %s27, 0
      %p110 = por %p108, %p109
      %p111 = scmp.ne.s32.totalorder %s103, %s105
      %p112 = scmp.eq.s32.totalorder %s32, 1
      %p113 = por %p111, %p112
      %p114 = scmp.ne.s32.totalorder %s105, %s106
      %p115 = scmp.eq.s32.totalorder %s32, 0
      %p116 = por %p114, %p115
      %p117 = scmp.ne.s32.totalorder %s105, %s106
      %p118 = scmp.eq.s32.totalorder %s33, 1
      %p119 = por %p117, %p118
      %p121 = scmp.ne.s32.totalorder %s106, %s120
      %p122 = scmp.eq.s32.totalorder %s33, 0
      %p123 = por %p121, %p122
      %s125 = sadd.s32 %s124, 1
      %p128 = scmp.eq.s32.totalorder %s27, 1
      %p129 = scmp.ne.s32.totalorder %s124, %s126
      %p130 = scmp.eq.s32.totalorder %s27, 0
      %p131 = por %p129, %p130
      %p132 = scmp.ne.s32.totalorder %s124, %s126
      %p133 = scmp.eq.s32.totalorder %s32, 1
      %p134 = por %p132, %p133
      %p135 = scmp.ne.s32.totalorder %s126, %s127
      %p136 = scmp.eq.s32.totalorder %s32, 0
      %p137 = por %p135, %p136
      %p138 = scmp.ne.s32.totalorder %s126, %s127
      %p139 = scmp.eq.s32.totalorder %s33, 1
      %p140 = por %p138, %p139
      %p142 = scmp.ne.s32.totalorder %s127, %s141
      %p143 = scmp.eq.s32.totalorder %s33, 0
      %p144 = por %p142, %p143
      %s146 = sadd.s32 %s145, 1
      %p149 = scmp.eq.s32.totalorder %s27, 1
      %p150 = scmp.ne.s32.totalorder %s145, %s147
      %p151 = scmp.eq.s32.totalorder %s27, 0
      %p152 = por %p150, %p151
      %p153 = scmp.ne.s32.totalorder %s145, %s147
      %p154 = scmp.eq.s32.totalorder %s32, 1
      %p155 = por %p153, %p154
      %p156 = scmp.ne.s32.totalorder %s147, %s148
      %p157 = scmp.eq.s32.totalorder %s32, 0
      %p158 = por %p156, %p157
      %p159 = scmp.ne.s32.totalorder %s147, %s148
      %p160 = scmp.eq.s32.totalorder %s33, 1
      %p161 = por %p159, %p160
      %p163 = scmp.ne.s32.totalorder %s148, %s162
      %p164 = scmp.eq.s32.totalorder %s33, 0
      %p165 = por %p163, %p164
      %s167 = sadd.s32 %s166, 1
      %p170 = scmp.eq.s32.totalorder %s27, 1
      %p171 = scmp.ne.s32.totalorder %s166, %s168
      %p172 = scmp.eq.s32.totalorder %s27, 0
      %p173 = por %p171, %p172
      %p174 = scmp.ne.s32.totalorder %s166, %s168
      %p175 = scmp.eq.s32.totalorder %s32, 1
      %p176 = por %p174, %p175
      %p177 = scmp.ne.s32.totalorder %s168, %s169
      %p178 = scmp.eq.s32.totalorder %s32, 0
      %p179 = por %p177, %p178
      %p180 = scmp.ne.s32.totalorder %s168, %s169
      %p181 = scmp.eq.s32.totalorder %s33, 1
      %p182 = por %p180, %p181
      %p184 = scmp.ne.s32.totalorder %s169, %s183
      %p185 = scmp.eq.s32.totalorder %s33, 0
      %p186 = por %p184, %p185
      %s188 = sadd.s32 %s187, 1
      %p191 = scmp.eq.s32.totalorder %s27, 1
      %p192 = scmp.ne.s32.totalorder %s187, %s189
      %p193 = scmp.eq.s32.totalorder %s27, 0
      %p194 = por %p192, %p193
      %p195 = scmp.ne.s32.totalorder %s187, %s189
      %p196 = scmp.eq.s32.totalorder %s32, 1
      %p197 = por %p195, %p196
      %p198 = scmp.ne.s32.totalorder %s189, %s190
      %p199 = scmp.eq.s32.totalorder %s32, 0
      %p200 = por %p198, %p199
      %p201 = scmp.ne.s32.totalorder %s189, %s190
      %p202 = scmp.eq.s32.totalorder %s33, 1
      %p203 = por %p201, %p202
      %p205 = scmp.ne.s32.totalorder %s190, %s204
      %p206 = scmp.eq.s32.totalorder %s33, 0
      %p207 = por %p205, %p206
      %s209 = sadd.s32 %s208, 1
      %p212 = scmp.eq.s32.totalorder %s27, 1
      %p213 = scmp.ne.s32.totalorder %s208, %s210
      %p214 = scmp.eq.s32.totalorder %s27, 0
      %p215 = por %p213, %p214
      %p216 = scmp.ne.s32.totalorder %s208, %s210
      %p217 = scmp.eq.s32.totalorder %s32, 1
      %p218 = por %p216, %p217
      %p219 = scmp.ne.s32.totalorder %s210, %s211
      %p220 = scmp.eq.s32.totalorder %s32, 0
      %p221 = por %p219, %p220
      %p222 = scmp.ne.s32.totalorder %s210, %s211
      %p223 = scmp.eq.s32.totalorder %s33, 1
      %p224 = por %p222, %p223
      %p226 = scmp.ne.s32.totalorder %s211, %s225
      %p227 = scmp.eq.s32.totalorder %s33, 0
      %p228 = por %p226, %p227
      %s230 = sadd.s32 %s229, 1
      %p233 = scmp.eq.s32.totalorder %s27, 1
      %p234 = scmp.ne.s32.totalorder %s229, %s231
      %p235 = scmp.eq.s32.totalorder %s27, 0
      %p236 = por %p234, %p235
      %p237 = scmp.ne.s32.totalorder %s229, %s231
      %p238 = scmp.eq.s32.totalorder %s32, 1
      %p239 = por %p237, %p238
      %p240 = scmp.ne.s32.totalorder %s231, %s232
      %p241 = scmp.eq.s32.totalorder %s32, 0
      %p242 = por %p240, %p241
      %p243 = scmp.ne.s32.totalorder %s231, %s232
      %p244 = scmp.eq.s32.totalorder %s33, 1
      %p245 = por %p243, %p244
      %p247 = scmp.ne.s32.totalorder %s232, %s246
      %p248 = scmp.eq.s32.totalorder %s33, 0
      %p249 = por %p247, %p248
      %s251 = sadd.s32 %s250, 1
      %p254 = scmp.eq.s32.totalorder %s27, 1
      %p255 = scmp.ne.s32.totalorder %s250, %s252
      %p256 = scmp.eq.s32.totalorder %s27, 0
      %p257 = por %p255, %p256
      %p258 = scmp.ne.s32.totalorder %s250, %s252
      %p259 = scmp.eq.s32.totalorder %s32, 1
      %p260 = por %p258, %p259
      %p261 = scmp.ne.s32.totalorder %s252, %s253
      %p262 = scmp.eq.s32.totalorder %s32, 0
      %p263 = por %p261, %p262
      %p264 = scmp.ne.s32.totalorder %s252, %s253
      %p265 = scmp.eq.s32.totalorder %s33, 1
      %p266 = por %p264, %p265
      %p268 = scmp.ne.s32.totalorder %s253, %s267
      %p269 = scmp.eq.s32.totalorder %s33, 0
      %p270 = por %p268, %p269
      %s272 = sadd.s32 %s271, 1
      %p275 = scmp.eq.s32.totalorder %s27, 1
      %p276 = scmp.ne.s32.totalorder %s271, %s273
      %p277 = scmp.eq.s32.totalorder %s27, 0
      %p278 = por %p276, %p277
      %p279 = scmp.ne.s32.totalorder %s271, %s273
      %p280 = scmp.eq.s32.totalorder %s32, 1
      %p281 = por %p279, %p280
      %p282 = scmp.ne.s32.totalorder %s273, %s274
      %p283 = scmp.eq.s32.totalorder %s32, 0
      %p284 = por %p282, %p283
      %p285 = scmp.ne.s32.totalorder %s273, %s274
      %p286 = scmp.eq.s32.totalorder %s33, 1
      %p287 = por %p285, %p286
      %p289 = scmp.ne.s32.totalorder %s274, %s288
      %p290 = scmp.eq.s32.totalorder %s33, 0
      %p291 = por %p289, %p290
      %s293 = sadd.s32 %s292, 1
      %p296 = scmp.eq.s32.totalorder %s27, 1
      %p297 = scmp.ne.s32.totalorder %s292, %s294
      %p298 = scmp.eq.s32.totalorder %s27, 0
      %p299 = por %p297, %p298
      %p300 = scmp.ne.s32.totalorder %s292, %s294
      %p301 = scmp.eq.s32.totalorder %s32, 1
      %p302 = por %p300, %p301
      %p303 = scmp.ne.s32.totalorder %s294, %s295
      %p304 = scmp.eq.s32.totalorder %s32, 0
      %p305 = por %p303, %p304
      %p306 = scmp.ne.s32.totalorder %s294, %s295
      %p307 = scmp.eq.s32.totalorder %s33, 1
      %p308 = por %p306, %p307
      %p310 = scmp.ne.s32.totalorder %s295, %s309
      %p311 = scmp.eq.s32.totalorder %s33, 0
      %p312 = por %p310, %p311
      %s314 = sadd.s32 %s313, 1
      %p317 = scmp.eq.s32.totalorder %s27, 1
      %p318 = scmp.ne.s32.totalorder %s313, %s315
      %p319 = scmp.eq.s32.totalorder %s27, 0
      %p320 = por %p318, %p319
      %p321 = scmp.ne.s32.totalorder %s313, %s315
      %p322 = scmp.eq.s32.totalorder %s32, 1
      %p323 = por %p321, %p322
      %p324 = scmp.ne.s32.totalorder %s315, %s316
      %p325 = scmp.eq.s32.totalorder %s32, 0
      %p326 = por %p324, %p325
      %p327 = scmp.ne.s32.totalorder %s315, %s316
      %p328 = scmp.eq.s32.totalorder %s33, 1
      %p329 = por %p327, %p328
      %p331 = scmp.ne.s32.totalorder %s316, %s330
      %p332 = scmp.eq.s32.totalorder %s33, 0
      %p333 = por %p331, %p332
      %s335 = sadd.s32 %s334, 1
      %p338 = scmp.eq.s32.totalorder %s27, 1
      %p339 = scmp.ne.s32.totalorder %s334, %s336
      %p340 = scmp.eq.s32.totalorder %s27, 0
      %p341 = por %p339, %p340
      %p342 = scmp.ne.s32.totalorder %s334, %s336
      %p343 = scmp.eq.s32.totalorder %s32, 1
      %p344 = por %p342, %p343
      %p345 = scmp.ne.s32.totalorder %s336, %s337
      %p346 = scmp.eq.s32.totalorder %s32, 0
      %p347 = por %p345, %p346
      %p348 = scmp.ne.s32.totalorder %s336, %s337
      %p349 = scmp.eq.s32.totalorder %s33, 1
      %p350 = por %p348, %p349
      %p352 = scmp.ne.s32.totalorder %s337, %s351
      %p353 = scmp.eq.s32.totalorder %s33, 0
      %p354 = por %p352, %p353
      %s355 = ssub.s32 %s27, %s34
      %p356 = scmp.eq.s32.totalorder %s355, 0
      %s358 = sadd.s32 %s357, 1
      %s359 = scalar_select %p356, %s357, %s358
      %p362 = pneg %p356
      %p363 = scmp.eq.s32.totalorder %s27, 1
      %p364 = por %p362, %p363
      %p365 = scmp.ne.s32.totalorder %s357, %s360
      %p366 = scmp.eq.s32.totalorder %s27, 0
      %p367 = por %p365, %p366
      %p368 = scmp.ne.s32.totalorder %s357, %s360
      %p369 = scmp.eq.s32.totalorder %s32, 1
      %p370 = por %p368, %p369
      %p371 = scmp.ne.s32.totalorder %s360, %s361
      %p372 = scmp.eq.s32.totalorder %s32, 0
      %p373 = por %p371, %p372
      %p374 = scmp.ne.s32.totalorder %s360, %s361
      %p375 = scmp.eq.s32.totalorder %s33, 1
      %p376 = por %p374, %p375
      %p378 = scmp.ne.s32.totalorder %s361, %s377
      %p379 = scmp.eq.s32.totalorder %s33, 0
      %p380 = por %p378, %p379
      %p381 = scmp.le.s32.totalorder 1, %s27
      %p382 = scmp.lt.s32.totalorder %s27, 3
      %p383 = pnand %p381, %p382
      %p384 = pneg %p383
      // Predicated region
      $region9: #{tpu_custom_call.1} parent=5 // pred_check
        _
      $region10: #{tpu_custom_call.1} parent=5 // pred_check_branch
        %386 = sbr.rel (%p383) target = $region12
      $region11: #{tpu_custom_call.1} parent=5 // pred_region
        %s387 = ssub.s32 %s27, 1
        // Predicated region
        $region13: #{tpu_custom_call.1} parent=11 // pred_check
          %p388 = pneg %p74
        $region14: #{tpu_custom_call.1} parent=11 // pred_check_branch
          %390 = sbr.rel (%p388) target = $region16
        $region15: #{tpu_custom_call.1} parent=11 // pred_region
          %s392 = ssub.s32 2560, 2560
          %393 = vsyncadd [#allocation3], %s392
          %s394 = sshll.u32 [#allocation2], 4
          %s395 = int_to_ptr.vmem [resolvable:$true] %s394
          %400 = dma.hbm_to_vmem [thread:$0]  %s1, 2560, %s395, [#allocation3], 640, 640, 40
        $region16: #{tpu_custom_call.1} parent=11 // pred_fallthru
          _
        // Predicated region
        $region17: #{tpu_custom_call.1} parent=11 // pred_check
          %p401 = pneg %p95
        $region18: #{tpu_custom_call.1} parent=11 // pred_check_branch
          %403 = sbr.rel (%p401) target = $region20
        $region19: #{tpu_custom_call.1} parent=11 // pred_region
          _
        $region20: #{tpu_custom_call.1} parent=11 // pred_fallthru
          _
        // Predicated region
        $region21: #{tpu_custom_call.1} parent=11 // pred_check
          %p404 = pneg %p116
        $region22: #{tpu_custom_call.1} parent=11 // pred_check_branch
          %406 = sbr.rel (%p404) target = $region24
        $region23: #{tpu_custom_call.1} parent=11 // pred_region
          _
        $region24: #{tpu_custom_call.1} parent=11 // pred_fallthru
          _
        // Predicated region
        $region25: #{tpu_custom_call.1} parent=11 // pred_check
          %p407 = pneg %p137
        $region26: #{tpu_custom_call.1} parent=11 // pred_check_branch
          %409 = sbr.rel (%p407) target = $region28
        $region27: #{tpu_custom_call.1} parent=11 // pred_region
          _
        $region28: #{tpu_custom_call.1} parent=11 // pred_fallthru
          _
        // Predicated region
        $region29: #{tpu_custom_call.1} parent=11 // pred_check
          %p410 = pneg %p158
        $region30: #{tpu_custom_call.1} parent=11 // pred_check_branch
          %412 = sbr.rel (%p410) target = $region32
        $region31: #{tpu_custom_call.1} parent=11 // pred_region
          %s414 = ssub.s32 18432, 18432
          %415 = vsyncadd [#allocation6], %s414
          %s416 = sshll.u32 [#allocation5], 4
          %s417 = int_to_ptr.vmem [resolvable:$true] %s416
          %422 = dma.hbm_to_vmem [thread:$0]  %s5, 18432, %s417, [#allocation6], 384, 384, 24
        $region32: #{tpu_custom_call.1} parent=11 // pred_fallthru
          _
        // Predicated region
        $region33: #{tpu_custom_call.1} parent=11 // pred_check
          %p423 = pneg %p179
        $region34: #{tpu_custom_call.1} parent=11 // pred_check_branch
          %425 = sbr.rel (%p423) target = $region36
        $region35: #{tpu_custom_call.1} parent=11 // pred_region
          %s427 = ssub.s32 24576, 24576
          %428 = vsyncadd [#allocation6], %s427
          %s429 = sshll.u32 [#allocation7], 4
          %s430 = int_to_ptr.vmem [resolvable:$true] %s429
          %435 = dma.hbm_to_vmem [thread:$0]  %s6, 24576, %s430, [#allocation6], 512, 512, 32
        $region36: #{tpu_custom_call.1} parent=11 // pred_fallthru
          _
        // Predicated region
        $region37: #{tpu_custom_call.1} parent=11 // pred_check
          %p436 = pneg %p200
        $region38: #{tpu_custom_call.1} parent=11 // pred_check_branch
          %438 = sbr.rel (%p436) target = $region40
        $region39: #{tpu_custom_call.1} parent=11 // pred_region
          _
        $region40: #{tpu_custom_call.1} parent=11 // pred_fallthru
          _
        // Predicated region
        $region41: #{tpu_custom_call.1} parent=11 // pred_check
          %p439 = pneg %p221
        $region42: #{tpu_custom_call.1} parent=11 // pred_check_branch
          %441 = sbr.rel (%p439) target = $region44
        $region43: #{tpu_custom_call.1} parent=11 // pred_region
          %s443 = ssub.s32 4096, 4096
          %444 = vsyncadd [#allocation9], %s443
          %s445 = sshll.u32 [#allocation8], 4
          %s446 = int_to_ptr.vmem [resolvable:$true] %s445
          %451 = dma.hbm_to_vmem [thread:$0]  %s8, 4096, %s446, [#allocation9], 128, 128, 8
        $region44: #{tpu_custom_call.1} parent=11 // pred_fallthru
          _
        // Predicated region
        $region45: #{tpu_custom_call.1} parent=11 // pred_check
          %p452 = pneg %p242
        $region46: #{tpu_custom_call.1} parent=11 // pred_check_branch
          %454 = sbr.rel (%p452) target = $region48
        $region47: #{tpu_custom_call.1} parent=11 // pred_region
          _
        $region48: #{tpu_custom_call.1} parent=11 // pred_fallthru
          _
        // Predicated region
        $region49: #{tpu_custom_call.1} parent=11 // pred_check
          %p455 = pneg %p263
        $region50: #{tpu_custom_call.1} parent=11 // pred_check_branch
          %457 = sbr.rel (%p455) target = $region52
        $region51: #{tpu_custom_call.1} parent=11 // pred_region
          %s459 = ssub.s32 8192, 8192
          %460 = vsyncadd [#allocation9], %s459
          %s461 = sshll.u32 [#allocation10], 4
          %s462 = int_to_ptr.vmem [resolvable:$true] %s461
          %467 = dma.hbm_to_vmem [thread:$0]  %s10, 8192, %s462, [#allocation9], 256, 256, 16
        $region52: #{tpu_custom_call.1} parent=11 // pred_fallthru
          _
        // Predicated region
        $region53: #{tpu_custom_call.1} parent=11 // pred_check
          %p468 = pneg %p284
        $region54: #{tpu_custom_call.1} parent=11 // pred_check_branch
          %470 = sbr.rel (%p468) target = $region56
        $region55: #{tpu_custom_call.1} parent=11 // pred_region
          _
        $region56: #{tpu_custom_call.1} parent=11 // pred_fallthru
          _
        // Predicated region
        $region57: #{tpu_custom_call.1} parent=11 // pred_check
          %p471 = pneg %p305
        $region58: #{tpu_custom_call.1} parent=11 // pred_check_branch
          %473 = sbr.rel (%p471) target = $region60
        $region59: #{tpu_custom_call.1} parent=11 // pred_region
          _
        $region60: #{tpu_custom_call.1} parent=11 // pred_fallthru
          _
        // Predicated region
        $region61: #{tpu_custom_call.1} parent=11 // pred_check
          %p474 = pneg %p326
        $region62: #{tpu_custom_call.1} parent=11 // pred_check_branch
          %476 = sbr.rel (%p474) target = $region64
        $region63: #{tpu_custom_call.1} parent=11 // pred_region
          _
        $region64: #{tpu_custom_call.1} parent=11 // pred_fallthru
          _
        // Predicated region
        $region65: #{tpu_custom_call.1} parent=11 // pred_check
          %p477 = pneg %p347
        $region66: #{tpu_custom_call.1} parent=11 // pred_check_branch
          %479 = sbr.rel (%p477) target = $region68
        $region67: #{tpu_custom_call.1} parent=11 // pred_region
          _
        $region68: #{tpu_custom_call.1} parent=11 // pred_fallthru
          _
      $region12: #{tpu_custom_call.1} parent=5 // pred_fallthru
        _
      %p480 = scmp.lt.s32.totalorder %s27, 2
      // Predicated region
      $region69: #{tpu_custom_call.1} parent=5 // pred_check
        %p481 = pneg %p480
      $region70: #{tpu_custom_call.1} parent=5 // pred_check_branch
        %483 = sbr.rel (%p481) target = $region72
      $region71: #{tpu_custom_call.1} parent=5 // pred_region
        // Predicated region
        $region73: #{tpu_custom_call.1} parent=71 // pred_check
          %p484 = pneg %p47
        $region74: #{tpu_custom_call.1} parent=71 // pred_check_branch
          %486 = sbr.rel (%p484) target = $region76
        $region75: #{tpu_custom_call.1} parent=71 // pred_region
          %s487 = smul.u32 4, %s27
          %p488 = scmp.lt.s32.totalorder %s487, 7
          %s489 = scalar_select %p488, %s487, 7
          %s490 = smul.addr %s489, 8
          %s491 = scalar_lea.vmem %s0, %s490
          %s492 = smul.u32 4, %s27
        $region76: #{tpu_custom_call.1} parent=71 // pred_fallthru
          _
      $region72: #{tpu_custom_call.1} parent=5 // pred_fallthru
        _
      %p493 = scmp.le.s32.totalorder 1, %s27
      %p494 = scmp.lt.s32.totalorder %s27, 3
      %p495 = pnand %p493, %p494
      %p496 = pneg %p495
      // Predicated region
      $region77: #{tpu_custom_call.1} parent=5 // pred_check
        _
      $region78: #{tpu_custom_call.1} parent=5 // pred_check_branch
        %498 = sbr.rel (%p495) target = $region80
      $region79: #{tpu_custom_call.1} parent=5 // pred_region
        %s499 = ssub.s32 %s27, 1
        // Predicated region
        $region81: #{tpu_custom_call.1} parent=79 // pred_check
          %p500 = pneg %p74
        $region82: #{tpu_custom_call.1} parent=79 // pred_check_branch
          %502 = sbr.rel (%p500) target = $region84
        $region83: #{tpu_custom_call.1} parent=79 // pred_region
          %503 = dma.done [#allocation3], 2560
        $region84: #{tpu_custom_call.1} parent=79 // pred_fallthru
          _
        // Predicated region
        $region85: #{tpu_custom_call.1} parent=79 // pred_check
          %p504 = pneg %p158
        $region86: #{tpu_custom_call.1} parent=79 // pred_check_branch
          %506 = sbr.rel (%p504) target = $region88
        $region87: #{tpu_custom_call.1} parent=79 // pred_region
          %507 = dma.done [#allocation6], 18432
        $region88: #{tpu_custom_call.1} parent=79 // pred_fallthru
          _
        // Predicated region
        $region89: #{tpu_custom_call.1} parent=79 // pred_check
          %p508 = pneg %p179
        $region90: #{tpu_custom_call.1} parent=79 // pred_check_branch
          %510 = sbr.rel (%p508) target = $region92
        $region91: #{tpu_custom_call.1} parent=79 // pred_region
          %511 = dma.done [#allocation6], 24576
        $region92: #{tpu_custom_call.1} parent=79 // pred_fallthru
          _
        // Predicated region
        $region93: #{tpu_custom_call.1} parent=79 // pred_check
          %p512 = pneg %p221
        $region94: #{tpu_custom_call.1} parent=79 // pred_check_branch
          %514 = sbr.rel (%p512) target = $region96
        $region95: #{tpu_custom_call.1} parent=79 // pred_region
          %515 = dma.done [#allocation9], 4096
        $region96: #{tpu_custom_call.1} parent=79 // pred_fallthru
          _
        // Predicated region
        $region97: #{tpu_custom_call.1} parent=79 // pred_check
          %p516 = pneg %p263
        $region98: #{tpu_custom_call.1} parent=79 // pred_check_branch
          %518 = sbr.rel (%p516) target = $region100
        $region99: #{tpu_custom_call.1} parent=79 // pred_region
          %519 = dma.done [#allocation9], 8192
        $region100: #{tpu_custom_call.1} parent=79 // pred_fallthru
          _
        %s520 = smul.u32 4, %s32
        %p521 = scmp.lt.s32.totalorder %s520, 7
        %s522 = scalar_select %p521, %s520, 7
        %s523 = smul.addr %s522, 8
        %s524 = scalar_lea.vmem %s0, %s523
        %p525 = pneg %p53
        %p526 = pneg %p50
        %p527 = pneg %p74
        %p528 = pneg %p71
        %p529 = pneg %p95
        %p530 = pneg %p92
        %p531 = pneg %p116
        %p532 = pneg %p113
        %p533 = pneg %p137
        %p534 = pneg %p134
        %p535 = pneg %p158
        %p536 = pneg %p155
        %p537 = pneg %p179
        %p538 = pneg %p176
        %p539 = pneg %p200
        %p540 = pneg %p197
        %p541 = pneg %p221
        %p542 = pneg %p218
        %p543 = pneg %p242
        %p544 = pneg %p239
        %p545 = pneg %p263
        %p546 = pneg %p260
        %p547 = pneg %p284
        %p548 = pneg %p281
        %p549 = pneg %p305
        %p550 = pneg %p302
        %p551 = pneg %p326
        %p552 = pneg %p323
        %p553 = pneg %p347
        %p554 = pneg %p344
        %p555 = pneg %p373
        %p556 = pneg %p370
        %s557 = sand.u32 %s360, 1
        %s558 = scalar_lea.sflag [#allocation4], %s557
        %s559 = sand.u32 %s360, 1
        %s560 = smul.addr %s559, 32
        %s561 = scalar_lea.vmem [#allocation11], %s560
        %s562 = smul.u32 4, %s32
        %p563 = scmp.lt.s32.totalorder %s562, 7
        %s564 = scalar_select %p563, %s562, 7
        %s565 = smul.addr %s564, 8
        %s566 = scalar_lea.vmem %s0, %s565
        %s567 = smul.u32 4, %s32
        %s568 = smul.u32 4, %s32
        %v569 = vld [vmem:[%s566] sm:$0xff]
        %v570 = vld [vmem:[%s566 + $0x8] sm:$0xff]
        %v571 = vld [vmem:[%s566 + $0x10] sm:$0xff]
        %v572 = vld [vmem:[%s566 + $0x18] sm:$0xff]
        %v573 = vld [vmem:[#allocation2] sm:$0xff]
        %v574 = vld [vmem:[#allocation2 + $0x8] sm:$0xff]
        %v575 = vld [vmem:[#allocation2 + $0x10] sm:$0xff]
        %v576 = vld [vmem:[#allocation2 + $0x18] sm:$0xff]
        %v577 = vld [vmem:[#allocation2 + $0x20] sm:$0xff]
        %v578 = vld [vmem:[#allocation2 + $0x28] sm:$0xff]
        %v579 = vld [vmem:[#allocation2 + $0x30] sm:$0xff]
        %v580 = vld [vmem:[#allocation2 + $0x38] sm:$0xff]
        %v581 = vld [vmem:[#allocation2 + $0x40] sm:$0xff]
        %v582 = vld [vmem:[#allocation2 + $0x48] sm:$0xff]
        %v583 = vld [vmem:[#allocation2 + $0x50] sm:$0xff]
        %v584 = vld [vmem:[#allocation2 + $0x58] sm:$0xff]
        %v585 = vld [vmem:[#allocation2 + $0x60] sm:$0xff]
        %v586 = vld [vmem:[#allocation2 + $0x68] sm:$0xff]
        %v587 = vld [vmem:[#allocation2 + $0x70] sm:$0xff]
        %v588 = vld [vmem:[#allocation2 + $0x78] sm:$0xff]
        %v589 = vld [vmem:[#allocation2 + $0x80] sm:$0xff]
        %v590 = vld [vmem:[#allocation2 + $0x88] sm:$0xff]
        %v591 = vld [vmem:[#allocation2 + $0x90] sm:$0xff]
        %v592 = vld [vmem:[#allocation2 + $0x98] sm:$0xff]
        %v593 = vld [vmem:[%s2] sm:$0x1f]
        %v595 = vlaneseq
        %v596 = vshrl.u32 %v595, 7
        %v597 = vsub.s32 0, %v596
        %v598 = vrot.slane %v593, %v597
        %v599 = vlaneseq
        %v600 = vshrl.u32 %v599, 7
        %v601 = vsub.s32 1, %v600
        %v602 = vrot.slane %v593, %v601
        %v603 = vlaneseq
        %v604 = vshrl.u32 %v603, 7
        %v605 = vsub.s32 2, %v604
        %v606 = vrot.slane %v593, %v605
        %v607 = vlaneseq
        %v608 = vshrl.u32 %v607, 7
        %v609 = vsub.s32 3, %v608
        %v610 = vrot.slane %v593, %v609
        %v611 = vlaneseq
        %v612 = vshrl.u32 %v611, 7
        %v613 = vsub.s32 4, %v612
        %v614 = vrot.slane %v593, %v613
        %vm620 = vcmask 261120
        %v622 = vsel %vm620, %v569, 0
        %v625 = vsel %vm620, %v570, 0
        %v628 = vsel %vm620, %v571, 0
        %v631 = vsel %vm620, %v572, 0
        %633 = vmatprep.subr.mxu0 %v574
        %634 = vmatpush1.msra.mxu0 %v573
        %635 = vmatprep.subr.mxu0 %v579
        %636 = vmatpush1.msra.mxu0 %v578
        %637 = vmatprep.subr.mxu0 %v584
        %638 = vmatpush1.msra.mxu0 %v583
        %639 = vmatprep.subr.mxu0 %v589
        %640 = vmatpush1.msra.mxu0 %v588
        %641 = vmatprep.subr.mxu0 0.0
        %642 = vmatpush1.msra.mxu0 0.0
        %643 = vmatprep.subr.mxu0 0.0
        %644 = vmatpush1.msra.mxu0 0.0
        %645 = vmatprep.subr.mxu0 0.0
        %646 = vmatpush1.msra.mxu0 0.0
        %647 = vmatprep.subr.mxu0 0.0
        %648 = vmatpush1.msra.mxu0 0.0
        %649 = vmatprep.subr.mxu0 0.0
        %650 = vmatpush1.msra.mxu0 0.0
        %651 = vmatprep.subr.mxu0 0.0
        %652 = vmatpush1.msra.mxu0 0.0
        %653 = vmatprep.subr.mxu0 0.0
        %654 = vmatpush1.msra.mxu0 0.0
        %655 = vmatprep.subr.mxu0 0.0
        %656 = vmatpush1.msra.mxu0 0.0
        %657 = vmatprep.subr.mxu0 0.0
        %658 = vmatpush1.msra.mxu0 0.0
        %659 = vmatprep.subr.mxu0 0.0
        %660 = vmatpush1.msra.mxu0 0.0
        %661 = vmatprep.subr.mxu0 0.0
        %662 = vmatpush1.msra.mxu0 0.0
        %663 = vmatprep.subr.mxu0 0.0
        %664 = vmatpush1.msra.mxu0 0.0
        %665 = vmatprep.subr.mxu0 0.0
        %666 = vmatpush1.msra.mxu0 0.0
        %667 = vmatprep.subr.mxu0 0.0
        %668 = vmatpush1.msra.mxu0 0.0
        %669 = vmatprep.subr.mxu0 0.0
        %670 = vmatpush1.msra.mxu0 0.0
        %671 = vmatprep.subr.mxu0 0.0
        %672 = vmatpush1.msra.mxu0 0.0
        %673 = vmatprep.subr.mxu0 0.0
        %674 = vmatpush1.msra.mxu0 0.0
        %675 = vmatprep.subr.mxu0 0.0
        %676 = vmatpush1.msra.mxu0 0.0
        %677 = vmatprep.subr.mxu0 0.0
        %678 = vmatpush1.msra.mxu0 0.0
        %679 = vmatprep.subr.mxu0 0.0
        %680 = vmatpush1.msra.mxu0 0.0
        %681 = vmatprep.subr.mxu0 0.0
        %682 = vmatpush1.msra.mxu0 0.0
        %683 = vmatprep.subr.mxu0 0.0
        %684 = vmatpush1.msra.mxu0 0.0
        %685 = vmatprep.subr.mxu0 0.0
        %686 = vmatpush1.msra.mxu0 0.0
        %687 = vmatprep.subr.mxu0 0.0
        %688 = vmatpush1.msra.mxu0 0.0
        %689 = vmatprep.subr.mxu0 0.0
        %690 = vmatpush1.msra.mxu0 0.0
        %691 = vmatprep.subr.mxu0 0.0
        %692 = vmatpush1.msra.mxu0 0.0
        %693 = vmatprep.subr.mxu0 0.0
        %694 = vmatpush1.msra.mxu0 0.0
        %695 = vmatprep.subr.mxu0 0.0
        %696 = vmatpush1.msra.mxu0 0.0
        %697 = vmatprep.mubr.f32.mxu0 0.0
        %698 = vmatmul.mubr.f32.gmra.mrb[0].mxu0 %v622
        %v699 = vpop.f32.mrb[0].mxu0
        %v700 = vadd.f32 %v598, %v699
        %v701 = vpop.f32.mrb[0].mxu0
        %v702 = vadd.f32 %v602, %v701
        %703 = vmatprep.mubr.f32.mxu0 0.0
        %704 = vmatmul.mubr.f32.gmra.mrb[0].mxu0 %v625
        %v705 = vpop.f32.mrb[0].mxu0
        %v706 = vadd.f32 %v598, %v705
        %v707 = vpop.f32.mrb[0].mxu0
        %v708 = vadd.f32 %v602, %v707
        %709 = vmatprep.mubr.f32.mxu0 0.0
        %710 = vmatmul.mubr.f32.gmra.mrb[0].mxu0 %v628
        %v711 = vpop.f32.mrb[0].mxu0
        %v712 = vadd.f32 %v598, %v711
        %v713 = vpop.f32.mrb[0].mxu0
        %v714 = vadd.f32 %v602, %v713
        %715 = vmatprep.mubr.f32.mxu0 0.0
        %716 = vmatmul.mubr.f32.gmra.mrb[0].mxu0 %v631
        %v717 = vpop.f32.mrb[0].mxu0
        %v718 = vadd.f32 %v598, %v717
        %v719 = vpop.f32.mrb[0].mxu0
        %v720 = vadd.f32 %v602, %v719
        %721 = vdwg.mxu0
        %722 = vmatprep.subr.mxu0 %v576
        %723 = vmatpush1.msra.mxu0 %v575
        %724 = vmatprep.subr.mxu0 %v581
        %725 = vmatpush1.msra.mxu0 %v580
        %726 = vmatprep.subr.mxu0 %v586
        %727 = vmatpush1.msra.mxu0 %v585
        %728 = vmatprep.subr.mxu0 %v591
        %729 = vmatpush1.msra.mxu0 %v590
        %730 = vmatprep.subr.mxu0 0.0
        %731 = vmatpush1.msra.mxu0 0.0
        %732 = vmatprep.subr.mxu0 0.0
        %733 = vmatpush1.msra.mxu0 0.0
        %734 = vmatprep.subr.mxu0 0.0
        %735 = vmatpush1.msra.mxu0 0.0
        %736 = vmatprep.subr.mxu0 0.0
        %737 = vmatpush1.msra.mxu0 0.0
        %738 = vmatprep.subr.mxu0 0.0
        %739 = vmatpush1.msra.mxu0 0.0
        %740 = vmatprep.subr.mxu0 0.0
        %741 = vmatpush1.msra.mxu0 0.0
        %742 = vmatprep.subr.mxu0 0.0
        %743 = vmatpush1.msra.mxu0 0.0
        %744 = vmatprep.subr.mxu0 0.0
        %745 = vmatpush1.msra.mxu0 0.0
        %746 = vmatprep.subr.mxu0 0.0
        %747 = vmatpush1.msra.mxu0 0.0
        %748 = vmatprep.subr.mxu0 0.0
        %749 = vmatpush1.msra.mxu0 0.0
        %750 = vmatprep.subr.mxu0 0.0
        %751 = vmatpush1.msra.mxu0 0.0
        %752 = vmatprep.subr.mxu0 0.0
        %753 = vmatpush1.msra.mxu0 0.0
        %754 = vmatprep.subr.mxu0 0.0
        %755 = vmatpush1.msra.mxu0 0.0
        %756 = vmatprep.subr.mxu0 0.0
        %757 = vmatpush1.msra.mxu0 0.0
        %758 = vmatprep.subr.mxu0 0.0
        %759 = vmatpush1.msra.mxu0 0.0
        %760 = vmatprep.subr.mxu0 0.0
        %761 = vmatpush1.msra.mxu0 0.0
        %762 = vmatprep.subr.mxu0 0.0
        %763 = vmatpush1.msra.mxu0 0.0
        %764 = vmatprep.subr.mxu0 0.0
        %765 = vmatpush1.msra.mxu0 0.0
        %766 = vmatprep.subr.mxu0 0.0
        %767 = vmatpush1.msra.mxu0 0.0
        %768 = vmatprep.subr.mxu0 0.0
        %769 = vmatpush1.msra.mxu0 0.0
        %770 = vmatprep.subr.mxu0 0.0
        %771 = vmatpush1.msra.mxu0 0.0
        %772 = vmatprep.subr.mxu0 0.0
        %773 = vmatpush1.msra.mxu0 0.0
        %774 = vmatprep.subr.mxu0 0.0
        %775 = vmatpush1.msra.mxu0 0.0
        %776 = vmatprep.subr.mxu0 0.0
        %777 = vmatpush1.msra.mxu0 0.0
        %778 = vmatprep.subr.mxu0 0.0
        %779 = vmatpush1.msra.mxu0 0.0
        %780 = vmatprep.subr.mxu0 0.0
        %781 = vmatpush1.msra.mxu0 0.0
        %782 = vmatprep.subr.mxu0 0.0
        %783 = vmatpush1.msra.mxu0 0.0
        %784 = vmatprep.subr.mxu0 0.0
        %785 = vmatpush1.msra.mxu0 0.0
        %786 = vmatprep.mubr.f32.mxu0 0.0
        %787 = vmatmul.mubr.f32.gmra.mrb[0].mxu0 %v622
        %v788 = vpop.f32.mrb[0].mxu0
        %v789 = vadd.f32 %v606, %v788
        %v790 = vpop.f32.mrb[0].mxu0
        %v791 = vadd.f32 %v610, %v790
        %792 = vmatprep.mubr.f32.mxu0 0.0
        %793 = vmatmul.mubr.f32.gmra.mrb[0].mxu0 %v625
        %v794 = vpop.f32.mrb[0].mxu0
        %v795 = vadd.f32 %v606, %v794
        %v796 = vpop.f32.mrb[0].mxu0
        %v797 = vadd.f32 %v610, %v796
        %798 = vmatprep.mubr.f32.mxu0 0.0
        %799 = vmatmul.mubr.f32.gmra.mrb[0].mxu0 %v628
        %v800 = vpop.f32.mrb[0].mxu0
        %v801 = vadd.f32 %v606, %v800
        %v802 = vpop.f32.mrb[0].mxu0
        %v803 = vadd.f32 %v610, %v802
        %804 = vmatprep.mubr.f32.mxu0 0.0
        %805 = vmatmul.mubr.f32.gmra.mrb[0].mxu0 %v631
        %v806 = vpop.f32.mrb[0].mxu0
        %v807 = vadd.f32 %v606, %v806
        %v808 = vpop.f32.mrb[0].mxu0
        %v809 = vadd.f32 %v610, %v808
        %810 = vdwg.mxu0
        %811 = vmatprep.subr.mxu0 0.0
        %812 = vmatpush1.msra.mxu0 %v577
        %813 = vmatprep.subr.mxu0 0.0
        %814 = vmatpush1.msra.mxu0 %v582
        %815 = vmatprep.subr.mxu0 0.0
        %816 = vmatpush1.msra.mxu0 %v587
        %817 = vmatprep.subr.mxu0 0.0
        %818 = vmatpush1.msra.mxu0 %v592
        %819 = vmatprep.subr.mxu0 0.0
        %820 = vmatpush1.msra.mxu0 0.0
        %821 = vmatprep.subr.mxu0 0.0
        %822 = vmatpush1.msra.mxu0 0.0
        %823 = vmatprep.subr.mxu0 0.0
        %824 = vmatpush1.msra.mxu0 0.0
        %825 = vmatprep.subr.mxu0 0.0
        %826 = vmatpush1.msra.mxu0 0.0
        %827 = vmatprep.subr.mxu0 0.0
        %828 = vmatpush1.msra.mxu0 0.0
        %829 = vmatprep.subr.mxu0 0.0
        %830 = vmatpush1.msra.mxu0 0.0
        %831 = vmatprep.subr.mxu0 0.0
        %832 = vmatpush1.msra.mxu0 0.0
        %833 = vmatprep.subr.mxu0 0.0
        %834 = vmatpush1.msra.mxu0 0.0
        %835 = vmatprep.subr.mxu0 0.0
        %836 = vmatpush1.msra.mxu0 0.0
        %837 = vmatprep.subr.mxu0 0.0
        %838 = vmatpush1.msra.mxu0 0.0
        %839 = vmatprep.subr.mxu0 0.0
        %840 = vmatpush1.msra.mxu0 0.0
        %841 = vmatprep.subr.mxu0 0.0
        %842 = vmatpush1.msra.mxu0 0.0
        %843 = vmatprep.subr.mxu0 0.0
        %844 = vmatpush1.msra.mxu0 0.0
        %845 = vmatprep.subr.mxu0 0.0
        %846 = vmatpush1.msra.mxu0 0.0
        %847 = vmatprep.subr.mxu0 0.0
        %848 = vmatpush1.msra.mxu0 0.0
        %849 = vmatprep.subr.mxu0 0.0
        %850 = vmatpush1.msra.mxu0 0.0
        %851 = vmatprep.subr.mxu0 0.0
        %852 = vmatpush1.msra.mxu0 0.0
        %853 = vmatprep.subr.mxu0 0.0
        %854 = vmatpush1.msra.mxu0 0.0
        %855 = vmatprep.subr.mxu0 0.0
        %856 = vmatpush1.msra.mxu0 0.0
        %857 = vmatprep.subr.mxu0 0.0
        %858 = vmatpush1.msra.mxu0 0.0
        %859 = vmatprep.subr.mxu0 0.0
        %860 = vmatpush1.msra.mxu0 0.0
        %861 = vmatprep.subr.mxu0 0.0
        %862 = vmatpush1.msra.mxu0 0.0
        %863 = vmatprep.subr.mxu0 0.0
        %864 = vmatpush1.msra.mxu0 0.0
        %865 = vmatprep.subr.mxu0 0.0
        %866 = vmatpush1.msra.mxu0 0.0
        %867 = vmatprep.subr.mxu0 0.0
        %868 = vmatpush1.msra.mxu0 0.0
        %869 = vmatprep.subr.mxu0 0.0
        %870 = vmatpush1.msra.mxu0 0.0
        %871 = vmatprep.subr.mxu0 0.0
        %872 = vmatpush1.msra.mxu0 0.0
        %873 = vmatprep.subr.mxu0 0.0
        %874 = vmatpush1.msra.mxu0 0.0
        %875 = vmatprep.mubr.f32.mxu0 0.0
        %876 = vmatmul.mubr.f32.gmra.mrb[0].mxu0 %v622
        %v877 = vpop.f32.mrb[0].mxu0
        %v878 = vadd.f32 %v614, %v877
        %v879 = vpop.f32.mrb[0].mxu0
        %880 = vmatprep.mubr.f32.mxu0 0.0
        %881 = vmatmul.mubr.f32.gmra.mrb[0].mxu0 %v625
        %v882 = vpop.f32.mrb[0].mxu0
        %v883 = vadd.f32 %v614, %v882
        %v884 = vpop.f32.mrb[0].mxu0
        %885 = vmatprep.mubr.f32.mxu0 0.0
        %886 = vmatmul.mubr.f32.gmra.mrb[0].mxu0 %v628
        %v887 = vpop.f32.mrb[0].mxu0
        %v888 = vadd.f32 %v614, %v887
        %v889 = vpop.f32.mrb[0].mxu0
        %890 = vmatprep.mubr.f32.mxu0 0.0
        %891 = vmatmul.mubr.f32.gmra.mrb[0].mxu0 %v631
        %v892 = vpop.f32.mrb[0].mxu0
        %v893 = vadd.f32 %v614, %v892
        %v894 = vpop.f32.mrb[0].mxu0
        %895 = vdwg.mxu0
        %v896 = vmax.f32 %v700, 0.0
        %v897 = vmax.f32 %v702, 0.0
        %v898 = vmax.f32 %v706, 0.0
        %v899 = vmax.f32 %v708, 0.0
        %v900 = vmax.f32 %v712, 0.0
        %v901 = vmax.f32 %v714, 0.0
        %v902 = vmax.f32 %v718, 0.0
        %v903 = vmax.f32 %v720, 0.0
        %v904 = vld [vmem:[%s3] sm:$0xff]
        %v905 = vld [vmem:[%s3 + $0x8] sm:$0xff]
        %v906 = vld [vmem:[%s3 + $0x10] sm:$0xff]
        %v907 = vld [vmem:[%s3 + $0x18] sm:$0xff]
        %v908 = vld [vmem:[%s3 + $0x20] sm:$0xff]
        %v909 = vld [vmem:[%s3 + $0x28] sm:$0xff]
        %v910 = vld [vmem:[%s3 + $0x30] sm:$0xff]
        %v911 = vld [vmem:[%s3 + $0x38] sm:$0xff]
        %v912 = vld [vmem:[%s3 + $0x40] sm:$0xff]
        %v913 = vld [vmem:[%s3 + $0x48] sm:$0xff]
        %v914 = vld [vmem:[%s3 + $0x50] sm:$0xff]
        %v915 = vld [vmem:[%s3 + $0x58] sm:$0xff]
        %v916 = vld [vmem:[%s3 + $0x60] sm:$0xff]
        %v917 = vld [vmem:[%s3 + $0x68] sm:$0xff]
        %v918 = vld [vmem:[%s3 + $0x70] sm:$0xff]
        %v919 = vld [vmem:[%s3 + $0x78] sm:$0xff]
        %v920 = vld [vmem:[%s3 + $0x80] sm:$0xff]
        %v921 = vld [vmem:[%s3 + $0x88] sm:$0xff]
        %v922 = vld [vmem:[%s3 + $0x90] sm:$0xff]
        %v923 = vld [vmem:[%s3 + $0x98] sm:$0xff]
        %v924 = vld [vmem:[%s3 + $0xa0] sm:$0xff]
        %v925 = vld [vmem:[%s3 + $0xa8] sm:$0xff]
        %v926 = vld [vmem:[%s3 + $0xb0] sm:$0xff]
        %v927 = vld [vmem:[%s3 + $0xb8] sm:$0xff]
        %v928 = vld [vmem:[%s3 + $0xc0] sm:$0xff]
        %v929 = vld [vmem:[%s3 + $0xc8] sm:$0xff]
        %v930 = vld [vmem:[%s3 + $0xd0] sm:$0xff]
        %v931 = vld [vmem:[%s3 + $0xd8] sm:$0xff]
        %v932 = vld [vmem:[%s3 + $0xe0] sm:$0xff]
        %v933 = vld [vmem:[%s3 + $0xe8] sm:$0xff]
        %v934 = vld [vmem:[%s3 + $0xf0] sm:$0xff]
        %v935 = vld [vmem:[%s3 + $0xf8] sm:$0xff]
        %v936 = vld [vmem:[%s4] sm:$0x1]
        %v938 = vlaneseq
        %v939 = vshrl.u32 %v938, 7
        %v940 = vsub.s32 0, %v939
        %v941 = vrot.slane %v936, %v940
        %943 = vmatprep.subr.mxu0 0.0
        %944 = vmatpush1.msra.mxu0 %v904
        %945 = vmatprep.subr.mxu0 0.0
        %946 = vmatpush1.msra.mxu0 %v905
        %947 = vmatprep.subr.mxu0 0.0
        %948 = vmatpush1.msra.mxu0 %v906
        %949 = vmatprep.subr.mxu0 0.0
        %950 = vmatpush1.msra.mxu0 %v907
        %951 = vmatprep.subr.mxu0 0.0
        %952 = vmatpush1.msra.mxu0 %v908
        %953 = vmatprep.subr.mxu0 0.0
        %954 = vmatpush1.msra.mxu0 %v909
        %955 = vmatprep.subr.mxu0 0.0
        %956 = vmatpush1.msra.mxu0 %v910
        %957 = vmatprep.subr.mxu0 0.0
        %958 = vmatpush1.msra.mxu0 %v911
        %959 = vmatprep.subr.mxu0 0.0
        %960 = vmatpush1.msra.mxu0 %v912
        %961 = vmatprep.subr.mxu0 0.0
        %962 = vmatpush1.msra.mxu0 %v913
        %963 = vmatprep.subr.mxu0 0.0
        %964 = vmatpush1.msra.mxu0 %v914
        %965 = vmatprep.subr.mxu0 0.0
        %966 = vmatpush1.msra.mxu0 %v915
        %967 = vmatprep.subr.mxu0 0.0
        %968 = vmatpush1.msra.mxu0 %v916
        %969 = vmatprep.subr.mxu0 0.0
        %970 = vmatpush1.msra.mxu0 %v917
        %971 = vmatprep.subr.mxu0 0.0
        %972 = vmatpush1.msra.mxu0 %v918
        %973 = vmatprep.subr.mxu0 0.0
        %974 = vmatpush1.msra.mxu0 %v919
        %975 = vmatprep.subr.mxu0 0.0
        %976 = vmatpush1.msra.mxu0 %v920
        %977 = vmatprep.subr.mxu0 0.0
        %978 = vmatpush1.msra.mxu0 %v921
        %979 = vmatprep.subr.mxu0 0.0
        %980 = vmatpush1.msra.mxu0 %v922
        %981 = vmatprep.subr.mxu0 0.0
        %982 = vmatpush1.msra.mxu0 %v923
        %983 = vmatprep.subr.mxu0 0.0
        %984 = vmatpush1.msra.mxu0 %v924
        %985 = vmatprep.subr.mxu0 0.0
        %986 = vmatpush1.msra.mxu0 %v925
        %987 = vmatprep.subr.mxu0 0.0
        %988 = vmatpush1.msra.mxu0 %v926
        %989 = vmatprep.subr.mxu0 0.0
        %990 = vmatpush1.msra.mxu0 %v927
        %991 = vmatprep.subr.mxu0 0.0
        %992 = vmatpush1.msra.mxu0 %v928
        %993 = vmatprep.subr.mxu0 0.0
        %994 = vmatpush1.msra.mxu0 %v929
        %995 = vmatprep.subr.mxu0 0.0
        %996 = vmatpush1.msra.mxu0 %v930
        %997 = vmatprep.subr.mxu0 0.0
        %998 = vmatpush1.msra.mxu0 %v931
        %999 = vmatprep.subr.mxu0 0.0
        %1000 = vmatpush1.msra.mxu0 %v932
        %1001 = vmatprep.subr.mxu0 0.0
        %1002 = vmatpush1.msra.mxu0 %v933
        %1003 = vmatprep.subr.mxu0 0.0
        %1004 = vmatpush1.msra.mxu0 %v934
        %1005 = vmatprep.subr.mxu0 0.0
        %1006 = vmatpush1.msra.mxu0 %v935
        %1007 = vmatprep.mubr.f32.mxu0 %v897
        %1008 = vmatmul.mubr.f32.gmra.mrb[0].mxu0 %v896
        %v1009 = vpop.f32.mrb[0].mxu0
        %v1010 = vadd.f32 %v941, %v1009
        %v1011 = vpop.f32.mrb[0].mxu0
        %1012 = vmatprep.mubr.f32.mxu0 %v899
        %1013 = vmatmul.mubr.f32.gmra.mrb[0].mxu0 %v898
        %v1014 = vpop.f32.mrb[0].mxu0
        %v1015 = vadd.f32 %v941, %v1014
        %v1016 = vpop.f32.mrb[0].mxu0
        %1017 = vmatprep.mubr.f32.mxu0 %v901
        %1018 = vmatmul.mubr.f32.gmra.mrb[0].mxu0 %v900
        %v1019 = vpop.f32.mrb[0].mxu0
        %v1020 = vadd.f32 %v941, %v1019
        %v1021 = vpop.f32.mrb[0].mxu0
        %1022 = vmatprep.mubr.f32.mxu0 %v903
        %1023 = vmatmul.mubr.f32.gmra.mrb[0].mxu0 %v902
        %v1024 = vpop.f32.mrb[0].mxu0
        %v1025 = vadd.f32 %v941, %v1024
        %v1026 = vpop.f32.mrb[0].mxu0
        %1027 = vdwg.mxu0
        %v1028 = vmax.f32 %v1010, 0.0
        %v1029 = vmax.f32 %v1015, 0.0
        %v1030 = vmax.f32 %v1020, 0.0
        %v1031 = vmax.f32 %v1025, 0.0
        %1032 = vmax.xlane.f32.xlu0 %v789
        %v1033 = vpop.xlane.xlu0 %1032
        %1034 = vmax.xlane.f32.xlu0 %v795
        %v1035 = vpop.xlane.xlu0 %1034
        %1036 = vmax.xlane.f32.xlu0 %v801
        %v1037 = vpop.xlane.xlu0 %1036
        %1038 = vmax.xlane.f32.xlu0 %v807
        %v1039 = vpop.xlane.xlu0 %1038
        %v1040 = vsub.f32 %v789, %v1033
        %v1041 = vsub.f32 %v795, %v1035
        %v1042 = vsub.f32 %v801, %v1037
        %v1043 = vsub.f32 %v807, %v1039
        %v1044 = vmul.f32 %v1040, 1.442695
        %v1045 = vpow.pop %v1044
        %v1046 = vmul.f32 %v1041, 1.442695
        %v1047 = vpow.pop %v1046
        %v1048 = vmul.f32 %v1042, 1.442695
        %v1049 = vpow.pop %v1048
        %v1050 = vmul.f32 %v1043, 1.442695
        %v1051 = vpow.pop %v1050
        %1052 = vadd.xlane.f32.xlu0 %v1045
        %v1053 = vpop.xlane.xlu0 %1052
        %1054 = vadd.xlane.f32.xlu0 %v1047
        %v1055 = vpop.xlane.xlu0 %1054
        %1056 = vadd.xlane.f32.xlu0 %v1049
        %v1057 = vpop.xlane.xlu0 %1056
        %1058 = vadd.xlane.f32.xlu0 %v1051
        %v1059 = vpop.xlane.xlu0 %1058
        %v1060 = vrcp.pop %v1053
        %v1061 = vrcp.pop %v1055
        %v1062 = vrcp.pop %v1057
        %v1063 = vrcp.pop %v1059
        %v1064 = vmul.f32 %v1045, %v1060
        %v1065 = vmul.f32 %v1047, %v1061
        %v1066 = vmul.f32 %v1049, %v1062
        %v1067 = vmul.f32 %v1051, %v1063
        %1068 = vmax.xlane.f32.xlu0 %v791
        %v1069 = vpop.xlane.xlu0 %1068
        %1070 = vmax.xlane.f32.xlu0 %v797
        %v1071 = vpop.xlane.xlu0 %1070
        %1072 = vmax.xlane.f32.xlu0 %v803
        %v1073 = vpop.xlane.xlu0 %1072
        %1074 = vmax.xlane.f32.xlu0 %v809
        %v1075 = vpop.xlane.xlu0 %1074
        %v1076 = vsub.f32 %v791, %v1069
        %v1077 = vsub.f32 %v797, %v1071
        %v1078 = vsub.f32 %v803, %v1073
        %v1079 = vsub.f32 %v809, %v1075
        %v1080 = vmul.f32 %v1076, 1.442695
        %v1081 = vpow.pop %v1080
        %v1082 = vmul.f32 %v1077, 1.442695
        %v1083 = vpow.pop %v1082
        %v1084 = vmul.f32 %v1078, 1.442695
        %v1085 = vpow.pop %v1084
        %v1086 = vmul.f32 %v1079, 1.442695
        %v1087 = vpow.pop %v1086
        %1088 = vadd.xlane.f32.xlu0 %v1081
        %v1089 = vpop.xlane.xlu0 %1088
        %1090 = vadd.xlane.f32.xlu0 %v1083
        %v1091 = vpop.xlane.xlu0 %1090
        %1092 = vadd.xlane.f32.xlu0 %v1085
        %v1093 = vpop.xlane.xlu0 %1092
        %1094 = vadd.xlane.f32.xlu0 %v1087
        %v1095 = vpop.xlane.xlu0 %1094
        %v1096 = vrcp.pop %v1089
        %v1097 = vrcp.pop %v1091
        %v1098 = vrcp.pop %v1093
        %v1099 = vrcp.pop %v1095
        %v1100 = vmul.f32 %v1081, %v1096
        %v1101 = vmul.f32 %v1083, %v1097
        %v1102 = vmul.f32 %v1085, %v1098
        %v1103 = vmul.f32 %v1087, %v1099
        %1104 = vmax.xlane.f32.xlu0 %v878
        %v1105 = vpop.xlane.xlu0 %1104
        %1106 = vmax.xlane.f32.xlu0 %v883
        %v1107 = vpop.xlane.xlu0 %1106
        %1108 = vmax.xlane.f32.xlu0 %v888
        %v1109 = vpop.xlane.xlu0 %1108
        %1110 = vmax.xlane.f32.xlu0 %v893
        %v1111 = vpop.xlane.xlu0 %1110
        %v1112 = vsub.f32 %v878, %v1105
        %v1113 = vsub.f32 %v883, %v1107
        %v1114 = vsub.f32 %v888, %v1109
        %v1115 = vsub.f32 %v893, %v1111
        %v1116 = vmul.f32 %v1112, 1.442695
        %v1117 = vpow.pop %v1116
        %v1118 = vmul.f32 %v1113, 1.442695
        %v1119 = vpow.pop %v1118
        %v1120 = vmul.f32 %v1114, 1.442695
        %v1121 = vpow.pop %v1120
        %v1122 = vmul.f32 %v1115, 1.442695
        %v1123 = vpow.pop %v1122
        %1124 = vadd.xlane.f32.xlu0 %v1117
        %v1125 = vpop.xlane.xlu0 %1124
        %1126 = vadd.xlane.f32.xlu0 %v1119
        %v1127 = vpop.xlane.xlu0 %1126
        %1128 = vadd.xlane.f32.xlu0 %v1121
        %v1129 = vpop.xlane.xlu0 %1128
        %1130 = vadd.xlane.f32.xlu0 %v1123
        %v1131 = vpop.xlane.xlu0 %1130
        %v1132 = vrcp.pop %v1125
        %v1133 = vrcp.pop %v1127
        %v1134 = vrcp.pop %v1129
        %v1135 = vrcp.pop %v1131
        %v1136 = vmul.f32 %v1117, %v1132
        %v1137 = vmul.f32 %v1119, %v1133
        %v1138 = vmul.f32 %v1121, %v1134
        %v1139 = vmul.f32 %v1123, %v1135
        %v1140 = vld [vmem:[#allocation5] sm:$0xff]
        %v1141 = vld [vmem:[#allocation5 + $0x8] sm:$0xff]
        %v1142 = vld [vmem:[#allocation5 + $0x10] sm:$0xff]
        %v1143 = vld [vmem:[#allocation5 + $0x18] sm:$0xff]
        %v1144 = vld [vmem:[#allocation5 + $0x20] sm:$0xff]
        %v1145 = vld [vmem:[#allocation5 + $0x28] sm:$0xff]
        %v1146 = vld [vmem:[#allocation5 + $0x30] sm:$0xff]
        %v1147 = vld [vmem:[#allocation5 + $0x38] sm:$0xff]
        %v1148 = vld [vmem:[#allocation5 + $0x40] sm:$0xff]
        %v1149 = vld [vmem:[#allocation5 + $0x48] sm:$0xff]
        %v1150 = vld [vmem:[#allocation5 + $0x50] sm:$0xff]
        %v1151 = vld [vmem:[#allocation5 + $0x58] sm:$0xff]
        %v1152 = vld [vmem:[#allocation5 + $0x60] sm:$0xff]
        %v1153 = vld [vmem:[#allocation5 + $0x68] sm:$0xff]
        %v1154 = vld [vmem:[#allocation5 + $0x70] sm:$0xff]
        %v1155 = vld [vmem:[#allocation5 + $0x78] sm:$0xff]
        %v1156 = vld [vmem:[#allocation5 + $0x80] sm:$0xff]
        %v1157 = vld [vmem:[#allocation5 + $0x88] sm:$0xff]
        %v1158 = vld [vmem:[#allocation5 + $0x90] sm:$0xff]
        %v1159 = vld [vmem:[#allocation5 + $0x98] sm:$0xff]
        %v1160 = vld [vmem:[#allocation5 + $0xa0] sm:$0xff]
        %v1161 = vld [vmem:[#allocation5 + $0xa8] sm:$0xff]
        %v1162 = vld [vmem:[#allocation5 + $0xb0] sm:$0xff]
        %v1163 = vld [vmem:[#allocation5 + $0xb8] sm:$0xff]
        %v1164 = vld [vmem:[#allocation5 + $0xc0] sm:$0xff]
        %v1165 = vld [vmem:[#allocation5 + $0xc8] sm:$0xff]
        %v1166 = vld [vmem:[#allocation5 + $0xd0] sm:$0xff]
        %v1167 = vld [vmem:[#allocation5 + $0xd8] sm:$0xff]
        %v1168 = vld [vmem:[#allocation5 + $0xe0] sm:$0xff]
        %v1169 = vld [vmem:[#allocation5 + $0xe8] sm:$0xff]
        %v1170 = vld [vmem:[#allocation5 + $0xf0] sm:$0xff]
        %v1171 = vld [vmem:[#allocation5 + $0xf8] sm:$0xff]
        %v1172 = vld [vmem:[#allocation5 + $0x100] sm:$0xff]
        %v1173 = vld [vmem:[#allocation5 + $0x108] sm:$0xff]
        %v1174 = vld [vmem:[#allocation5 + $0x110] sm:$0xff]
        %v1175 = vld [vmem:[#allocation5 + $0x118] sm:$0xff]
        %v1176 = vld [vmem:[#allocation5 + $0x120] sm:$0xff]
        %v1177 = vld [vmem:[#allocation5 + $0x128] sm:$0xff]
        %v1178 = vld [vmem:[#allocation5 + $0x130] sm:$0xff]
        %v1179 = vld [vmem:[#allocation5 + $0x138] sm:$0xff]
        %v1180 = vld [vmem:[#allocation5 + $0x140] sm:$0xff]
        %v1181 = vld [vmem:[#allocation5 + $0x148] sm:$0xff]
        %v1182 = vld [vmem:[#allocation5 + $0x150] sm:$0xff]
        %v1183 = vld [vmem:[#allocation5 + $0x158] sm:$0xff]
        %v1184 = vld [vmem:[#allocation5 + $0x160] sm:$0xff]
        %v1185 = vld [vmem:[#allocation5 + $0x168] sm:$0xff]
        %v1186 = vld [vmem:[#allocation5 + $0x170] sm:$0xff]
        %v1187 = vld [vmem:[#allocation5 + $0x178] sm:$0xff]
        %v1188 = vld [vmem:[#allocation5 + $0x180] sm:$0xff]
        %v1189 = vld [vmem:[#allocation5 + $0x188] sm:$0xff]
        %v1190 = vld [vmem:[#allocation5 + $0x190] sm:$0xff]
        %v1191 = vld [vmem:[#allocation5 + $0x198] sm:$0xff]
        %v1192 = vld [vmem:[#allocation5 + $0x1a0] sm:$0xff]
        %v1193 = vld [vmem:[#allocation5 + $0x1a8] sm:$0xff]
        %v1194 = vld [vmem:[#allocation5 + $0x1b0] sm:$0xff]
        %v1195 = vld [vmem:[#allocation5 + $0x1b8] sm:$0xff]
        %v1196 = vld [vmem:[#allocation5 + $0x1c0] sm:$0xff]
        %v1197 = vld [vmem:[#allocation5 + $0x1c8] sm:$0xff]
        %v1198 = vld [vmem:[#allocation5 + $0x1d0] sm:$0xff]
        %v1199 = vld [vmem:[#allocation5 + $0x1d8] sm:$0xff]
        %v1200 = vld [vmem:[#allocation5 + $0x1e0] sm:$0xff]
        %v1201 = vld [vmem:[#allocation5 + $0x1e8] sm:$0xff]
        %v1202 = vld [vmem:[#allocation5 + $0x1f0] sm:$0xff]
        %v1203 = vld [vmem:[#allocation5 + $0x1f8] sm:$0xff]
        %v1204 = vld [vmem:[#allocation5 + $0x200] sm:$0xff]
        %v1205 = vld [vmem:[#allocation5 + $0x208] sm:$0xff]
        %v1206 = vld [vmem:[#allocation5 + $0x210] sm:$0xff]
        %v1207 = vld [vmem:[#allocation5 + $0x218] sm:$0xff]
        %v1208 = vld [vmem:[#allocation5 + $0x220] sm:$0xff]
        %v1209 = vld [vmem:[#allocation5 + $0x228] sm:$0xff]
        %v1210 = vld [vmem:[#allocation5 + $0x230] sm:$0xff]
        %v1211 = vld [vmem:[#allocation5 + $0x238] sm:$0xff]
        %v1212 = vld [vmem:[#allocation5 + $0x240] sm:$0xff]
        %v1213 = vld [vmem:[#allocation5 + $0x248] sm:$0xff]
        %v1214 = vld [vmem:[#allocation5 + $0x250] sm:$0xff]
        %v1215 = vld [vmem:[#allocation5 + $0x258] sm:$0xff]
        %v1216 = vld [vmem:[#allocation5 + $0x260] sm:$0xff]
        %v1217 = vld [vmem:[#allocation5 + $0x268] sm:$0xff]
        %v1218 = vld [vmem:[#allocation5 + $0x270] sm:$0xff]
        %v1219 = vld [vmem:[#allocation5 + $0x278] sm:$0xff]
        %v1220 = vld [vmem:[#allocation5 + $0x280] sm:$0xff]
        %v1221 = vld [vmem:[#allocation5 + $0x288] sm:$0xff]
        %v1222 = vld [vmem:[#allocation5 + $0x290] sm:$0xff]
        %v1223 = vld [vmem:[#allocation5 + $0x298] sm:$0xff]
        %v1224 = vld [vmem:[#allocation5 + $0x2a0] sm:$0xff]
        %v1225 = vld [vmem:[#allocation5 + $0x2a8] sm:$0xff]
        %v1226 = vld [vmem:[#allocation5 + $0x2b0] sm:$0xff]
        %v1227 = vld [vmem:[#allocation5 + $0x2b8] sm:$0xff]
        %v1228 = vld [vmem:[#allocation5 + $0x2c0] sm:$0xff]
        %v1229 = vld [vmem:[#allocation5 + $0x2c8] sm:$0xff]
        %v1230 = vld [vmem:[#allocation5 + $0x2d0] sm:$0xff]
        %v1231 = vld [vmem:[#allocation5 + $0x2d8] sm:$0xff]
        %v1232 = vld [vmem:[#allocation5 + $0x2e0] sm:$0xff]
        %v1233 = vld [vmem:[#allocation5 + $0x2e8] sm:$0xff]
        %v1234 = vld [vmem:[#allocation5 + $0x2f0] sm:$0xff]
        %v1235 = vld [vmem:[#allocation5 + $0x2f8] sm:$0xff]
        %v1236 = vld [vmem:[#allocation5 + $0x300] sm:$0xff]
        %v1237 = vld [vmem:[#allocation5 + $0x308] sm:$0xff]
        %v1238 = vld [vmem:[#allocation5 + $0x310] sm:$0xff]
        %v1239 = vld [vmem:[#allocation5 + $0x318] sm:$0xff]
        %v1240 = vld [vmem:[#allocation5 + $0x320] sm:$0xff]
        %v1241 = vld [vmem:[#allocation5 + $0x328] sm:$0xff]
        %v1242 = vld [vmem:[#allocation5 + $0x330] sm:$0xff]
        %v1243 = vld [vmem:[#allocation5 + $0x338] sm:$0xff]
        %v1244 = vld [vmem:[#allocation5 + $0x340] sm:$0xff]
        %v1245 = vld [vmem:[#allocation5 + $0x348] sm:$0xff]
        %v1246 = vld [vmem:[#allocation5 + $0x350] sm:$0xff]
        %v1247 = vld [vmem:[#allocation5 + $0x358] sm:$0xff]
        %v1248 = vld [vmem:[#allocation5 + $0x360] sm:$0xff]
        %v1249 = vld [vmem:[#allocation5 + $0x368] sm:$0xff]
        %v1250 = vld [vmem:[#allocation5 + $0x370] sm:$0xff]
        %v1251 = vld [vmem:[#allocation5 + $0x378] sm:$0xff]
        %v1252 = vld [vmem:[#allocation5 + $0x380] sm:$0xff]
        %v1253 = vld [vmem:[#allocation5 + $0x388] sm:$0xff]
        %v1254 = vld [vmem:[#allocation5 + $0x390] sm:$0xff]
        %v1255 = vld [vmem:[#allocation5 + $0x398] sm:$0xff]
        %v1256 = vld [vmem:[#allocation5 + $0x3a0] sm:$0xff]
        %v1257 = vld [vmem:[#allocation5 + $0x3a8] sm:$0xff]
        %v1258 = vld [vmem:[#allocation5 + $0x3b0] sm:$0xff]
        %v1259 = vld [vmem:[#allocation5 + $0x3b8] sm:$0xff]
        %v1260 = vld [vmem:[#allocation5 + $0x3c0] sm:$0xff]
        %v1261 = vld [vmem:[#allocation5 + $0x3c8] sm:$0xff]
        %v1262 = vld [vmem:[#allocation5 + $0x3d0] sm:$0xff]
        %v1263 = vld [vmem:[#allocation5 + $0x3d8] sm:$0xff]
        %v1264 = vld [vmem:[#allocation5 + $0x3e0] sm:$0xff]
        %v1265 = vld [vmem:[#allocation5 + $0x3e8] sm:$0xff]
        %v1266 = vld [vmem:[#allocation5 + $0x3f0] sm:$0xff]
        %v1267 = vld [vmem:[#allocation5 + $0x3f8] sm:$0xff]
        %v1268 = vld [vmem:[#allocation5 + $0x400] sm:$0xff]
        %v1269 = vld [vmem:[#allocation5 + $0x408] sm:$0xff]
        %v1270 = vld [vmem:[#allocation5 + $0x410] sm:$0xff]
        %v1271 = vld [vmem:[#allocation5 + $0x418] sm:$0xff]
        %v1272 = vld [vmem:[#allocation5 + $0x420] sm:$0xff]
        %v1273 = vld [vmem:[#allocation5 + $0x428] sm:$0xff]
        %v1274 = vld [vmem:[#allocation5 + $0x430] sm:$0xff]
        %v1275 = vld [vmem:[#allocation5 + $0x438] sm:$0xff]
        %v1276 = vld [vmem:[#allocation5 + $0x440] sm:$0xff]
        %v1277 = vld [vmem:[#allocation5 + $0x448] sm:$0xff]
        %v1278 = vld [vmem:[#allocation5 + $0x450] sm:$0xff]
        %v1279 = vld [vmem:[#allocation5 + $0x458] sm:$0xff]
        %v1280 = vld [vmem:[#allocation5 + $0x460] sm:$0xff]
        %v1281 = vld [vmem:[#allocation5 + $0x468] sm:$0xff]
        %v1282 = vld [vmem:[#allocation5 + $0x470] sm:$0xff]
        %v1283 = vld [vmem:[#allocation5 + $0x478] sm:$0xff]
        %1284 = vmatprep.subr.mxu0 %v1141
        %1285 = vmatpush1.msra.mxu0 %v1140
        %1286 = vmatprep.subr.mxu0 %v1144
        %1287 = vmatpush1.msra.mxu0 %v1143
        %1288 = vmatprep.subr.mxu0 %v1147
        %1289 = vmatpush1.msra.mxu0 %v1146
        %1290 = vmatprep.subr.mxu0 %v1150
        %1291 = vmatpush1.msra.mxu0 %v1149
        %1292 = vmatprep.subr.mxu0 %v1153
        %1293 = vmatpush1.msra.mxu0 %v1152
        %1294 = vmatprep.subr.mxu0 %v1156
        %1295 = vmatpush1.msra.mxu0 %v1155
        %1296 = vmatprep.subr.mxu0 %v1159
        %1297 = vmatpush1.msra.mxu0 %v1158
        %1298 = vmatprep.subr.mxu0 %v1162
        %1299 = vmatpush1.msra.mxu0 %v1161
        %1300 = vmatprep.subr.mxu0 %v1165
        %1301 = vmatpush1.msra.mxu0 %v1164
        %1302 = vmatprep.subr.mxu0 %v1168
        %1303 = vmatpush1.msra.mxu0 %v1167
        %1304 = vmatprep.subr.mxu0 %v1171
        %1305 = vmatpush1.msra.mxu0 %v1170
        %1306 = vmatprep.subr.mxu0 %v1174
        %1307 = vmatpush1.msra.mxu0 %v1173
        %1308 = vmatprep.subr.mxu0 %v1177
        %1309 = vmatpush1.msra.mxu0 %v1176
        %1310 = vmatprep.subr.mxu0 %v1180
        %1311 = vmatpush1.msra.mxu0 %v1179
        %1312 = vmatprep.subr.mxu0 %v1183
        %1313 = vmatpush1.msra.mxu0 %v1182
        %1314 = vmatprep.subr.mxu0 %v1186
        %1315 = vmatpush1.msra.mxu0 %v1185
        %1316 = vmatprep.subr.mxu0 %v1189
        %1317 = vmatpush1.msra.mxu0 %v1188
        %1318 = vmatprep.subr.mxu0 %v1192
        %1319 = vmatpush1.msra.mxu0 %v1191
        %1320 = vmatprep.subr.mxu0 %v1195
        %1321 = vmatpush1.msra.mxu0 %v1194
        %1322 = vmatprep.subr.mxu0 %v1198
        %1323 = vmatpush1.msra.mxu0 %v1197
        %1324 = vmatprep.subr.mxu0 %v1201
        %1325 = vmatpush1.msra.mxu0 %v1200
        %1326 = vmatprep.subr.mxu0 %v1204
        %1327 = vmatpush1.msra.mxu0 %v1203
        %1328 = vmatprep.subr.mxu0 %v1207
        %1329 = vmatpush1.msra.mxu0 %v1206
        %1330 = vmatprep.subr.mxu0 %v1210
        %1331 = vmatpush1.msra.mxu0 %v1209
        %1332 = vmatprep.subr.mxu0 %v1213
        %1333 = vmatpush1.msra.mxu0 %v1212
        %1334 = vmatprep.subr.mxu0 %v1216
        %1335 = vmatpush1.msra.mxu0 %v1215
        %1336 = vmatprep.subr.mxu0 %v1219
        %1337 = vmatpush1.msra.mxu0 %v1218
        %1338 = vmatprep.subr.mxu0 %v1222
        %1339 = vmatpush1.msra.mxu0 %v1221
        %1340 = vmatprep.subr.mxu0 %v1225
        %1341 = vmatpush1.msra.mxu0 %v1224
        %1342 = vmatprep.subr.mxu0 %v1228
        %1343 = vmatpush1.msra.mxu0 %v1227
        %1344 = vmatprep.subr.mxu0 %v1231
        %1345 = vmatpush1.msra.mxu0 %v1230
        %1346 = vmatprep.subr.mxu0 %v1234
        %1347 = vmatpush1.msra.mxu0 %v1233
        %1348 = vmatprep.mubr.f32.mxu0 %v1100
        %1349 = vmatmul.mubr.f32.gmra.mrb[0].mxu0 %v1064
        %v1350 = vpop.f32.mrb[0].mxu0
        %v1351 = vadd.f32 0.0, %v1350
        %v1352 = vpop.f32.mrb[0].mxu0
        %v1353 = vadd.f32 0.0, %v1352
        %1354 = vmatprep.mubr.f32.mxu0 %v1101
        %1355 = vmatmul.mubr.f32.gmra.mrb[0].mxu0 %v1065
        %v1356 = vpop.f32.mrb[0].mxu0
        %v1357 = vadd.f32 0.0, %v1356
        %v1358 = vpop.f32.mrb[0].mxu0
        %v1359 = vadd.f32 0.0, %v1358
        %1360 = vmatprep.mubr.f32.mxu0 %v1102
        %1361 = vmatmul.mubr.f32.gmra.mrb[0].mxu0 %v1066
        %v1362 = vpop.f32.mrb[0].mxu0
        %v1363 = vadd.f32 0.0, %v1362
        %v1364 = vpop.f32.mrb[0].mxu0
        %v1365 = vadd.f32 0.0, %v1364
        %1366 = vmatprep.mubr.f32.mxu0 %v1103
        %1367 = vmatmul.mubr.f32.gmra.mrb[0].mxu0 %v1067
        %v1368 = vpop.f32.mrb[0].mxu0
        %v1369 = vadd.f32 0.0, %v1368
        %v1370 = vpop.f32.mrb[0].mxu0
        %v1371 = vadd.f32 0.0, %v1370
        %1372 = vdwg.mxu0
        %1373 = vmatprep.subr.mxu0 %v1237
        %1374 = vmatpush1.msra.mxu0 %v1236
        %1375 = vmatprep.subr.mxu0 %v1240
        %1376 = vmatpush1.msra.mxu0 %v1239
        %1377 = vmatprep.subr.mxu0 %v1243
        %1378 = vmatpush1.msra.mxu0 %v1242
        %1379 = vmatprep.subr.mxu0 %v1246
        %1380 = vmatpush1.msra.mxu0 %v1245
        %1381 = vmatprep.subr.mxu0 %v1249
        %1382 = vmatpush1.msra.mxu0 %v1248
        %1383 = vmatprep.subr.mxu0 %v1252
        %1384 = vmatpush1.msra.mxu0 %v1251
        %1385 = vmatprep.subr.mxu0 %v1255
        %1386 = vmatpush1.msra.mxu0 %v1254
        %1387 = vmatprep.subr.mxu0 %v1258
        %1388 = vmatpush1.msra.mxu0 %v1257
        %1389 = vmatprep.subr.mxu0 %v1261
        %1390 = vmatpush1.msra.mxu0 %v1260
        %1391 = vmatprep.subr.mxu0 %v1264
        %1392 = vmatpush1.msra.mxu0 %v1263
        %1393 = vmatprep.subr.mxu0 %v1267
        %1394 = vmatpush1.msra.mxu0 %v1266
        %1395 = vmatprep.subr.mxu0 %v1270
        %1396 = vmatpush1.msra.mxu0 %v1269
        %1397 = vmatprep.subr.mxu0 %v1273
        %1398 = vmatpush1.msra.mxu0 %v1272
        %1399 = vmatprep.subr.mxu0 %v1276
        %1400 = vmatpush1.msra.mxu0 %v1275
        %1401 = vmatprep.subr.mxu0 %v1279
        %1402 = vmatpush1.msra.mxu0 %v1278
        %1403 = vmatprep.subr.mxu0 %v1282
        %1404 = vmatpush1.msra.mxu0 %v1281
        %1405 = vmatprep.subr.mxu0 0.0
        %1406 = vmatpush1.msra.mxu0 0.0
        %1407 = vmatprep.subr.mxu0 0.0
        %1408 = vmatpush1.msra.mxu0 0.0
        %1409 = vmatprep.subr.mxu0 0.0
        %1410 = vmatpush1.msra.mxu0 0.0
        %1411 = vmatprep.subr.mxu0 0.0
        %1412 = vmatpush1.msra.mxu0 0.0
        %1413 = vmatprep.subr.mxu0 0.0
        %1414 = vmatpush1.msra.mxu0 0.0
        %1415 = vmatprep.subr.mxu0 0.0
        %1416 = vmatpush1.msra.mxu0 0.0
        %1417 = vmatprep.subr.mxu0 0.0
        %1418 = vmatpush1.msra.mxu0 0.0
        %1419 = vmatprep.subr.mxu0 0.0
        %1420 = vmatpush1.msra.mxu0 0.0
        %1421 = vmatprep.subr.mxu0 0.0
        %1422 = vmatpush1.msra.mxu0 0.0
        %1423 = vmatprep.subr.mxu0 0.0
        %1424 = vmatpush1.msra.mxu0 0.0
        %1425 = vmatprep.subr.mxu0 0.0
        %1426 = vmatpush1.msra.mxu0 0.0
        %1427 = vmatprep.subr.mxu0 0.0
        %1428 = vmatpush1.msra.mxu0 0.0
        %1429 = vmatprep.subr.mxu0 0.0
        %1430 = vmatpush1.msra.mxu0 0.0
        %1431 = vmatprep.subr.mxu0 0.0
        %1432 = vmatpush1.msra.mxu0 0.0
        %1433 = vmatprep.subr.mxu0 0.0
        %1434 = vmatpush1.msra.mxu0 0.0
        %1435 = vmatprep.subr.mxu0 0.0
        %1436 = vmatpush1.msra.mxu0 0.0
        %1437 = vmatprep.mubr.f32.mxu0 0.0
        %1438 = vmatmul.mubr.f32.gmra.mrb[0].mxu0 %v1136
        %v1439 = vpop.f32.mrb[0].mxu0
        %v1440 = vadd.f32 %v1351, %v1439
        %v1441 = vpop.f32.mrb[0].mxu0
        %v1442 = vadd.f32 %v1353, %v1441
        %1443 = vmatprep.mubr.f32.mxu0 0.0
        %1444 = vmatmul.mubr.f32.gmra.mrb[0].mxu0 %v1137
        %v1445 = vpop.f32.mrb[0].mxu0
        %v1446 = vadd.f32 %v1357, %v1445
        %v1447 = vpop.f32.mrb[0].mxu0
        %v1448 = vadd.f32 %v1359, %v1447
        %1449 = vmatprep.mubr.f32.mxu0 0.0
        %1450 = vmatmul.mubr.f32.gmra.mrb[0].mxu0 %v1138
        %v1451 = vpop.f32.mrb[0].mxu0
        %v1452 = vadd.f32 %v1363, %v1451
        %v1453 = vpop.f32.mrb[0].mxu0
        %v1454 = vadd.f32 %v1365, %v1453
        %1455 = vmatprep.mubr.f32.mxu0 0.0
        %1456 = vmatmul.mubr.f32.gmra.mrb[0].mxu0 %v1139
        %v1457 = vpop.f32.mrb[0].mxu0
        %v1458 = vadd.f32 %v1369, %v1457
        %v1459 = vpop.f32.mrb[0].mxu0
        %v1460 = vadd.f32 %v1371, %v1459
        %1461 = vdwg.mxu0
        %1462 = vmatprep.subr.mxu0 0.0
        %1463 = vmatpush1.msra.mxu0 %v1142
        %1464 = vmatprep.subr.mxu0 0.0
        %1465 = vmatpush1.msra.mxu0 %v1145
        %1466 = vmatprep.subr.mxu0 0.0
        %1467 = vmatpush1.msra.mxu0 %v1148
        %1468 = vmatprep.subr.mxu0 0.0
        %1469 = vmatpush1.msra.mxu0 %v1151
        %1470 = vmatprep.subr.mxu0 0.0
        %1471 = vmatpush1.msra.mxu0 %v1154
        %1472 = vmatprep.subr.mxu0 0.0
        %1473 = vmatpush1.msra.mxu0 %v1157
        %1474 = vmatprep.subr.mxu0 0.0
        %1475 = vmatpush1.msra.mxu0 %v1160
        %1476 = vmatprep.subr.mxu0 0.0
        %1477 = vmatpush1.msra.mxu0 %v1163
        %1478 = vmatprep.subr.mxu0 0.0
        %1479 = vmatpush1.msra.mxu0 %v1166
        %1480 = vmatprep.subr.mxu0 0.0
        %1481 = vmatpush1.msra.mxu0 %v1169
        %1482 = vmatprep.subr.mxu0 0.0
        %1483 = vmatpush1.msra.mxu0 %v1172
        %1484 = vmatprep.subr.mxu0 0.0
        %1485 = vmatpush1.msra.mxu0 %v1175
        %1486 = vmatprep.subr.mxu0 0.0
        %1487 = vmatpush1.msra.mxu0 %v1178
        %1488 = vmatprep.subr.mxu0 0.0
        %1489 = vmatpush1.msra.mxu0 %v1181
        %1490 = vmatprep.subr.mxu0 0.0
        %1491 = vmatpush1.msra.mxu0 %v1184
        %1492 = vmatprep.subr.mxu0 0.0
        %1493 = vmatpush1.msra.mxu0 %v1187
        %1494 = vmatprep.subr.mxu0 0.0
        %1495 = vmatpush1.msra.mxu0 %v1190
        %1496 = vmatprep.subr.mxu0 0.0
        %1497 = vmatpush1.msra.mxu0 %v1193
        %1498 = vmatprep.subr.mxu0 0.0
        %1499 = vmatpush1.msra.mxu0 %v1196
        %1500 = vmatprep.subr.mxu0 0.0
        %1501 = vmatpush1.msra.mxu0 %v1199
        %1502 = vmatprep.subr.mxu0 0.0
        %1503 = vmatpush1.msra.mxu0 %v1202
        %1504 = vmatprep.subr.mxu0 0.0
        %1505 = vmatpush1.msra.mxu0 %v1205
        %1506 = vmatprep.subr.mxu0 0.0
        %1507 = vmatpush1.msra.mxu0 %v1208
        %1508 = vmatprep.subr.mxu0 0.0
        %1509 = vmatpush1.msra.mxu0 %v1211
        %1510 = vmatprep.subr.mxu0 0.0
        %1511 = vmatpush1.msra.mxu0 %v1214
        %1512 = vmatprep.subr.mxu0 0.0
        %1513 = vmatpush1.msra.mxu0 %v1217
        %1514 = vmatprep.subr.mxu0 0.0
        %1515 = vmatpush1.msra.mxu0 %v1220
        %1516 = vmatprep.subr.mxu0 0.0
        %1517 = vmatpush1.msra.mxu0 %v1223
        %1518 = vmatprep.subr.mxu0 0.0
        %1519 = vmatpush1.msra.mxu0 %v1226
        %1520 = vmatprep.subr.mxu0 0.0
        %1521 = vmatpush1.msra.mxu0 %v1229
        %1522 = vmatprep.subr.mxu0 0.0
        %1523 = vmatpush1.msra.mxu0 %v1232
        %1524 = vmatprep.subr.mxu0 0.0
        %1525 = vmatpush1.msra.mxu0 %v1235
        %1526 = vmatprep.mubr.f32.mxu0 %v1100
        %1527 = vmatmul.mubr.f32.gmra.mrb[0].mxu0 %v1064
        %v1528 = vpop.f32.mrb[0].mxu0
        %v1529 = vadd.f32 0.0, %v1528
        %v1530 = vpop.f32.mrb[0].mxu0
        %1531 = vmatprep.mubr.f32.mxu0 %v1101
        %1532 = vmatmul.mubr.f32.gmra.mrb[0].mxu0 %v1065
        %v1533 = vpop.f32.mrb[0].mxu0
        %v1534 = vadd.f32 0.0, %v1533
        %v1535 = vpop.f32.mrb[0].mxu0
        %1536 = vmatprep.mubr.f32.mxu0 %v1102
        %1537 = vmatmul.mubr.f32.gmra.mrb[0].mxu0 %v1066
        %v1538 = vpop.f32.mrb[0].mxu0
        %v1539 = vadd.f32 0.0, %v1538
        %v1540 = vpop.f32.mrb[0].mxu0
        %1541 = vmatprep.mubr.f32.mxu0 %v1103
        %1542 = vmatmul.mubr.f32.gmra.mrb[0].mxu0 %v1067
        %v1543 = vpop.f32.mrb[0].mxu0
        %v1544 = vadd.f32 0.0, %v1543
        %v1545 = vpop.f32.mrb[0].mxu0
        %1546 = vdwg.mxu0
        %1547 = vmatprep.subr.mxu0 0.0
        %1548 = vmatpush1.msra.mxu0 %v1238
        %1549 = vmatprep.subr.mxu0 0.0
        %1550 = vmatpush1.msra.mxu0 %v1241
        %1551 = vmatprep.subr.mxu0 0.0
        %1552 = vmatpush1.msra.mxu0 %v1244
        %1553 = vmatprep.subr.mxu0 0.0
        %1554 = vmatpush1.msra.mxu0 %v1247
        %1555 = vmatprep.subr.mxu0 0.0
        %1556 = vmatpush1.msra.mxu0 %v1250
        %1557 = vmatprep.subr.mxu0 0.0
        %1558 = vmatpush1.msra.mxu0 %v1253
        %1559 = vmatprep.subr.mxu0 0.0
        %1560 = vmatpush1.msra.mxu0 %v1256
        %1561 = vmatprep.subr.mxu0 0.0
        %1562 = vmatpush1.msra.mxu0 %v1259
        %1563 = vmatprep.subr.mxu0 0.0
        %1564 = vmatpush1.msra.mxu0 %v1262
        %1565 = vmatprep.subr.mxu0 0.0
        %1566 = vmatpush1.msra.mxu0 %v1265
        %1567 = vmatprep.subr.mxu0 0.0
        %1568 = vmatpush1.msra.mxu0 %v1268
        %1569 = vmatprep.subr.mxu0 0.0
        %1570 = vmatpush1.msra.mxu0 %v1271
        %1571 = vmatprep.subr.mxu0 0.0
        %1572 = vmatpush1.msra.mxu0 %v1274
        %1573 = vmatprep.subr.mxu0 0.0
        %1574 = vmatpush1.msra.mxu0 %v1277
        %1575 = vmatprep.subr.mxu0 0.0
        %1576 = vmatpush1.msra.mxu0 %v1280
        %1577 = vmatprep.subr.mxu0 0.0
        %1578 = vmatpush1.msra.mxu0 %v1283
        %1579 = vmatprep.subr.mxu0 0.0
        %1580 = vmatpush1.msra.mxu0 0.0
        %1581 = vmatprep.subr.mxu0 0.0
        %1582 = vmatpush1.msra.mxu0 0.0
        %1583 = vmatprep.subr.mxu0 0.0
        %1584 = vmatpush1.msra.mxu0 0.0
        %1585 = vmatprep.subr.mxu0 0.0
        %1586 = vmatpush1.msra.mxu0 0.0
        %1587 = vmatprep.subr.mxu0 0.0
        %1588 = vmatpush1.msra.mxu0 0.0
        %1589 = vmatprep.subr.mxu0 0.0
        %1590 = vmatpush1.msra.mxu0 0.0
        %1591 = vmatprep.subr.mxu0 0.0
        %1592 = vmatpush1.msra.mxu0 0.0
        %1593 = vmatprep.subr.mxu0 0.0
        %1594 = vmatpush1.msra.mxu0 0.0
        %1595 = vmatprep.subr.mxu0 0.0
        %1596 = vmatpush1.msra.mxu0 0.0
        %1597 = vmatprep.subr.mxu0 0.0
        %1598 = vmatpush1.msra.mxu0 0.0
        %1599 = vmatprep.subr.mxu0 0.0
        %1600 = vmatpush1.msra.mxu0 0.0
        %1601 = vmatprep.subr.mxu0 0.0
        %1602 = vmatpush1.msra.mxu0 0.0
        %1603 = vmatprep.subr.mxu0 0.0
        %1604 = vmatpush1.msra.mxu0 0.0
        %1605 = vmatprep.subr.mxu0 0.0
        %1606 = vmatpush1.msra.mxu0 0.0
        %1607 = vmatprep.subr.mxu0 0.0
        %1608 = vmatpush1.msra.mxu0 0.0
        %1609 = vmatprep.subr.mxu0 0.0
        %1610 = vmatpush1.msra.mxu0 0.0
        %1611 = vmatprep.mubr.f32.mxu0 0.0
        %1612 = vmatmul.mubr.f32.gmra.mrb[0].mxu0 %v1136
        %v1613 = vpop.f32.mrb[0].mxu0
        %v1614 = vadd.f32 %v1529, %v1613
        %v1615 = vpop.f32.mrb[0].mxu0
        %1616 = vmatprep.mubr.f32.mxu0 0.0
        %1617 = vmatmul.mubr.f32.gmra.mrb[0].mxu0 %v1137
        %v1618 = vpop.f32.mrb[0].mxu0
        %v1619 = vadd.f32 %v1534, %v1618
        %v1620 = vpop.f32.mrb[0].mxu0
        %1621 = vmatprep.mubr.f32.mxu0 0.0
        %1622 = vmatmul.mubr.f32.gmra.mrb[0].mxu0 %v1138
        %v1623 = vpop.f32.mrb[0].mxu0
        %v1624 = vadd.f32 %v1539, %v1623
        %v1625 = vpop.f32.mrb[0].mxu0
        %1626 = vmatprep.mubr.f32.mxu0 0.0
        %1627 = vmatmul.mubr.f32.gmra.mrb[0].mxu0 %v1139
        %v1628 = vpop.f32.mrb[0].mxu0
        %v1629 = vadd.f32 %v1544, %v1628
        %v1630 = vpop.f32.mrb[0].mxu0
        %1631 = vdwg.mxu0
        %v1632 = vmul.f32 %v1440, %v1028
        %v1633 = vmul.f32 %v1442, %v1028
        %v1634 = vmul.f32 %v1614, %v1028
        %v1635 = vmul.f32 %v1446, %v1029
        %v1636 = vmul.f32 %v1448, %v1029
        %v1637 = vmul.f32 %v1619, %v1029
        %v1638 = vmul.f32 %v1452, %v1030
        %v1639 = vmul.f32 %v1454, %v1030
        %v1640 = vmul.f32 %v1624, %v1030
        %v1641 = vmul.f32 %v1458, %v1031
        %v1642 = vmul.f32 %v1460, %v1031
        %v1643 = vmul.f32 %v1629, %v1031
        %v1644 = vld [vmem:[#allocation7] sm:$0xff]
        %v1645 = vld [vmem:[#allocation7 + $0x8] sm:$0xff]
        %v1646 = vld [vmem:[#allocation7 + $0x10] sm:$0xff]
        %v1647 = vld [vmem:[#allocation7 + $0x18] sm:$0xff]
        %v1648 = vld [vmem:[#allocation7 + $0x20] sm:$0xff]
        %v1649 = vld [vmem:[#allocation7 + $0x28] sm:$0xff]
        %v1650 = vld [vmem:[#allocation7 + $0x30] sm:$0xff]
        %v1651 = vld [vmem:[#allocation7 + $0x38] sm:$0xff]
        %v1652 = vld [vmem:[#allocation7 + $0x40] sm:$0xff]
        %v1653 = vld [vmem:[#allocation7 + $0x48] sm:$0xff]
        %v1654 = vld [vmem:[#allocation7 + $0x50] sm:$0xff]
        %v1655 = vld [vmem:[#allocation7 + $0x58] sm:$0xff]
        %v1656 = vld [vmem:[#allocation7 + $0x60] sm:$0xff]
        %v1657 = vld [vmem:[#allocation7 + $0x68] sm:$0xff]
        %v1658 = vld [vmem:[#allocation7 + $0x70] sm:$0xff]
        %v1659 = vld [vmem:[#allocation7 + $0x78] sm:$0xff]
        %v1660 = vld [vmem:[#allocation7 + $0x80] sm:$0xff]
        %v1661 = vld [vmem:[#allocation7 + $0x88] sm:$0xff]
        %v1662 = vld [vmem:[#allocation7 + $0x90] sm:$0xff]
        %v1663 = vld [vmem:[#allocation7 + $0x98] sm:$0xff]
        %v1664 = vld [vmem:[#allocation7 + $0xa0] sm:$0xff]
        %v1665 = vld [vmem:[#allocation7 + $0xa8] sm:$0xff]
        %v1666 = vld [vmem:[#allocation7 + $0xb0] sm:$0xff]
        %v1667 = vld [vmem:[#allocation7 + $0xb8] sm:$0xff]
        %v1668 = vld [vmem:[#allocation7 + $0xc0] sm:$0xff]
        %v1669 = vld [vmem:[#allocation7 + $0xc8] sm:$0xff]
        %v1670 = vld [vmem:[#allocation7 + $0xd0] sm:$0xff]
        %v1671 = vld [vmem:[#allocation7 + $0xd8] sm:$0xff]
        %v1672 = vld [vmem:[#allocation7 + $0xe0] sm:$0xff]
        %v1673 = vld [vmem:[#allocation7 + $0xe8] sm:$0xff]
        %v1674 = vld [vmem:[#allocation7 + $0xf0] sm:$0xff]
        %v1675 = vld [vmem:[#allocation7 + $0xf8] sm:$0xff]
        %v1676 = vld [vmem:[#allocation7 + $0x100] sm:$0xff]
        %v1677 = vld [vmem:[#allocation7 + $0x108] sm:$0xff]
        %v1678 = vld [vmem:[#allocation7 + $0x110] sm:$0xff]
        %v1679 = vld [vmem:[#allocation7 + $0x118] sm:$0xff]
        %v1680 = vld [vmem:[#allocation7 + $0x120] sm:$0xff]
        %v1681 = vld [vmem:[#allocation7 + $0x128] sm:$0xff]
        %v1682 = vld [vmem:[#allocation7 + $0x130] sm:$0xff]
        %v1683 = vld [vmem:[#allocation7 + $0x138] sm:$0xff]
        %v1684 = vld [vmem:[#allocation7 + $0x140] sm:$0xff]
        %v1685 = vld [vmem:[#allocation7 + $0x148] sm:$0xff]
        %v1686 = vld [vmem:[#allocation7 + $0x150] sm:$0xff]
        %v1687 = vld [vmem:[#allocation7 + $0x158] sm:$0xff]
        %v1688 = vld [vmem:[#allocation7 + $0x160] sm:$0xff]
        %v1689 = vld [vmem:[#allocation7 + $0x168] sm:$0xff]
        %v1690 = vld [vmem:[#allocation7 + $0x170] sm:$0xff]
        %v1691 = vld [vmem:[#allocation7 + $0x178] sm:$0xff]
        %v1692 = vld [vmem:[#allocation7 + $0x180] sm:$0xff]
        %v1693 = vld [vmem:[#allocation7 + $0x188] sm:$0xff]
        %v1694 = vld [vmem:[#allocation7 + $0x190] sm:$0xff]
        %v1695 = vld [vmem:[#allocation7 + $0x198] sm:$0xff]
        %v1696 = vld [vmem:[#allocation7 + $0x1a0] sm:$0xff]
        %v1697 = vld [vmem:[#allocation7 + $0x1a8] sm:$0xff]
        %v1698 = vld [vmem:[#allocation7 + $0x1b0] sm:$0xff]
        %v1699 = vld [vmem:[#allocation7 + $0x1b8] sm:$0xff]
        %v1700 = vld [vmem:[#allocation7 + $0x1c0] sm:$0xff]
        %v1701 = vld [vmem:[#allocation7 + $0x1c8] sm:$0xff]
        %v1702 = vld [vmem:[#allocation7 + $0x1d0] sm:$0xff]
        %v1703 = vld [vmem:[#allocation7 + $0x1d8] sm:$0xff]
        %v1704 = vld [vmem:[#allocation7 + $0x1e0] sm:$0xff]
        %v1705 = vld [vmem:[#allocation7 + $0x1e8] sm:$0xff]
        %v1706 = vld [vmem:[#allocation7 + $0x1f0] sm:$0xff]
        %v1707 = vld [vmem:[#allocation7 + $0x1f8] sm:$0xff]
        %v1708 = vld [vmem:[#allocation7 + $0x200] sm:$0xff]
        %v1709 = vld [vmem:[#allocation7 + $0x208] sm:$0xff]
        %v1710 = vld [vmem:[#allocation7 + $0x210] sm:$0xff]
        %v1711 = vld [vmem:[#allocation7 + $0x218] sm:$0xff]
        %v1712 = vld [vmem:[#allocation7 + $0x220] sm:$0xff]
        %v1713 = vld [vmem:[#allocation7 + $0x228] sm:$0xff]
        %v1714 = vld [vmem:[#allocation7 + $0x230] sm:$0xff]
        %v1715 = vld [vmem:[#allocation7 + $0x238] sm:$0xff]
        %v1716 = vld [vmem:[#allocation7 + $0x240] sm:$0xff]
        %v1717 = vld [vmem:[#allocation7 + $0x248] sm:$0xff]
        %v1718 = vld [vmem:[#allocation7 + $0x250] sm:$0xff]
        %v1719 = vld [vmem:[#allocation7 + $0x258] sm:$0xff]
        %v1720 = vld [vmem:[#allocation7 + $0x260] sm:$0xff]
        %v1721 = vld [vmem:[#allocation7 + $0x268] sm:$0xff]
        %v1722 = vld [vmem:[#allocation7 + $0x270] sm:$0xff]
        %v1723 = vld [vmem:[#allocation7 + $0x278] sm:$0xff]
        %v1724 = vld [vmem:[#allocation7 + $0x280] sm:$0xff]
        %v1725 = vld [vmem:[#allocation7 + $0x288] sm:$0xff]
        %v1726 = vld [vmem:[#allocation7 + $0x290] sm:$0xff]
        %v1727 = vld [vmem:[#allocation7 + $0x298] sm:$0xff]
        %v1728 = vld [vmem:[#allocation7 + $0x2a0] sm:$0xff]
        %v1729 = vld [vmem:[#allocation7 + $0x2a8] sm:$0xff]
        %v1730 = vld [vmem:[#allocation7 + $0x2b0] sm:$0xff]
        %v1731 = vld [vmem:[#allocation7 + $0x2b8] sm:$0xff]
        %v1732 = vld [vmem:[#allocation7 + $0x2c0] sm:$0xff]
        %v1733 = vld [vmem:[#allocation7 + $0x2c8] sm:$0xff]
        %v1734 = vld [vmem:[#allocation7 + $0x2d0] sm:$0xff]
        %v1735 = vld [vmem:[#allocation7 + $0x2d8] sm:$0xff]
        %v1736 = vld [vmem:[#allocation7 + $0x2e0] sm:$0xff]
        %v1737 = vld [vmem:[#allocation7 + $0x2e8] sm:$0xff]
        %v1738 = vld [vmem:[#allocation7 + $0x2f0] sm:$0xff]
        %v1739 = vld [vmem:[#allocation7 + $0x2f8] sm:$0xff]
        %v1740 = vld [vmem:[#allocation7 + $0x300] sm:$0xff]
        %v1741 = vld [vmem:[#allocation7 + $0x308] sm:$0xff]
        %v1742 = vld [vmem:[#allocation7 + $0x310] sm:$0xff]
        %v1743 = vld [vmem:[#allocation7 + $0x318] sm:$0xff]
        %v1744 = vld [vmem:[#allocation7 + $0x320] sm:$0xff]
        %v1745 = vld [vmem:[#allocation7 + $0x328] sm:$0xff]
        %v1746 = vld [vmem:[#allocation7 + $0x330] sm:$0xff]
        %v1747 = vld [vmem:[#allocation7 + $0x338] sm:$0xff]
        %v1748 = vld [vmem:[#allocation7 + $0x340] sm:$0xff]
        %v1749 = vld [vmem:[#allocation7 + $0x348] sm:$0xff]
        %v1750 = vld [vmem:[#allocation7 + $0x350] sm:$0xff]
        %v1751 = vld [vmem:[#allocation7 + $0x358] sm:$0xff]
        %v1752 = vld [vmem:[#allocation7 + $0x360] sm:$0xff]
        %v1753 = vld [vmem:[#allocation7 + $0x368] sm:$0xff]
        %v1754 = vld [vmem:[#allocation7 + $0x370] sm:$0xff]
        %v1755 = vld [vmem:[#allocation7 + $0x378] sm:$0xff]
        %v1756 = vld [vmem:[#allocation7 + $0x380] sm:$0xff]
        %v1757 = vld [vmem:[#allocation7 + $0x388] sm:$0xff]
        %v1758 = vld [vmem:[#allocation7 + $0x390] sm:$0xff]
        %v1759 = vld [vmem:[#allocation7 + $0x398] sm:$0xff]
        %v1760 = vld [vmem:[#allocation7 + $0x3a0] sm:$0xff]
        %v1761 = vld [vmem:[#allocation7 + $0x3a8] sm:$0xff]
        %v1762 = vld [vmem:[#allocation7 + $0x3b0] sm:$0xff]
        %v1763 = vld [vmem:[#allocation7 + $0x3b8] sm:$0xff]
        %v1764 = vld [vmem:[#allocation7 + $0x3c0] sm:$0xff]
        %v1765 = vld [vmem:[#allocation7 + $0x3c8] sm:$0xff]
        %v1766 = vld [vmem:[#allocation7 + $0x3d0] sm:$0xff]
        %v1767 = vld [vmem:[#allocation7 + $0x3d8] sm:$0xff]
        %v1768 = vld [vmem:[#allocation7 + $0x3e0] sm:$0xff]
        %v1769 = vld [vmem:[#allocation7 + $0x3e8] sm:$0xff]
        %v1770 = vld [vmem:[#allocation7 + $0x3f0] sm:$0xff]
        %v1771 = vld [vmem:[#allocation7 + $0x3f8] sm:$0xff]
        %v1772 = vld [vmem:[#allocation7 + $0x400] sm:$0xff]
        %v1773 = vld [vmem:[#allocation7 + $0x408] sm:$0xff]
        %v1774 = vld [vmem:[#allocation7 + $0x410] sm:$0xff]
        %v1775 = vld [vmem:[#allocation7 + $0x418] sm:$0xff]
        %v1776 = vld [vmem:[#allocation7 + $0x420] sm:$0xff]
        %v1777 = vld [vmem:[#allocation7 + $0x428] sm:$0xff]
        %v1778 = vld [vmem:[#allocation7 + $0x430] sm:$0xff]
        %v1779 = vld [vmem:[#allocation7 + $0x438] sm:$0xff]
        %v1780 = vld [vmem:[#allocation7 + $0x440] sm:$0xff]
        %v1781 = vld [vmem:[#allocation7 + $0x448] sm:$0xff]
        %v1782 = vld [vmem:[#allocation7 + $0x450] sm:$0xff]
        %v1783 = vld [vmem:[#allocation7 + $0x458] sm:$0xff]
        %v1784 = vld [vmem:[#allocation7 + $0x460] sm:$0xff]
        %v1785 = vld [vmem:[#allocation7 + $0x468] sm:$0xff]
        %v1786 = vld [vmem:[#allocation7 + $0x470] sm:$0xff]
        %v1787 = vld [vmem:[#allocation7 + $0x478] sm:$0xff]
        %v1788 = vld [vmem:[#allocation7 + $0x480] sm:$0xff]
        %v1789 = vld [vmem:[#allocation7 + $0x488] sm:$0xff]
        %v1790 = vld [vmem:[#allocation7 + $0x490] sm:$0xff]
        %v1791 = vld [vmem:[#allocation7 + $0x498] sm:$0xff]
        %v1792 = vld [vmem:[#allocation7 + $0x4a0] sm:$0xff]
        %v1793 = vld [vmem:[#allocation7 + $0x4a8] sm:$0xff]
        %v1794 = vld [vmem:[#allocation7 + $0x4b0] sm:$0xff]
        %v1795 = vld [vmem:[#allocation7 + $0x4b8] sm:$0xff]
        %v1796 = vld [vmem:[#allocation7 + $0x4c0] sm:$0xff]
        %v1797 = vld [vmem:[#allocation7 + $0x4c8] sm:$0xff]
        %v1798 = vld [vmem:[#allocation7 + $0x4d0] sm:$0xff]
        %v1799 = vld [vmem:[#allocation7 + $0x4d8] sm:$0xff]
        %v1800 = vld [vmem:[#allocation7 + $0x4e0] sm:$0xff]
        %v1801 = vld [vmem:[#allocation7 + $0x4e8] sm:$0xff]
        %v1802 = vld [vmem:[#allocation7 + $0x4f0] sm:$0xff]
        %v1803 = vld [vmem:[#allocation7 + $0x4f8] sm:$0xff]
        %v1804 = vld [vmem:[#allocation7 + $0x500] sm:$0xff]
        %v1805 = vld [vmem:[#allocation7 + $0x508] sm:$0xff]
        %v1806 = vld [vmem:[#allocation7 + $0x510] sm:$0xff]
        %v1807 = vld [vmem:[#allocation7 + $0x518] sm:$0xff]
        %v1808 = vld [vmem:[#allocation7 + $0x520] sm:$0xff]
        %v1809 = vld [vmem:[#allocation7 + $0x528] sm:$0xff]
        %v1810 = vld [vmem:[#allocation7 + $0x530] sm:$0xff]
        %v1811 = vld [vmem:[#allocation7 + $0x538] sm:$0xff]
        %v1812 = vld [vmem:[#allocation7 + $0x540] sm:$0xff]
        %v1813 = vld [vmem:[#allocation7 + $0x548] sm:$0xff]
        %v1814 = vld [vmem:[#allocation7 + $0x550] sm:$0xff]
        %v1815 = vld [vmem:[#allocation7 + $0x558] sm:$0xff]
        %v1816 = vld [vmem:[#allocation7 + $0x560] sm:$0xff]
        %v1817 = vld [vmem:[#allocation7 + $0x568] sm:$0xff]
        %v1818 = vld [vmem:[#allocation7 + $0x570] sm:$0xff]
        %v1819 = vld [vmem:[#allocation7 + $0x578] sm:$0xff]
        %v1820 = vld [vmem:[#allocation7 + $0x580] sm:$0xff]
        %v1821 = vld [vmem:[#allocation7 + $0x588] sm:$0xff]
        %v1822 = vld [vmem:[#allocation7 + $0x590] sm:$0xff]
        %v1823 = vld [vmem:[#allocation7 + $0x598] sm:$0xff]
        %v1824 = vld [vmem:[#allocation7 + $0x5a0] sm:$0xff]
        %v1825 = vld [vmem:[#allocation7 + $0x5a8] sm:$0xff]
        %v1826 = vld [vmem:[#allocation7 + $0x5b0] sm:$0xff]
        %v1827 = vld [vmem:[#allocation7 + $0x5b8] sm:$0xff]
        %v1828 = vld [vmem:[#allocation7 + $0x5c0] sm:$0xff]
        %v1829 = vld [vmem:[#allocation7 + $0x5c8] sm:$0xff]
        %v1830 = vld [vmem:[#allocation7 + $0x5d0] sm:$0xff]
        %v1831 = vld [vmem:[#allocation7 + $0x5d8] sm:$0xff]
        %v1832 = vld [vmem:[#allocation7 + $0x5e0] sm:$0xff]
        %v1833 = vld [vmem:[#allocation7 + $0x5e8] sm:$0xff]
        %v1834 = vld [vmem:[#allocation7 + $0x5f0] sm:$0xff]
        %v1835 = vld [vmem:[#allocation7 + $0x5f8] sm:$0xff]
        %v1836 = vld [vmem:[%s7] sm:$0xf]
        %v1838 = vlaneseq
        %v1839 = vshrl.u32 %v1838, 7
        %v1840 = vsub.s32 0, %v1839
        %v1841 = vrot.slane %v1836, %v1840
        %v1842 = vlaneseq
        %v1843 = vshrl.u32 %v1842, 7
        %v1844 = vsub.s32 1, %v1843
        %v1845 = vrot.slane %v1836, %v1844
        %v1846 = vlaneseq
        %v1847 = vshrl.u32 %v1846, 7
        %v1848 = vsub.s32 2, %v1847
        %v1849 = vrot.slane %v1836, %v1848
        %v1850 = vlaneseq
        %v1851 = vshrl.u32 %v1850, 7
        %v1852 = vsub.s32 3, %v1851
        %v1853 = vrot.slane %v1836, %v1852
        %1858 = vmatprep.subr.mxu0 %v1645
        %1859 = vmatpush1.msra.mxu0 %v1644
        %1860 = vmatprep.subr.mxu0 %v1649
        %1861 = vmatpush1.msra.mxu0 %v1648
        %1862 = vmatprep.subr.mxu0 %v1653
        %1863 = vmatpush1.msra.mxu0 %v1652
        %1864 = vmatprep.subr.mxu0 %v1657
        %1865 = vmatpush1.msra.mxu0 %v1656
        %1866 = vmatprep.subr.mxu0 %v1661
        %1867 = vmatpush1.msra.mxu0 %v1660
        %1868 = vmatprep.subr.mxu0 %v1665
        %1869 = vmatpush1.msra.mxu0 %v1664
        %1870 = vmatprep.subr.mxu0 %v1669
        %1871 = vmatpush1.msra.mxu0 %v1668
        %1872 = vmatprep.subr.mxu0 %v1673
        %1873 = vmatpush1.msra.mxu0 %v1672
        %1874 = vmatprep.subr.mxu0 %v1677
        %1875 = vmatpush1.msra.mxu0 %v1676
        %1876 = vmatprep.subr.mxu0 %v1681
        %1877 = vmatpush1.msra.mxu0 %v1680
        %1878 = vmatprep.subr.mxu0 %v1685
        %1879 = vmatpush1.msra.mxu0 %v1684
        %1880 = vmatprep.subr.mxu0 %v1689
        %1881 = vmatpush1.msra.mxu0 %v1688
        %1882 = vmatprep.subr.mxu0 %v1693
        %1883 = vmatpush1.msra.mxu0 %v1692
        %1884 = vmatprep.subr.mxu0 %v1697
        %1885 = vmatpush1.msra.mxu0 %v1696
        %1886 = vmatprep.subr.mxu0 %v1701
        %1887 = vmatpush1.msra.mxu0 %v1700
        %1888 = vmatprep.subr.mxu0 %v1705
        %1889 = vmatpush1.msra.mxu0 %v1704
        %1890 = vmatprep.subr.mxu0 %v1709
        %1891 = vmatpush1.msra.mxu0 %v1708
        %1892 = vmatprep.subr.mxu0 %v1713
        %1893 = vmatpush1.msra.mxu0 %v1712
        %1894 = vmatprep.subr.mxu0 %v1717
        %1895 = vmatpush1.msra.mxu0 %v1716
        %1896 = vmatprep.subr.mxu0 %v1721
        %1897 = vmatpush1.msra.mxu0 %v1720
        %1898 = vmatprep.subr.mxu0 %v1725
        %1899 = vmatpush1.msra.mxu0 %v1724
        %1900 = vmatprep.subr.mxu0 %v1729
        %1901 = vmatpush1.msra.mxu0 %v1728
        %1902 = vmatprep.subr.mxu0 %v1733
        %1903 = vmatpush1.msra.mxu0 %v1732
        %1904 = vmatprep.subr.mxu0 %v1737
        %1905 = vmatpush1.msra.mxu0 %v1736
        %1906 = vmatprep.subr.mxu0 %v1741
        %1907 = vmatpush1.msra.mxu0 %v1740
        %1908 = vmatprep.subr.mxu0 %v1745
        %1909 = vmatpush1.msra.mxu0 %v1744
        %1910 = vmatprep.subr.mxu0 %v1749
        %1911 = vmatpush1.msra.mxu0 %v1748
        %1912 = vmatprep.subr.mxu0 %v1753
        %1913 = vmatpush1.msra.mxu0 %v1752
        %1914 = vmatprep.subr.mxu0 %v1757
        %1915 = vmatpush1.msra.mxu0 %v1756
        %1916 = vmatprep.subr.mxu0 %v1761
        %1917 = vmatpush1.msra.mxu0 %v1760
        %1918 = vmatprep.subr.mxu0 %v1765
        %1919 = vmatpush1.msra.mxu0 %v1764
        %1920 = vmatprep.subr.mxu0 %v1769
        %1921 = vmatpush1.msra.mxu0 %v1768
        %1922 = vmatprep.mubr.f32.mxu0 %v1633
        %1923 = vmatmul.mubr.f32.gmra.mrb[0].mxu0 %v1632
        %v1924 = vpop.f32.mrb[0].mxu0
        %v1925 = vadd.f32 %v1841, %v1924
        %v1926 = vpop.f32.mrb[0].mxu0
        %v1927 = vadd.f32 %v1845, %v1926
        %1928 = vmatprep.mubr.f32.mxu0 %v1636
        %1929 = vmatmul.mubr.f32.gmra.mrb[0].mxu0 %v1635
        %v1930 = vpop.f32.mrb[0].mxu0
        %v1931 = vadd.f32 %v1841, %v1930
        %v1932 = vpop.f32.mrb[0].mxu0
        %v1933 = vadd.f32 %v1845, %v1932
        %1934 = vmatprep.mubr.f32.mxu0 %v1639
        %1935 = vmatmul.mubr.f32.gmra.mrb[0].mxu0 %v1638
        %v1936 = vpop.f32.mrb[0].mxu0
        %v1937 = vadd.f32 %v1841, %v1936
        %v1938 = vpop.f32.mrb[0].mxu0
        %v1939 = vadd.f32 %v1845, %v1938
        %1940 = vmatprep.mubr.f32.mxu0 %v1642
        %1941 = vmatmul.mubr.f32.gmra.mrb[0].mxu0 %v1641
        %v1942 = vpop.f32.mrb[0].mxu0
        %v1943 = vadd.f32 %v1841, %v1942
        %v1944 = vpop.f32.mrb[0].mxu0
        %v1945 = vadd.f32 %v1845, %v1944
        %1946 = vdwg.mxu0
        %1947 = vmatprep.subr.mxu0 %v1773
        %1948 = vmatpush1.msra.mxu0 %v1772
        %1949 = vmatprep.subr.mxu0 %v1777
        %1950 = vmatpush1.msra.mxu0 %v1776
        %1951 = vmatprep.subr.mxu0 %v1781
        %1952 = vmatpush1.msra.mxu0 %v1780
        %1953 = vmatprep.subr.mxu0 %v1785
        %1954 = vmatpush1.msra.mxu0 %v1784
        %1955 = vmatprep.subr.mxu0 %v1789
        %1956 = vmatpush1.msra.mxu0 %v1788
        %1957 = vmatprep.subr.mxu0 %v1793
        %1958 = vmatpush1.msra.mxu0 %v1792
        %1959 = vmatprep.subr.mxu0 %v1797
        %1960 = vmatpush1.msra.mxu0 %v1796
        %1961 = vmatprep.subr.mxu0 %v1801
        %1962 = vmatpush1.msra.mxu0 %v1800
        %1963 = vmatprep.subr.mxu0 %v1805
        %1964 = vmatpush1.msra.mxu0 %v1804
        %1965 = vmatprep.subr.mxu0 %v1809
        %1966 = vmatpush1.msra.mxu0 %v1808
        %1967 = vmatprep.subr.mxu0 %v1813
        %1968 = vmatpush1.msra.mxu0 %v1812
        %1969 = vmatprep.subr.mxu0 %v1817
        %1970 = vmatpush1.msra.mxu0 %v1816
        %1971 = vmatprep.subr.mxu0 %v1821
        %1972 = vmatpush1.msra.mxu0 %v1820
        %1973 = vmatprep.subr.mxu0 %v1825
        %1974 = vmatpush1.msra.mxu0 %v1824
        %1975 = vmatprep.subr.mxu0 %v1829
        %1976 = vmatpush1.msra.mxu0 %v1828
        %1977 = vmatprep.subr.mxu0 %v1833
        %1978 = vmatpush1.msra.mxu0 %v1832
        %1979 = vmatprep.subr.mxu0 0.0
        %1980 = vmatpush1.msra.mxu0 0.0
        %1981 = vmatprep.subr.mxu0 0.0
        %1982 = vmatpush1.msra.mxu0 0.0
        %1983 = vmatprep.subr.mxu0 0.0
        %1984 = vmatpush1.msra.mxu0 0.0
        %1985 = vmatprep.subr.mxu0 0.0
        %1986 = vmatpush1.msra.mxu0 0.0
        %1987 = vmatprep.subr.mxu0 0.0
        %1988 = vmatpush1.msra.mxu0 0.0
        %1989 = vmatprep.subr.mxu0 0.0
        %1990 = vmatpush1.msra.mxu0 0.0
        %1991 = vmatprep.subr.mxu0 0.0
        %1992 = vmatpush1.msra.mxu0 0.0
        %1993 = vmatprep.subr.mxu0 0.0
        %1994 = vmatpush1.msra.mxu0 0.0
        %1995 = vmatprep.subr.mxu0 0.0
        %1996 = vmatpush1.msra.mxu0 0.0
        %1997 = vmatprep.subr.mxu0 0.0
        %1998 = vmatpush1.msra.mxu0 0.0
        %1999 = vmatprep.subr.mxu0 0.0
        %2000 = vmatpush1.msra.mxu0 0.0
        %2001 = vmatprep.subr.mxu0 0.0
        %2002 = vmatpush1.msra.mxu0 0.0
        %2003 = vmatprep.subr.mxu0 0.0
        %2004 = vmatpush1.msra.mxu0 0.0
        %2005 = vmatprep.subr.mxu0 0.0
        %2006 = vmatpush1.msra.mxu0 0.0
        %2007 = vmatprep.subr.mxu0 0.0
        %2008 = vmatpush1.msra.mxu0 0.0
        %2009 = vmatprep.subr.mxu0 0.0
        %2010 = vmatpush1.msra.mxu0 0.0
        %2011 = vmatprep.mubr.f32.mxu0 0.0
        %2012 = vmatmul.mubr.f32.gmra.mrb[0].mxu0 %v1634
        %v2013 = vpop.f32.mrb[0].mxu0
        %v2014 = vadd.f32 %v1925, %v2013
        %v2015 = vpop.f32.mrb[0].mxu0
        %v2016 = vadd.f32 %v1927, %v2015
        %2017 = vmatprep.mubr.f32.mxu0 0.0
        %2018 = vmatmul.mubr.f32.gmra.mrb[0].mxu0 %v1637
        %v2019 = vpop.f32.mrb[0].mxu0
        %v2020 = vadd.f32 %v1931, %v2019
        %v2021 = vpop.f32.mrb[0].mxu0
        %v2022 = vadd.f32 %v1933, %v2021
        %2023 = vmatprep.mubr.f32.mxu0 0.0
        %2024 = vmatmul.mubr.f32.gmra.mrb[0].mxu0 %v1640
        %v2025 = vpop.f32.mrb[0].mxu0
        %v2026 = vadd.f32 %v1937, %v2025
        %v2027 = vpop.f32.mrb[0].mxu0
        %v2028 = vadd.f32 %v1939, %v2027
        %2029 = vmatprep.mubr.f32.mxu0 0.0
        %2030 = vmatmul.mubr.f32.gmra.mrb[0].mxu0 %v1643
        %v2031 = vpop.f32.mrb[0].mxu0
        %v2032 = vadd.f32 %v1943, %v2031
        %v2033 = vpop.f32.mrb[0].mxu0
        %v2034 = vadd.f32 %v1945, %v2033
        %2035 = vdwg.mxu0
        %2036 = vmatprep.subr.mxu0 %v1647
        %2037 = vmatpush1.msra.mxu0 %v1646
        %2038 = vmatprep.subr.mxu0 %v1651
        %2039 = vmatpush1.msra.mxu0 %v1650
        %2040 = vmatprep.subr.mxu0 %v1655
        %2041 = vmatpush1.msra.mxu0 %v1654
        %2042 = vmatprep.subr.mxu0 %v1659
        %2043 = vmatpush1.msra.mxu0 %v1658
        %2044 = vmatprep.subr.mxu0 %v1663
        %2045 = vmatpush1.msra.mxu0 %v1662
        %2046 = vmatprep.subr.mxu0 %v1667
        %2047 = vmatpush1.msra.mxu0 %v1666
        %2048 = vmatprep.subr.mxu0 %v1671
        %2049 = vmatpush1.msra.mxu0 %v1670
        %2050 = vmatprep.subr.mxu0 %v1675
        %2051 = vmatpush1.msra.mxu0 %v1674
        %2052 = vmatprep.subr.mxu0 %v1679
        %2053 = vmatpush1.msra.mxu0 %v1678
        %2054 = vmatprep.subr.mxu0 %v1683
        %2055 = vmatpush1.msra.mxu0 %v1682
        %2056 = vmatprep.subr.mxu0 %v1687
        %2057 = vmatpush1.msra.mxu0 %v1686
        %2058 = vmatprep.subr.mxu0 %v1691
        %2059 = vmatpush1.msra.mxu0 %v1690
        %2060 = vmatprep.subr.mxu0 %v1695
        %2061 = vmatpush1.msra.mxu0 %v1694
        %2062 = vmatprep.subr.mxu0 %v1699
        %2063 = vmatpush1.msra.mxu0 %v1698
        %2064 = vmatprep.subr.mxu0 %v1703
        %2065 = vmatpush1.msra.mxu0 %v1702
        %2066 = vmatprep.subr.mxu0 %v1707
        %2067 = vmatpush1.msra.mxu0 %v1706
        %2068 = vmatprep.subr.mxu0 %v1711
        %2069 = vmatpush1.msra.mxu0 %v1710
        %2070 = vmatprep.subr.mxu0 %v1715
        %2071 = vmatpush1.msra.mxu0 %v1714
        %2072 = vmatprep.subr.mxu0 %v1719
        %2073 = vmatpush1.msra.mxu0 %v1718
        %2074 = vmatprep.subr.mxu0 %v1723
        %2075 = vmatpush1.msra.mxu0 %v1722
        %2076 = vmatprep.subr.mxu0 %v1727
        %2077 = vmatpush1.msra.mxu0 %v1726
        %2078 = vmatprep.subr.mxu0 %v1731
        %2079 = vmatpush1.msra.mxu0 %v1730
        %2080 = vmatprep.subr.mxu0 %v1735
        %2081 = vmatpush1.msra.mxu0 %v1734
        %2082 = vmatprep.subr.mxu0 %v1739
        %2083 = vmatpush1.msra.mxu0 %v1738
        %2084 = vmatprep.subr.mxu0 %v1743
        %2085 = vmatpush1.msra.mxu0 %v1742
        %2086 = vmatprep.subr.mxu0 %v1747
        %2087 = vmatpush1.msra.mxu0 %v1746
        %2088 = vmatprep.subr.mxu0 %v1751
        %2089 = vmatpush1.msra.mxu0 %v1750
        %2090 = vmatprep.subr.mxu0 %v1755
        %2091 = vmatpush1.msra.mxu0 %v1754
        %2092 = vmatprep.subr.mxu0 %v1759
        %2093 = vmatpush1.msra.mxu0 %v1758
        %2094 = vmatprep.subr.mxu0 %v1763
        %2095 = vmatpush1.msra.mxu0 %v1762
        %2096 = vmatprep.subr.mxu0 %v1767
        %2097 = vmatpush1.msra.mxu0 %v1766
        %2098 = vmatprep.subr.mxu0 %v1771
        %2099 = vmatpush1.msra.mxu0 %v1770
        %2100 = vmatprep.mubr.f32.mxu0 %v1633
        %2101 = vmatmul.mubr.f32.gmra.mrb[0].mxu0 %v1632
        %v2102 = vpop.f32.mrb[0].mxu0
        %v2103 = vadd.f32 %v1849, %v2102
        %v2104 = vpop.f32.mrb[0].mxu0
        %v2105 = vadd.f32 %v1853, %v2104
        %2106 = vmatprep.mubr.f32.mxu0 %v1636
        %2107 = vmatmul.mubr.f32.gmra.mrb[0].mxu0 %v1635
        %v2108 = vpop.f32.mrb[0].mxu0
        %v2109 = vadd.f32 %v1849, %v2108
        %v2110 = vpop.f32.mrb[0].mxu0
        %v2111 = vadd.f32 %v1853, %v2110
        %2112 = vmatprep.mubr.f32.mxu0 %v1639
        %2113 = vmatmul.mubr.f32.gmra.mrb[0].mxu0 %v1638
        %v2114 = vpop.f32.mrb[0].mxu0
        %v2115 = vadd.f32 %v1849, %v2114
        %v2116 = vpop.f32.mrb[0].mxu0
        %v2117 = vadd.f32 %v1853, %v2116
        %2118 = vmatprep.mubr.f32.mxu0 %v1642
        %2119 = vmatmul.mubr.f32.gmra.mrb[0].mxu0 %v1641
        %v2120 = vpop.f32.mrb[0].mxu0
        %v2121 = vadd.f32 %v1849, %v2120
        %v2122 = vpop.f32.mrb[0].mxu0
        %v2123 = vadd.f32 %v1853, %v2122
        %2124 = vdwg.mxu0
        %2125 = vmatprep.subr.mxu0 %v1775
        %2126 = vmatpush1.msra.mxu0 %v1774
        %2127 = vmatprep.subr.mxu0 %v1779
        %2128 = vmatpush1.msra.mxu0 %v1778
        %2129 = vmatprep.subr.mxu0 %v1783
        %2130 = vmatpush1.msra.mxu0 %v1782
        %2131 = vmatprep.subr.mxu0 %v1787
        %2132 = vmatpush1.msra.mxu0 %v1786
        %2133 = vmatprep.subr.mxu0 %v1791
        %2134 = vmatpush1.msra.mxu0 %v1790
        %2135 = vmatprep.subr.mxu0 %v1795
        %2136 = vmatpush1.msra.mxu0 %v1794
        %2137 = vmatprep.subr.mxu0 %v1799
        %2138 = vmatpush1.msra.mxu0 %v1798
        %2139 = vmatprep.subr.mxu0 %v1803
        %2140 = vmatpush1.msra.mxu0 %v1802
        %2141 = vmatprep.subr.mxu0 %v1807
        %2142 = vmatpush1.msra.mxu0 %v1806
        %2143 = vmatprep.subr.mxu0 %v1811
        %2144 = vmatpush1.msra.mxu0 %v1810
        %2145 = vmatprep.subr.mxu0 %v1815
        %2146 = vmatpush1.msra.mxu0 %v1814
        %2147 = vmatprep.subr.mxu0 %v1819
        %2148 = vmatpush1.msra.mxu0 %v1818
        %2149 = vmatprep.subr.mxu0 %v1823
        %2150 = vmatpush1.msra.mxu0 %v1822
        %2151 = vmatprep.subr.mxu0 %v1827
        %2152 = vmatpush1.msra.mxu0 %v1826
        %2153 = vmatprep.subr.mxu0 %v1831
        %2154 = vmatpush1.msra.mxu0 %v1830
        %2155 = vmatprep.subr.mxu0 %v1835
        %2156 = vmatpush1.msra.mxu0 %v1834
        %2157 = vmatprep.subr.mxu0 0.0
        %2158 = vmatpush1.msra.mxu0 0.0
        %2159 = vmatprep.subr.mxu0 0.0
        %2160 = vmatpush1.msra.mxu0 0.0
        %2161 = vmatprep.subr.mxu0 0.0
        %2162 = vmatpush1.msra.mxu0 0.0
        %2163 = vmatprep.subr.mxu0 0.0
        %2164 = vmatpush1.msra.mxu0 0.0
        %2165 = vmatprep.subr.mxu0 0.0
        %2166 = vmatpush1.msra.mxu0 0.0
        %2167 = vmatprep.subr.mxu0 0.0
        %2168 = vmatpush1.msra.mxu0 0.0
        %2169 = vmatprep.subr.mxu0 0.0
        %2170 = vmatpush1.msra.mxu0 0.0
        %2171 = vmatprep.subr.mxu0 0.0
        %2172 = vmatpush1.msra.mxu0 0.0
        %2173 = vmatprep.subr.mxu0 0.0
        %2174 = vmatpush1.msra.mxu0 0.0
        %2175 = vmatprep.subr.mxu0 0.0
        %2176 = vmatpush1.msra.mxu0 0.0
        %2177 = vmatprep.subr.mxu0 0.0
        %2178 = vmatpush1.msra.mxu0 0.0
        %2179 = vmatprep.subr.mxu0 0.0
        %2180 = vmatpush1.msra.mxu0 0.0
        %2181 = vmatprep.subr.mxu0 0.0
        %2182 = vmatpush1.msra.mxu0 0.0
        %2183 = vmatprep.subr.mxu0 0.0
        %2184 = vmatpush1.msra.mxu0 0.0
        %2185 = vmatprep.subr.mxu0 0.0
        %2186 = vmatpush1.msra.mxu0 0.0
        %2187 = vmatprep.subr.mxu0 0.0
        %2188 = vmatpush1.msra.mxu0 0.0
        %2189 = vmatprep.mubr.f32.mxu0 0.0
        %2190 = vmatmul.mubr.f32.gmra.mrb[0].mxu0 %v1634
        %v2191 = vpop.f32.mrb[0].mxu0
        %v2192 = vadd.f32 %v2103, %v2191
        %v2193 = vpop.f32.mrb[0].mxu0
        %v2194 = vadd.f32 %v2105, %v2193
        %2195 = vmatprep.mubr.f32.mxu0 0.0
        %2196 = vmatmul.mubr.f32.gmra.mrb[0].mxu0 %v1637
        %v2197 = vpop.f32.mrb[0].mxu0
        %v2198 = vadd.f32 %v2109, %v2197
        %v2199 = vpop.f32.mrb[0].mxu0
        %v2200 = vadd.f32 %v2111, %v2199
        %2201 = vmatprep.mubr.f32.mxu0 0.0
        %2202 = vmatmul.mubr.f32.gmra.mrb[0].mxu0 %v1640
        %v2203 = vpop.f32.mrb[0].mxu0
        %v2204 = vadd.f32 %v2115, %v2203
        %v2205 = vpop.f32.mrb[0].mxu0
        %v2206 = vadd.f32 %v2117, %v2205
        %2207 = vmatprep.mubr.f32.mxu0 0.0
        %2208 = vmatmul.mubr.f32.gmra.mrb[0].mxu0 %v1643
        %v2209 = vpop.f32.mrb[0].mxu0
        %v2210 = vadd.f32 %v2121, %v2209
        %v2211 = vpop.f32.mrb[0].mxu0
        %v2212 = vadd.f32 %v2123, %v2211
        %2213 = vdwg.mxu0
        %v2214 = vmax.f32 %v2014, 0.0
        %v2215 = vmax.f32 %v2016, 0.0
        %v2216 = vmax.f32 %v2020, 0.0
        %v2217 = vmax.f32 %v2022, 0.0
        %v2218 = vmax.f32 %v2026, 0.0
        %v2219 = vmax.f32 %v2028, 0.0
        %v2220 = vmax.f32 %v2032, 0.0
        %v2221 = vmax.f32 %v2034, 0.0
        %v2222 = vld [vmem:[#allocation8] sm:$0xff]
        %v2223 = vld [vmem:[#allocation8 + $0x8] sm:$0xff]
        %v2224 = vld [vmem:[#allocation8 + $0x10] sm:$0xff]
        %v2225 = vld [vmem:[#allocation8 + $0x18] sm:$0xff]
        %v2226 = vld [vmem:[#allocation8 + $0x20] sm:$0xff]
        %v2227 = vld [vmem:[#allocation8 + $0x28] sm:$0xff]
        %v2228 = vld [vmem:[#allocation8 + $0x30] sm:$0xff]
        %v2229 = vld [vmem:[#allocation8 + $0x38] sm:$0xff]
        %v2230 = vld [vmem:[#allocation8 + $0x40] sm:$0xff]
        %v2231 = vld [vmem:[#allocation8 + $0x48] sm:$0xff]
        %v2232 = vld [vmem:[#allocation8 + $0x50] sm:$0xff]
        %v2233 = vld [vmem:[#allocation8 + $0x58] sm:$0xff]
        %v2234 = vld [vmem:[#allocation8 + $0x60] sm:$0xff]
        %v2235 = vld [vmem:[#allocation8 + $0x68] sm:$0xff]
        %v2236 = vld [vmem:[#allocation8 + $0x70] sm:$0xff]
        %v2237 = vld [vmem:[#allocation8 + $0x78] sm:$0xff]
        %v2238 = vld [vmem:[#allocation8 + $0x80] sm:$0xff]
        %v2239 = vld [vmem:[#allocation8 + $0x88] sm:$0xff]
        %v2240 = vld [vmem:[#allocation8 + $0x90] sm:$0xff]
        %v2241 = vld [vmem:[#allocation8 + $0x98] sm:$0xff]
        %v2242 = vld [vmem:[#allocation8 + $0xa0] sm:$0xff]
        %v2243 = vld [vmem:[#allocation8 + $0xa8] sm:$0xff]
        %v2244 = vld [vmem:[#allocation8 + $0xb0] sm:$0xff]
        %v2245 = vld [vmem:[#allocation8 + $0xb8] sm:$0xff]
        %v2246 = vld [vmem:[#allocation8 + $0xc0] sm:$0xff]
        %v2247 = vld [vmem:[#allocation8 + $0xc8] sm:$0xff]
        %v2248 = vld [vmem:[#allocation8 + $0xd0] sm:$0xff]
        %v2249 = vld [vmem:[#allocation8 + $0xd8] sm:$0xff]
        %v2250 = vld [vmem:[#allocation8 + $0xe0] sm:$0xff]
        %v2251 = vld [vmem:[#allocation8 + $0xe8] sm:$0xff]
        %v2252 = vld [vmem:[#allocation8 + $0xf0] sm:$0xff]
        %v2253 = vld [vmem:[#allocation8 + $0xf8] sm:$0xff]
        %v2254 = vld [vmem:[%s9] sm:$0x1]
        %v2256 = vlaneseq
        %v2257 = vshrl.u32 %v2256, 7
        %v2258 = vsub.s32 0, %v2257
        %v2259 = vrot.slane %v2254, %v2258
        %2261 = vmatprep.subr.mxu0 0.0
        %2262 = vmatpush1.msra.mxu0 %v2222
        %2263 = vmatprep.subr.mxu0 0.0
        %2264 = vmatpush1.msra.mxu0 %v2223
        %2265 = vmatprep.subr.mxu0 0.0
        %2266 = vmatpush1.msra.mxu0 %v2224
        %2267 = vmatprep.subr.mxu0 0.0
        %2268 = vmatpush1.msra.mxu0 %v2225
        %2269 = vmatprep.subr.mxu0 0.0
        %2270 = vmatpush1.msra.mxu0 %v2226
        %2271 = vmatprep.subr.mxu0 0.0
        %2272 = vmatpush1.msra.mxu0 %v2227
        %2273 = vmatprep.subr.mxu0 0.0
        %2274 = vmatpush1.msra.mxu0 %v2228
        %2275 = vmatprep.subr.mxu0 0.0
        %2276 = vmatpush1.msra.mxu0 %v2229
        %2277 = vmatprep.subr.mxu0 0.0
        %2278 = vmatpush1.msra.mxu0 %v2230
        %2279 = vmatprep.subr.mxu0 0.0
        %2280 = vmatpush1.msra.mxu0 %v2231
        %2281 = vmatprep.subr.mxu0 0.0
        %2282 = vmatpush1.msra.mxu0 %v2232
        %2283 = vmatprep.subr.mxu0 0.0
        %2284 = vmatpush1.msra.mxu0 %v2233
        %2285 = vmatprep.subr.mxu0 0.0
        %2286 = vmatpush1.msra.mxu0 %v2234
        %2287 = vmatprep.subr.mxu0 0.0
        %2288 = vmatpush1.msra.mxu0 %v2235
        %2289 = vmatprep.subr.mxu0 0.0
        %2290 = vmatpush1.msra.mxu0 %v2236
        %2291 = vmatprep.subr.mxu0 0.0
        %2292 = vmatpush1.msra.mxu0 %v2237
        %2293 = vmatprep.subr.mxu0 0.0
        %2294 = vmatpush1.msra.mxu0 %v2238
        %2295 = vmatprep.subr.mxu0 0.0
        %2296 = vmatpush1.msra.mxu0 %v2239
        %2297 = vmatprep.subr.mxu0 0.0
        %2298 = vmatpush1.msra.mxu0 %v2240
        %2299 = vmatprep.subr.mxu0 0.0
        %2300 = vmatpush1.msra.mxu0 %v2241
        %2301 = vmatprep.subr.mxu0 0.0
        %2302 = vmatpush1.msra.mxu0 %v2242
        %2303 = vmatprep.subr.mxu0 0.0
        %2304 = vmatpush1.msra.mxu0 %v2243
        %2305 = vmatprep.subr.mxu0 0.0
        %2306 = vmatpush1.msra.mxu0 %v2244
        %2307 = vmatprep.subr.mxu0 0.0
        %2308 = vmatpush1.msra.mxu0 %v2245
        %2309 = vmatprep.subr.mxu0 0.0
        %2310 = vmatpush1.msra.mxu0 %v2246
        %2311 = vmatprep.subr.mxu0 0.0
        %2312 = vmatpush1.msra.mxu0 %v2247
        %2313 = vmatprep.subr.mxu0 0.0
        %2314 = vmatpush1.msra.mxu0 %v2248
        %2315 = vmatprep.subr.mxu0 0.0
        %2316 = vmatpush1.msra.mxu0 %v2249
        %2317 = vmatprep.subr.mxu0 0.0
        %2318 = vmatpush1.msra.mxu0 %v2250
        %2319 = vmatprep.subr.mxu0 0.0
        %2320 = vmatpush1.msra.mxu0 %v2251
        %2321 = vmatprep.subr.mxu0 0.0
        %2322 = vmatpush1.msra.mxu0 %v2252
        %2323 = vmatprep.subr.mxu0 0.0
        %2324 = vmatpush1.msra.mxu0 %v2253
        %2325 = vmatprep.mubr.f32.mxu0 %v2215
        %2326 = vmatmul.mubr.f32.gmra.mrb[0].mxu0 %v2214
        %v2327 = vpop.f32.mrb[0].mxu0
        %v2328 = vadd.f32 %v2259, %v2327
        %v2329 = vpop.f32.mrb[0].mxu0
        %2330 = vmatprep.mubr.f32.mxu0 %v2217
        %2331 = vmatmul.mubr.f32.gmra.mrb[0].mxu0 %v2216
        %v2332 = vpop.f32.mrb[0].mxu0
        %v2333 = vadd.f32 %v2259, %v2332
        %v2334 = vpop.f32.mrb[0].mxu0
        %2335 = vmatprep.mubr.f32.mxu0 %v2219
        %2336 = vmatmul.mubr.f32.gmra.mrb[0].mxu0 %v2218
        %v2337 = vpop.f32.mrb[0].mxu0
        %v2338 = vadd.f32 %v2259, %v2337
        %v2339 = vpop.f32.mrb[0].mxu0
        %2340 = vmatprep.mubr.f32.mxu0 %v2221
        %2341 = vmatmul.mubr.f32.gmra.mrb[0].mxu0 %v2220
        %v2342 = vpop.f32.mrb[0].mxu0
        %v2343 = vadd.f32 %v2259, %v2342
        %v2344 = vpop.f32.mrb[0].mxu0
        %2345 = vdwg.mxu0
        %v2346 = vmax.f32 %v2328, 0.0
        %v2347 = vmax.f32 %v2333, 0.0
        %v2348 = vmax.f32 %v2338, 0.0
        %v2349 = vmax.f32 %v2343, 0.0
        %2350 = vmax.xlane.f32.xlu0 %v2192
        %v2351 = vpop.xlane.xlu0 %2350
        %2352 = vmax.xlane.f32.xlu0 %v2198
        %v2353 = vpop.xlane.xlu0 %2352
        %2354 = vmax.xlane.f32.xlu0 %v2204
        %v2355 = vpop.xlane.xlu0 %2354
        %2356 = vmax.xlane.f32.xlu0 %v2210
        %v2357 = vpop.xlane.xlu0 %2356
        %v2358 = vsub.f32 %v2192, %v2351
        %v2359 = vsub.f32 %v2198, %v2353
        %v2360 = vsub.f32 %v2204, %v2355
        %v2361 = vsub.f32 %v2210, %v2357
        %v2362 = vmul.f32 %v2358, 1.442695
        %v2363 = vpow.pop %v2362
        %v2364 = vmul.f32 %v2359, 1.442695
        %v2365 = vpow.pop %v2364
        %v2366 = vmul.f32 %v2360, 1.442695
        %v2367 = vpow.pop %v2366
        %v2368 = vmul.f32 %v2361, 1.442695
        %v2369 = vpow.pop %v2368
        %2370 = vadd.xlane.f32.xlu0 %v2363
        %v2371 = vpop.xlane.xlu0 %2370
        %2372 = vadd.xlane.f32.xlu0 %v2365
        %v2373 = vpop.xlane.xlu0 %2372
        %2374 = vadd.xlane.f32.xlu0 %v2367
        %v2375 = vpop.xlane.xlu0 %2374
        %2376 = vadd.xlane.f32.xlu0 %v2369
        %v2377 = vpop.xlane.xlu0 %2376
        %v2378 = vrcp.pop %v2371
        %v2379 = vrcp.pop %v2373
        %v2380 = vrcp.pop %v2375
        %v2381 = vrcp.pop %v2377
        %v2382 = vmul.f32 %v2363, %v2378
        %v2383 = vmul.f32 %v2365, %v2379
        %v2384 = vmul.f32 %v2367, %v2380
        %v2385 = vmul.f32 %v2369, %v2381
        %2386 = vmax.xlane.f32.xlu0 %v2194
        %v2387 = vpop.xlane.xlu0 %2386
        %2388 = vmax.xlane.f32.xlu0 %v2200
        %v2389 = vpop.xlane.xlu0 %2388
        %2390 = vmax.xlane.f32.xlu0 %v2206
        %v2391 = vpop.xlane.xlu0 %2390
        %2392 = vmax.xlane.f32.xlu0 %v2212
        %v2393 = vpop.xlane.xlu0 %2392
        %v2394 = vsub.f32 %v2194, %v2387
        %v2395 = vsub.f32 %v2200, %v2389
        %v2396 = vsub.f32 %v2206, %v2391
        %v2397 = vsub.f32 %v2212, %v2393
        %v2398 = vmul.f32 %v2394, 1.442695
        %v2399 = vpow.pop %v2398
        %v2400 = vmul.f32 %v2395, 1.442695
        %v2401 = vpow.pop %v2400
        %v2402 = vmul.f32 %v2396, 1.442695
        %v2403 = vpow.pop %v2402
        %v2404 = vmul.f32 %v2397, 1.442695
        %v2405 = vpow.pop %v2404
        %2406 = vadd.xlane.f32.xlu0 %v2399
        %v2407 = vpop.xlane.xlu0 %2406
        %2408 = vadd.xlane.f32.xlu0 %v2401
        %v2409 = vpop.xlane.xlu0 %2408
        %2410 = vadd.xlane.f32.xlu0 %v2403
        %v2411 = vpop.xlane.xlu0 %2410
        %2412 = vadd.xlane.f32.xlu0 %v2405
        %v2413 = vpop.xlane.xlu0 %2412
        %v2414 = vrcp.pop %v2407
        %v2415 = vrcp.pop %v2409
        %v2416 = vrcp.pop %v2411
        %v2417 = vrcp.pop %v2413
        %v2418 = vmul.f32 %v2399, %v2414
        %v2419 = vmul.f32 %v2401, %v2415
        %v2420 = vmul.f32 %v2403, %v2416
        %v2421 = vmul.f32 %v2405, %v2417
        %v2422 = vld [vmem:[#allocation10] sm:$0xff]
        %v2423 = vld [vmem:[#allocation10 + $0x8] sm:$0xff]
        %v2424 = vld [vmem:[#allocation10 + $0x10] sm:$0xff]
        %v2425 = vld [vmem:[#allocation10 + $0x18] sm:$0xff]
        %v2426 = vld [vmem:[#allocation10 + $0x20] sm:$0xff]
        %v2427 = vld [vmem:[#allocation10 + $0x28] sm:$0xff]
        %v2428 = vld [vmem:[#allocation10 + $0x30] sm:$0xff]
        %v2429 = vld [vmem:[#allocation10 + $0x38] sm:$0xff]
        %v2430 = vld [vmem:[#allocation10 + $0x40] sm:$0xff]
        %v2431 = vld [vmem:[#allocation10 + $0x48] sm:$0xff]
        %v2432 = vld [vmem:[#allocation10 + $0x50] sm:$0xff]
        %v2433 = vld [vmem:[#allocation10 + $0x58] sm:$0xff]
        %v2434 = vld [vmem:[#allocation10 + $0x60] sm:$0xff]
        %v2435 = vld [vmem:[#allocation10 + $0x68] sm:$0xff]
        %v2436 = vld [vmem:[#allocation10 + $0x70] sm:$0xff]
        %v2437 = vld [vmem:[#allocation10 + $0x78] sm:$0xff]
        %v2438 = vld [vmem:[#allocation10 + $0x80] sm:$0xff]
        %v2439 = vld [vmem:[#allocation10 + $0x88] sm:$0xff]
        %v2440 = vld [vmem:[#allocation10 + $0x90] sm:$0xff]
        %v2441 = vld [vmem:[#allocation10 + $0x98] sm:$0xff]
        %v2442 = vld [vmem:[#allocation10 + $0xa0] sm:$0xff]
        %v2443 = vld [vmem:[#allocation10 + $0xa8] sm:$0xff]
        %v2444 = vld [vmem:[#allocation10 + $0xb0] sm:$0xff]
        %v2445 = vld [vmem:[#allocation10 + $0xb8] sm:$0xff]
        %v2446 = vld [vmem:[#allocation10 + $0xc0] sm:$0xff]
        %v2447 = vld [vmem:[#allocation10 + $0xc8] sm:$0xff]
        %v2448 = vld [vmem:[#allocation10 + $0xd0] sm:$0xff]
        %v2449 = vld [vmem:[#allocation10 + $0xd8] sm:$0xff]
        %v2450 = vld [vmem:[#allocation10 + $0xe0] sm:$0xff]
        %v2451 = vld [vmem:[#allocation10 + $0xe8] sm:$0xff]
        %v2452 = vld [vmem:[#allocation10 + $0xf0] sm:$0xff]
        %v2453 = vld [vmem:[#allocation10 + $0xf8] sm:$0xff]
        %v2454 = vld [vmem:[#allocation10 + $0x100] sm:$0xff]
        %v2455 = vld [vmem:[#allocation10 + $0x108] sm:$0xff]
        %v2456 = vld [vmem:[#allocation10 + $0x110] sm:$0xff]
        %v2457 = vld [vmem:[#allocation10 + $0x118] sm:$0xff]
        %v2458 = vld [vmem:[#allocation10 + $0x120] sm:$0xff]
        %v2459 = vld [vmem:[#allocation10 + $0x128] sm:$0xff]
        %v2460 = vld [vmem:[#allocation10 + $0x130] sm:$0xff]
        %v2461 = vld [vmem:[#allocation10 + $0x138] sm:$0xff]
        %v2462 = vld [vmem:[#allocation10 + $0x140] sm:$0xff]
        %v2463 = vld [vmem:[#allocation10 + $0x148] sm:$0xff]
        %v2464 = vld [vmem:[#allocation10 + $0x150] sm:$0xff]
        %v2465 = vld [vmem:[#allocation10 + $0x158] sm:$0xff]
        %v2466 = vld [vmem:[#allocation10 + $0x160] sm:$0xff]
        %v2467 = vld [vmem:[#allocation10 + $0x168] sm:$0xff]
        %v2468 = vld [vmem:[#allocation10 + $0x170] sm:$0xff]
        %v2469 = vld [vmem:[#allocation10 + $0x178] sm:$0xff]
        %v2470 = vld [vmem:[#allocation10 + $0x180] sm:$0xff]
        %v2471 = vld [vmem:[#allocation10 + $0x188] sm:$0xff]
        %v2472 = vld [vmem:[#allocation10 + $0x190] sm:$0xff]
        %v2473 = vld [vmem:[#allocation10 + $0x198] sm:$0xff]
        %v2474 = vld [vmem:[#allocation10 + $0x1a0] sm:$0xff]
        %v2475 = vld [vmem:[#allocation10 + $0x1a8] sm:$0xff]
        %v2476 = vld [vmem:[#allocation10 + $0x1b0] sm:$0xff]
        %v2477 = vld [vmem:[#allocation10 + $0x1b8] sm:$0xff]
        %v2478 = vld [vmem:[#allocation10 + $0x1c0] sm:$0xff]
        %v2479 = vld [vmem:[#allocation10 + $0x1c8] sm:$0xff]
        %v2480 = vld [vmem:[#allocation10 + $0x1d0] sm:$0xff]
        %v2481 = vld [vmem:[#allocation10 + $0x1d8] sm:$0xff]
        %v2482 = vld [vmem:[#allocation10 + $0x1e0] sm:$0xff]
        %v2483 = vld [vmem:[#allocation10 + $0x1e8] sm:$0xff]
        %v2484 = vld [vmem:[#allocation10 + $0x1f0] sm:$0xff]
        %v2485 = vld [vmem:[#allocation10 + $0x1f8] sm:$0xff]
        %2486 = vmatprep.subr.mxu0 %v2423
        %2487 = vmatpush1.msra.mxu0 %v2422
        %2488 = vmatprep.subr.mxu0 %v2425
        %2489 = vmatpush1.msra.mxu0 %v2424
        %2490 = vmatprep.subr.mxu0 %v2427
        %2491 = vmatpush1.msra.mxu0 %v2426
        %2492 = vmatprep.subr.mxu0 %v2429
        %2493 = vmatpush1.msra.mxu0 %v2428
        %2494 = vmatprep.subr.mxu0 %v2431
        %2495 = vmatpush1.msra.mxu0 %v2430
        %2496 = vmatprep.subr.mxu0 %v2433
        %2497 = vmatpush1.msra.mxu0 %v2432
        %2498 = vmatprep.subr.mxu0 %v2435
        %2499 = vmatpush1.msra.mxu0 %v2434
        %2500 = vmatprep.subr.mxu0 %v2437
        %2501 = vmatpush1.msra.mxu0 %v2436
        %2502 = vmatprep.subr.mxu0 %v2439
        %2503 = vmatpush1.msra.mxu0 %v2438
        %2504 = vmatprep.subr.mxu0 %v2441
        %2505 = vmatpush1.msra.mxu0 %v2440
        %2506 = vmatprep.subr.mxu0 %v2443
        %2507 = vmatpush1.msra.mxu0 %v2442
        %2508 = vmatprep.subr.mxu0 %v2445
        %2509 = vmatpush1.msra.mxu0 %v2444
        %2510 = vmatprep.subr.mxu0 %v2447
        %2511 = vmatpush1.msra.mxu0 %v2446
        %2512 = vmatprep.subr.mxu0 %v2449
        %2513 = vmatpush1.msra.mxu0 %v2448
        %2514 = vmatprep.subr.mxu0 %v2451
        %2515 = vmatpush1.msra.mxu0 %v2450
        %2516 = vmatprep.subr.mxu0 %v2453
        %2517 = vmatpush1.msra.mxu0 %v2452
        %2518 = vmatprep.subr.mxu0 %v2455
        %2519 = vmatpush1.msra.mxu0 %v2454
        %2520 = vmatprep.subr.mxu0 %v2457
        %2521 = vmatpush1.msra.mxu0 %v2456
        %2522 = vmatprep.subr.mxu0 %v2459
        %2523 = vmatpush1.msra.mxu0 %v2458
        %2524 = vmatprep.subr.mxu0 %v2461
        %2525 = vmatpush1.msra.mxu0 %v2460
        %2526 = vmatprep.subr.mxu0 %v2463
        %2527 = vmatpush1.msra.mxu0 %v2462
        %2528 = vmatprep.subr.mxu0 %v2465
        %2529 = vmatpush1.msra.mxu0 %v2464
        %2530 = vmatprep.subr.mxu0 %v2467
        %2531 = vmatpush1.msra.mxu0 %v2466
        %2532 = vmatprep.subr.mxu0 %v2469
        %2533 = vmatpush1.msra.mxu0 %v2468
        %2534 = vmatprep.subr.mxu0 %v2471
        %2535 = vmatpush1.msra.mxu0 %v2470
        %2536 = vmatprep.subr.mxu0 %v2473
        %2537 = vmatpush1.msra.mxu0 %v2472
        %2538 = vmatprep.subr.mxu0 %v2475
        %2539 = vmatpush1.msra.mxu0 %v2474
        %2540 = vmatprep.subr.mxu0 %v2477
        %2541 = vmatpush1.msra.mxu0 %v2476
        %2542 = vmatprep.subr.mxu0 %v2479
        %2543 = vmatpush1.msra.mxu0 %v2478
        %2544 = vmatprep.subr.mxu0 %v2481
        %2545 = vmatpush1.msra.mxu0 %v2480
        %2546 = vmatprep.subr.mxu0 %v2483
        %2547 = vmatpush1.msra.mxu0 %v2482
        %2548 = vmatprep.subr.mxu0 %v2485
        %2549 = vmatpush1.msra.mxu0 %v2484
        %2550 = vmatprep.mubr.f32.mxu0 %v2418
        %2551 = vmatmul.mubr.f32.gmra.mrb[0].mxu0 %v2382
        %v2552 = vpop.f32.mrb[0].mxu0
        %v2553 = vadd.f32 0.0, %v2552
        %v2554 = vpop.f32.mrb[0].mxu0
        %v2555 = vadd.f32 0.0, %v2554
        %2556 = vmatprep.mubr.f32.mxu0 %v2419
        %2557 = vmatmul.mubr.f32.gmra.mrb[0].mxu0 %v2383
        %v2558 = vpop.f32.mrb[0].mxu0
        %v2559 = vadd.f32 0.0, %v2558
        %v2560 = vpop.f32.mrb[0].mxu0
        %v2561 = vadd.f32 0.0, %v2560
        %2562 = vmatprep.mubr.f32.mxu0 %v2420
        %2563 = vmatmul.mubr.f32.gmra.mrb[0].mxu0 %v2384
        %v2564 = vpop.f32.mrb[0].mxu0
        %v2565 = vadd.f32 0.0, %v2564
        %v2566 = vpop.f32.mrb[0].mxu0
        %v2567 = vadd.f32 0.0, %v2566
        %2568 = vmatprep.mubr.f32.mxu0 %v2421
        %2569 = vmatmul.mubr.f32.gmra.mrb[0].mxu0 %v2385
        %v2570 = vpop.f32.mrb[0].mxu0
        %v2571 = vadd.f32 0.0, %v2570
        %v2572 = vpop.f32.mrb[0].mxu0
        %v2573 = vadd.f32 0.0, %v2572
        %2574 = vdwg.mxu0
        %v2575 = vmul.f32 %v2553, %v2346
        %v2576 = vmul.f32 %v2555, %v2346
        %v2577 = vmul.f32 %v2559, %v2347
        %v2578 = vmul.f32 %v2561, %v2347
        %v2579 = vmul.f32 %v2565, %v2348
        %v2580 = vmul.f32 %v2567, %v2348
        %v2581 = vmul.f32 %v2571, %v2349
        %v2582 = vmul.f32 %v2573, %v2349
        %v2583 = vld [vmem:[%s11] sm:$0xff]
        %v2584 = vld [vmem:[%s11 + $0x8] sm:$0xff]
        %v2585 = vld [vmem:[%s11 + $0x10] sm:$0xff]
        %v2586 = vld [vmem:[%s11 + $0x18] sm:$0xff]
        %v2587 = vld [vmem:[%s11 + $0x20] sm:$0xff]
        %v2588 = vld [vmem:[%s11 + $0x28] sm:$0xff]
        %v2589 = vld [vmem:[%s11 + $0x30] sm:$0xff]
        %v2590 = vld [vmem:[%s11 + $0x38] sm:$0xff]
        %v2591 = vld [vmem:[%s11 + $0x40] sm:$0xff]
        %v2592 = vld [vmem:[%s11 + $0x48] sm:$0xff]
        %v2593 = vld [vmem:[%s11 + $0x50] sm:$0xff]
        %v2594 = vld [vmem:[%s11 + $0x58] sm:$0xff]
        %v2595 = vld [vmem:[%s11 + $0x60] sm:$0xff]
        %v2596 = vld [vmem:[%s11 + $0x68] sm:$0xff]
        %v2597 = vld [vmem:[%s11 + $0x70] sm:$0xff]
        %v2598 = vld [vmem:[%s11 + $0x78] sm:$0xff]
        %v2599 = vld [vmem:[%s11 + $0x80] sm:$0xff]
        %v2600 = vld [vmem:[%s11 + $0x88] sm:$0xff]
        %v2601 = vld [vmem:[%s11 + $0x90] sm:$0xff]
        %v2602 = vld [vmem:[%s11 + $0x98] sm:$0xff]
        %v2603 = vld [vmem:[%s11 + $0xa0] sm:$0xff]
        %v2604 = vld [vmem:[%s11 + $0xa8] sm:$0xff]
        %v2605 = vld [vmem:[%s11 + $0xb0] sm:$0xff]
        %v2606 = vld [vmem:[%s11 + $0xb8] sm:$0xff]
        %v2607 = vld [vmem:[%s11 + $0xc0] sm:$0xff]
        %v2608 = vld [vmem:[%s11 + $0xc8] sm:$0xff]
        %v2609 = vld [vmem:[%s11 + $0xd0] sm:$0xff]
        %v2610 = vld [vmem:[%s11 + $0xd8] sm:$0xff]
        %v2611 = vld [vmem:[%s11 + $0xe0] sm:$0xff]
        %v2612 = vld [vmem:[%s11 + $0xe8] sm:$0xff]
        %v2613 = vld [vmem:[%s11 + $0xf0] sm:$0xff]
        %v2614 = vld [vmem:[%s11 + $0xf8] sm:$0xff]
        %v2615 = vld [vmem:[%s12] sm:$0x1]
        %v2617 = vlaneseq
        %v2618 = vshrl.u32 %v2617, 7
        %v2619 = vsub.s32 0, %v2618
        %v2620 = vrot.slane %v2615, %v2619
        %2622 = vmatprep.subr.mxu0 0.0
        %2623 = vmatpush1.msra.mxu0 %v2583
        %2624 = vmatprep.subr.mxu0 0.0
        %2625 = vmatpush1.msra.mxu0 %v2584
        %2626 = vmatprep.subr.mxu0 0.0
        %2627 = vmatpush1.msra.mxu0 %v2585
        %2628 = vmatprep.subr.mxu0 0.0
        %2629 = vmatpush1.msra.mxu0 %v2586
        %2630 = vmatprep.subr.mxu0 0.0
        %2631 = vmatpush1.msra.mxu0 %v2587
        %2632 = vmatprep.subr.mxu0 0.0
        %2633 = vmatpush1.msra.mxu0 %v2588
        %2634 = vmatprep.subr.mxu0 0.0
        %2635 = vmatpush1.msra.mxu0 %v2589
        %2636 = vmatprep.subr.mxu0 0.0
        %2637 = vmatpush1.msra.mxu0 %v2590
        %2638 = vmatprep.subr.mxu0 0.0
        %2639 = vmatpush1.msra.mxu0 %v2591
        %2640 = vmatprep.subr.mxu0 0.0
        %2641 = vmatpush1.msra.mxu0 %v2592
        %2642 = vmatprep.subr.mxu0 0.0
        %2643 = vmatpush1.msra.mxu0 %v2593
        %2644 = vmatprep.subr.mxu0 0.0
        %2645 = vmatpush1.msra.mxu0 %v2594
        %2646 = vmatprep.subr.mxu0 0.0
        %2647 = vmatpush1.msra.mxu0 %v2595
        %2648 = vmatprep.subr.mxu0 0.0
        %2649 = vmatpush1.msra.mxu0 %v2596
        %2650 = vmatprep.subr.mxu0 0.0
        %2651 = vmatpush1.msra.mxu0 %v2597
        %2652 = vmatprep.subr.mxu0 0.0
        %2653 = vmatpush1.msra.mxu0 %v2598
        %2654 = vmatprep.subr.mxu0 0.0
        %2655 = vmatpush1.msra.mxu0 %v2599
        %2656 = vmatprep.subr.mxu0 0.0
        %2657 = vmatpush1.msra.mxu0 %v2600
        %2658 = vmatprep.subr.mxu0 0.0
        %2659 = vmatpush1.msra.mxu0 %v2601
        %2660 = vmatprep.subr.mxu0 0.0
        %2661 = vmatpush1.msra.mxu0 %v2602
        %2662 = vmatprep.subr.mxu0 0.0
        %2663 = vmatpush1.msra.mxu0 %v2603
        %2664 = vmatprep.subr.mxu0 0.0
        %2665 = vmatpush1.msra.mxu0 %v2604
        %2666 = vmatprep.subr.mxu0 0.0
        %2667 = vmatpush1.msra.mxu0 %v2605
        %2668 = vmatprep.subr.mxu0 0.0
        %2669 = vmatpush1.msra.mxu0 %v2606
        %2670 = vmatprep.subr.mxu0 0.0
        %2671 = vmatpush1.msra.mxu0 %v2607
        %2672 = vmatprep.subr.mxu0 0.0
        %2673 = vmatpush1.msra.mxu0 %v2608
        %2674 = vmatprep.subr.mxu0 0.0
        %2675 = vmatpush1.msra.mxu0 %v2609
        %2676 = vmatprep.subr.mxu0 0.0
        %2677 = vmatpush1.msra.mxu0 %v2610
        %2678 = vmatprep.subr.mxu0 0.0
        %2679 = vmatpush1.msra.mxu0 %v2611
        %2680 = vmatprep.subr.mxu0 0.0
        %2681 = vmatpush1.msra.mxu0 %v2612
        %2682 = vmatprep.subr.mxu0 0.0
        %2683 = vmatpush1.msra.mxu0 %v2613
        %2684 = vmatprep.subr.mxu0 0.0
        %2685 = vmatpush1.msra.mxu0 %v2614
        %2686 = vmatprep.mubr.f32.mxu0 %v2576
        %2687 = vmatmul.mubr.f32.gmra.mrb[0].mxu0 %v2575
        %v2688 = vpop.f32.mrb[0].mxu0
        %v2689 = vadd.f32 %v2620, %v2688
        %v2690 = vpop.f32.mrb[0].mxu0
        %2691 = vmatprep.mubr.f32.mxu0 %v2578
        %2692 = vmatmul.mubr.f32.gmra.mrb[0].mxu0 %v2577
        %v2693 = vpop.f32.mrb[0].mxu0
        %v2694 = vadd.f32 %v2620, %v2693
        %v2695 = vpop.f32.mrb[0].mxu0
        %2696 = vmatprep.mubr.f32.mxu0 %v2580
        %2697 = vmatmul.mubr.f32.gmra.mrb[0].mxu0 %v2579
        %v2698 = vpop.f32.mrb[0].mxu0
        %v2699 = vadd.f32 %v2620, %v2698
        %v2700 = vpop.f32.mrb[0].mxu0
        %2701 = vmatprep.mubr.f32.mxu0 %v2582
        %2702 = vmatmul.mubr.f32.gmra.mrb[0].mxu0 %v2581
        %v2703 = vpop.f32.mrb[0].mxu0
        %v2704 = vadd.f32 %v2620, %v2703
        %v2705 = vpop.f32.mrb[0].mxu0
        %2706 = vdwg.mxu0
        %v2707 = vmax.f32 %v2689, 0.0
        %v2708 = vmax.f32 %v2694, 0.0
        %v2709 = vmax.f32 %v2699, 0.0
        %v2710 = vmax.f32 %v2704, 0.0
        %v2711 = vld [vmem:[%s13] sm:$0xff]
        %v2712 = vld [vmem:[%s13 + $0x8] sm:$0xff]
        %v2713 = vld [vmem:[%s14] sm:$0x1]
        %v2715 = vlaneseq
        %v2716 = vshrl.u32 %v2715, 7
        %v2717 = vsub.s32 0, %v2716
        %v2718 = vrot.slane %v2713, %v2717
        %vm2720 = vcmask 130048
        %v2722 = vsel %vm2720, %v2707, 0
        %v2725 = vsel %vm2720, %v2708, 0
        %v2728 = vsel %vm2720, %v2709, 0
        %v2731 = vsel %vm2720, %v2710, 0
        %2733 = vmatprep.subr.mxu0 0.0
        %2734 = vmatpush1.msra.mxu0 %v2711
        %2735 = vmatprep.subr.mxu0 0.0
        %2736 = vmatpush1.msra.mxu0 %v2712
        %2737 = vmatprep.subr.mxu0 0.0
        %2738 = vmatpush1.msra.mxu0 0.0
        %2739 = vmatprep.subr.mxu0 0.0
        %2740 = vmatpush1.msra.mxu0 0.0
        %2741 = vmatprep.subr.mxu0 0.0
        %2742 = vmatpush1.msra.mxu0 0.0
        %2743 = vmatprep.subr.mxu0 0.0
        %2744 = vmatpush1.msra.mxu0 0.0
        %2745 = vmatprep.subr.mxu0 0.0
        %2746 = vmatpush1.msra.mxu0 0.0
        %2747 = vmatprep.subr.mxu0 0.0
        %2748 = vmatpush1.msra.mxu0 0.0
        %2749 = vmatprep.subr.mxu0 0.0
        %2750 = vmatpush1.msra.mxu0 0.0
        %2751 = vmatprep.subr.mxu0 0.0
        %2752 = vmatpush1.msra.mxu0 0.0
        %2753 = vmatprep.subr.mxu0 0.0
        %2754 = vmatpush1.msra.mxu0 0.0
        %2755 = vmatprep.subr.mxu0 0.0
        %2756 = vmatpush1.msra.mxu0 0.0
        %2757 = vmatprep.subr.mxu0 0.0
        %2758 = vmatpush1.msra.mxu0 0.0
        %2759 = vmatprep.subr.mxu0 0.0
        %2760 = vmatpush1.msra.mxu0 0.0
        %2761 = vmatprep.subr.mxu0 0.0
        %2762 = vmatpush1.msra.mxu0 0.0
        %2763 = vmatprep.subr.mxu0 0.0
        %2764 = vmatpush1.msra.mxu0 0.0
        %2765 = vmatprep.subr.mxu0 0.0
        %2766 = vmatpush1.msra.mxu0 0.0
        %2767 = vmatprep.subr.mxu0 0.0
        %2768 = vmatpush1.msra.mxu0 0.0
        %2769 = vmatprep.subr.mxu0 0.0
        %2770 = vmatpush1.msra.mxu0 0.0
        %2771 = vmatprep.subr.mxu0 0.0
        %2772 = vmatpush1.msra.mxu0 0.0
        %2773 = vmatprep.subr.mxu0 0.0
        %2774 = vmatpush1.msra.mxu0 0.0
        %2775 = vmatprep.subr.mxu0 0.0
        %2776 = vmatpush1.msra.mxu0 0.0
        %2777 = vmatprep.subr.mxu0 0.0
        %2778 = vmatpush1.msra.mxu0 0.0
        %2779 = vmatprep.subr.mxu0 0.0
        %2780 = vmatpush1.msra.mxu0 0.0
        %2781 = vmatprep.subr.mxu0 0.0
        %2782 = vmatpush1.msra.mxu0 0.0
        %2783 = vmatprep.subr.mxu0 0.0
        %2784 = vmatpush1.msra.mxu0 0.0
        %2785 = vmatprep.subr.mxu0 0.0
        %2786 = vmatpush1.msra.mxu0 0.0
        %2787 = vmatprep.subr.mxu0 0.0
        %2788 = vmatpush1.msra.mxu0 0.0
        %2789 = vmatprep.subr.mxu0 0.0
        %2790 = vmatpush1.msra.mxu0 0.0
        %2791 = vmatprep.subr.mxu0 0.0
        %2792 = vmatpush1.msra.mxu0 0.0
        %2793 = vmatprep.subr.mxu0 0.0
        %2794 = vmatpush1.msra.mxu0 0.0
        %2795 = vmatprep.subr.mxu0 0.0
        %2796 = vmatpush1.msra.mxu0 0.0
        %2797 = vmatprep.mubr.f32.mxu0 0.0
        %2798 = vmatmul.mubr.f32.gmra.mrb[0].mxu0 %v2722
        %v2799 = vpop.f32.mrb[0].mxu0
        %v2800 = vadd.f32 %v2718, %v2799
        %v2801 = vpop.f32.mrb[0].mxu0
        %2802 = vmatprep.mubr.f32.mxu0 0.0
        %2803 = vmatmul.mubr.f32.gmra.mrb[0].mxu0 %v2725
        %v2804 = vpop.f32.mrb[0].mxu0
        %v2805 = vadd.f32 %v2718, %v2804
        %v2806 = vpop.f32.mrb[0].mxu0
        %2807 = vmatprep.mubr.f32.mxu0 0.0
        %2808 = vmatmul.mubr.f32.gmra.mrb[0].mxu0 %v2728
        %v2809 = vpop.f32.mrb[0].mxu0
        %v2810 = vadd.f32 %v2718, %v2809
        %v2811 = vpop.f32.mrb[0].mxu0
        %2812 = vmatprep.mubr.f32.mxu0 0.0
        %2813 = vmatmul.mubr.f32.gmra.mrb[0].mxu0 %v2731
        %v2814 = vpop.f32.mrb[0].mxu0
        %v2815 = vadd.f32 %v2718, %v2814
        %v2816 = vpop.f32.mrb[0].mxu0
        %2817 = vdwg.mxu0
        %v2818 = vsub.f32 0.0, %v2800
        %v2819 = vsub.f32 0.0, %v2805
        %v2820 = vsub.f32 0.0, %v2810
        %v2821 = vsub.f32 0.0, %v2815
        %v2822 = vmul.f32 %v2818, 1.442695
        %v2823 = vpow.pop %v2822
        %v2824 = vmul.f32 %v2819, 1.442695
        %v2825 = vpow.pop %v2824
        %v2826 = vmul.f32 %v2820, 1.442695
        %v2827 = vpow.pop %v2826
        %v2828 = vmul.f32 %v2821, 1.442695
        %v2829 = vpow.pop %v2828
        %v2830 = vadd.f32 %v2823, 1.0
        %v2831 = vadd.f32 %v2825, 1.0
        %v2832 = vadd.f32 %v2827, 1.0
        %v2833 = vadd.f32 %v2829, 1.0
        %v2834 = vrcp.pop %v2830
        %v2835 = vrcp.pop %v2831
        %v2836 = vrcp.pop %v2832
        %v2837 = vrcp.pop %v2833
        %2838 = vst [vmem:[%s561] sm:$0xff] %v2834
        %2839 = vst [vmem:[%s561 + $0x8] sm:$0xff] %v2835
        %2840 = vst [vmem:[%s561 + $0x10] sm:$0xff] %v2836
        %2841 = vst [vmem:[%s561 + $0x18] sm:$0xff] %v2837
        %s2842 = sand.u32 %s360, 1
        %s2843 = scalar_lea.sflag [#allocation4], %s2842
        %s2844 = sand.u32 %s360, 1
        %s2845 = smul.addr %s2844, 32
        %s2846 = scalar_lea.vmem [#allocation11], %s2845
        // Predicated region
        $region101: #{tpu_custom_call.1} parent=79 // pred_check
          %p2847 = pneg %p370
        $region102: #{tpu_custom_call.1} parent=79 // pred_check_branch
          %2849 = sbr.rel (%p2847) target = $region104
        $region103: #{tpu_custom_call.1} parent=79 // pred_region
          %s2850 = smul.u32 4, %s32
          %s2852 = ssub.s32 512, 512
          %2853 = vsyncadd %s2843, %s2852
          %s2854 = smul.addr %s2850, 128
          %s2855 = scalar_lea.hbm %s15, %s2854
          %s2856 = sshll.u32 %s2846, 4
          %s2857 = int_to_ptr.vmem [resolvable:$true] %s2856
          %2862 = dma.vmem_to_hbm [thread:$0]  %s2857, 512, %s2855, %s2843, 128, 128, 8
        $region104: #{tpu_custom_call.1} parent=79 // pred_fallthru
          _
      $region80: #{tpu_custom_call.1} parent=5 // pred_fallthru
        _
      %p2863 = scmp.le.s32.totalorder 2, %s27
      // Predicated region
      $region105: #{tpu_custom_call.1} parent=5 // pred_check
        %p2864 = pneg %p2863
      $region106: #{tpu_custom_call.1} parent=5 // pred_check_branch
        %2866 = sbr.rel (%p2864) target = $region108
      $region107: #{tpu_custom_call.1} parent=5 // pred_region
        %s2867 = ssub.s32 %s27, 2
        // Predicated region
        $region109: #{tpu_custom_call.1} parent=107 // pred_check
          %p2868 = pneg %p376
        $region110: #{tpu_custom_call.1} parent=107 // pred_check_branch
          %2870 = sbr.rel (%p2868) target = $region112
        $region111: #{tpu_custom_call.1} parent=107 // pred_region
          %s2871 = sand.u32 %s361, 1
          %s2872 = scalar_lea.sflag [#allocation4], %s2871
          %s2873 = sand.u32 %s361, 1
          %s2874 = smul.addr %s2873, 32
          %s2875 = scalar_lea.vmem [#allocation11], %s2874
          %2876 = dma.done %s2872, 512
        $region112: #{tpu_custom_call.1} parent=107 // pred_fallthru
          _
      $region108: #{tpu_custom_call.1} parent=5 // pred_fallthru
        _
    $region6: #{tpu_custom_call.1} parent=1 // loop_footer
      %s31 = sadd.s32 1, %s27
    $region7: #{tpu_custom_call.1} parent=1 // loop_footer_branch
      %26 = sbr.rel target = $region3
    $region8: #{tpu_custom_call.1} parent=1 // loop_exit
      _
    %2877 = vsyncpa [#allocation3], 1
    %s2878 = scalar_lea.sflag [#allocation3], 1
    %2879 = vsyncpa %s2878, 1
    %2880 = vsyncpa [#allocation6], 1
    %2881 = vsyncpa [#allocation9], 1
    %2882 = vsyncpa [#allocation4], 1
    %s2883 = scalar_lea.sflag [#allocation4], 1
    %2884 = vsyncpa %s2883, 1

</llo_original>
